<compile_context>
chip_gen: v7x
topology: tpu7x:2x2x1
jax: 0.10.0
libtpu: 0.0.40
codegen_flags: <defaults>
</compile_context>

<pallas_src>
import functools

import numpy as np
import jax
import jax.numpy as jnp
from jax.experimental import pallas as pl
from jax.experimental.pallas import tpu as pltpu

HPAD = 384   # padded lane width (>= max W_out*C_out = 280, multiple of 128)


# ----------------------------- fused Pallas kernel ---------------------------
def make_kernel(batches, h_in):
    """Kernel processing `batches` images per grid step (static unroll)."""
    HP = HPAD
    h1 = 2 * h_in + 1      # layer-1 output height (17)
    h2 = 2 * h1            # layer-2 output height (34)

    def kernel(x_ref, rop1_ref, b1_ref, rop2_ref, b2_ref,
               rop3_ref, rh3_ref, b3_ref, o_ref):
        f32, bf16 = jnp.float32, jnp.bfloat16

        # ---------------- layer 1: one column matmul for every batch/ky -------
        x = x_ref[...].astype(bf16)                                    # (B*8, 256)
        y1 = jnp.dot(x, rop1_ref[...], preferred_element_type=f32)     # (B*8, 3*HP)

        zrow = jnp.zeros((1, HP), f32)                                 # hoisted
        a1_parts = []
        for b in range(batches):
            r = b * h_in
            t0 = y1[r:r + h_in, 0:HP]            # ky = 0 tap
            t1 = y1[r:r + h_in, HP:2 * HP]       # ky = 1 tap
            t2 = y1[r:r + h_in, 2 * HP:3 * HP]   # ky = 2 tap
            # even output rows 0,2,..,16 = shift-add of ky=0 and ky=2 taps
            even = (jnp.concatenate([t0, zrow], axis=0) +
                    jnp.concatenate([zrow, t2], axis=0))               # (9, HP)
            # stored (grouped) row order: [even rows ; odd rows]; the permutation
            # back to natural order is folded into rh3 on the host.
            a1_parts += [even, t1]
        a1 = jax.nn.sigmoid(jnp.concatenate(a1_parts, axis=0) + b1_ref[...])  # (B*17, HP)

        # ---------------- layer 2 ---------------------------------------------
        y2 = jnp.dot(a1.astype(bf16), rop2_ref[...],
                     preferred_element_type=f32)                        # (B*17, 2*HP)
        a2_parts = []
        for b in range(batches):
            r = b * h1
            # stride==kernel==2 -> no row overlap; grouped order [ky=0 ; ky=1]
            a2_parts += [y2[r:r + h1, 0:HP], y2[r:r + h1, HP:2 * HP]]
        a2 = jnp.tanh(jnp.concatenate(a2_parts, axis=0) + b2_ref[...])  # (B*34, HP)

        # ---------------- layer 3 ---------------------------------------------
        y3 = jnp.dot(a2.astype(bf16), rop3_ref[...],
                     preferred_element_type=f32)                        # (B*34, 2*HP)
        for b in range(batches):
            r = b * h2
            ys = jnp.concatenate([y3[r:r + h2, 0:HP],
                                  y3[r:r + h2, HP:2 * HP]], axis=0)     # (68, HP)
            # single 0/1 row-scatter matmul; also undoes the grouped row order
            out = jnp.dot(rh3_ref[...], ys.astype(bf16),
                          preferred_element_type=f32)                   # (35, HP)
            o_ref[b] = out + b3_ref[...]

    return kernel


# ----------------------------- weight preprocessing --------------------------
def expand_grouped_weight_np(w, groups):
    """PyTorch convT weight (Cin, Cout/groups, KH, KW) -> dense (Cin, Cout, KH, KW)."""
    w = np.asarray(w, np.float32)
    Cin, Cpg, KH, KW = w.shape
    Cout = Cpg * groups
    cinpg = Cin // groups
    wd = np.zeros((Cin, Cout, KH, KW), np.float32)
    for g in range(groups):
        wd[g * cinpg:(g + 1) * cinpg, g * Cpg:(g + 1) * Cpg] = w[g * cinpg:(g + 1) * cinpg]
    return wd


def _column_operator(w, *, groups, stride, H_in, W_in, k_pad):
    """ky-concatenated column-scatter*weight operator, zero-padded to (k_pad, KH*HPAD)."""
    Cin, Cpg, KH, KW = w.shape
    Cout = Cpg * groups
    wd = expand_grouped_weight_np(w, groups)
    H_out = (H_in - 1) * stride + KH
    W_out = (W_in - 1) * stride + KW
    assert W_in * Cin <= k_pad and W_out * Cout <= HPAD
    rop = np.zeros((KH, k_pad, HPAD), np.float32)
    for ky in range(KH):
        for kx in range(KW):
            for wi in range(W_in):
                wo = stride * wi + kx
                rop[ky, wi * Cin:(wi + 1) * Cin, wo * Cout:(wo + 1) * Cout] += wd[:, :, ky, kx]
    rop_cat = np.concatenate([rop[ky] for ky in range(KH)], axis=1)     # (k_pad, KH*HPAD)
    return rop_cat, H_out, W_out, Cout


def _bias_row(b, W_out, Cout):
    row = np.zeros((1, HPAD), np.float32)
    row[0, :W_out * Cout] = np.tile(np.asarray(b, np.float32), W_out)
    return row


def _row_scatter_l3(h_in):
    """0/1 row-scatter for layer 3 with the grouped row permutations folded in."""
    h1 = 2 * h_in + 1                 # 17
    h2 = 2 * h1                       # 34
    h3 = h2 + 1                       # 35
    # a1 stored row j -> natural layer-1 row (even rows first, then odd rows)
    perm1 = np.concatenate([np.arange(0, h1, 2), np.arange(1, h1, 2)])
    # a2 stored row m -> natural layer-2 row ([ky=0 block ; ky=1 block], perm1 order)
    perm2 = np.concatenate([2 * perm1, 2 * perm1 + 1])
    rh3 = np.zeros((h3, 2 * h2), np.float32)
    for m in range(h2):
        rh3[perm2[m] + 0, m] = 1.0        # layer-3 tap ky = 0
        rh3[perm2[m] + 1, h2 + m] = 1.0   # layer-3 tap ky = 1
    return rh3


def prepare_params(p1, p2, p3, H, W):
    (w1, b1), (w2, b2), (w3, b3) = p1, p2, p3
    Cin = w1.shape[0]
    rop1, H1, W1, C1 = _column_operator(np.asarray(w1), groups=2, stride=2,
                                        H_in=H, W_in=W, k_pad=W * Cin)
    rop2, H2, W2, C2 = _column_operator(np.asarray(w2), groups=1, stride=2,
                                        H_in=H1, W_in=W1, k_pad=HPAD)
    rop3, H3, W3, C3 = _column_operator(np.asarray(w3), groups=1, stride=1,
                                        H_in=H2, W_in=W2, k_pad=HPAD)
    rh3 = _row_scatter_l3(H)
    arrays = (jnp.asarray(rop1, jnp.bfloat16),
              jnp.asarray(_bias_row(b1, W1, C1), jnp.float32),
              jnp.asarray(rop2, jnp.bfloat16),
              jnp.asarray(_bias_row(b2, W2, C2), jnp.float32),
              jnp.asarray(rop3, jnp.bfloat16),
              jnp.asarray(rh3, jnp.bfloat16),
              jnp.asarray(_bias_row(b3, W3, C3), jnp.float32))
    meta = (int(H3), int(W3), int(C3))          # (35, 35, 8)
    return arrays, meta


def pick_batches_per_step(n_batch):
    """v7x: one batch per TensorCore (parallel grid). v5e/v6e: fold batch into M."""
    kind = ""
    try:
        kind = jax.devices()[0].device_kind.lower()
    except Exception:
        pass
    if "v7" in kind or "7x" in kind:
        return 1
    return n_batch


# ------------------------------- pallas wrapper -------------------------------
def fused_forward(x2d, arrays, *, n_batch, h_in, h_out, batches_per_step):
    rop1, b1, rop2, b2, rop3, rh3, b3 = arrays
    bps = batches_per_step
    assert n_batch % bps == 0
    grid = (n_batch // bps,)

    def whole(a):
        nd = a.ndim
        return pl.BlockSpec(a.shape, lambda i, nd=nd: (0,) * nd)

    return pl.pallas_call(
        make_kernel(bps, h_in),
        out_shape=jax.ShapeDtypeStruct((n_batch, h_out, HPAD), jnp.float32),
        grid=grid,
        in_specs=[pl.BlockSpec((bps * h_in, x2d.shape[1]), lambda i: (i, 0)),
                  whole(rop1), whole(b1), whole(rop2), whole(b2),
                  whole(rop3), whole(rh3), whole(b3)],
        out_specs=pl.BlockSpec((bps, h_out, HPAD), lambda i: (i, 0, 0)),
        compiler_params=pltpu.CompilerParams(
            dimension_semantics=("parallel",) if bps == 1 else ("arbitrary",)),
    )(x2d, rop1, b1, rop2, b2, rop3, rh3, b3)


@functools.partial(jax.jit, static_argnums=(2, 3))
def model_forward_pallas(x_nchw, arrays, meta, bps):
    N, C, H, W = x_nchw.shape
    OH, OW, OC = meta
    x2d = jnp.transpose(x_nchw, (0, 2, 3, 1)).reshape(N * H, W * C)   # (N*H, W*C)
    out = fused_forward(x2d, arrays, n_batch=N, h_in=H, h_out=OH,
                        batches_per_step=bps)                          # (N, OH, 384)
    out = out[:, :, :OW * OC].reshape(N, OH, OW, OC)
    return jnp.transpose(out, (0, 3, 1, 2))                            # NHWC -> NCHW


# ------------------------------ pure-JAX reference ----------------------------
def _ref_conv_transpose(x_nhwc, w, b, stride, groups):
    N, H, W, Cin = x_nhwc.shape
    _, Cpg, KH, KW = w.shape
    Cout = Cpg * groups
    wd = jnp.asarray(expand_grouped_weight_np(w, groups))
    OH, OW = (H - 1) * stride + KH, (W - 1) * stride + KW
    out = jnp.zeros((N, OH, OW, Cout), jnp.float32)
    for kh in range(KH):
        for kw in range(KW):
            contrib = jnp.einsum('nhwc,cd->nhwd', x_nhwc, wd[:, :, kh, kw])
            out = out.at[:, kh:kh + (H - 1) * stride + 1:stride,
                            kw:kw + (W - 1) * stride + 1:stride, :].add(contrib)
    return out + b.reshape(1, 1, 1, Cout)


def model_forward_ref(x_nchw, p1, p2, p3):
    x = jnp.transpose(x_nchw, (0, 2, 3, 1))
    h = jax.nn.sigmoid(_ref_conv_transpose(x, p1[0], p1[1], 2, 2))
    h = jnp.tanh(_ref_conv_transpose(h, p2[0], p2[1], 2, 1))
    h = _ref_conv_transpose(h, p3[0], p3[1], 1, 1)
    return jnp.transpose(h, (0, 3, 1, 2))


# ------------------------------------- main ------------------------------------
if __name__ == "__main__":
    key = jax.random.PRNGKey(0)
    ks = jax.random.split(key, 7)

    N, Cin, H, W = 2, 32, 8, 8
    x_nchw = jax.random.normal(ks[0], (N, Cin, H, W), jnp.float32)

    def uinit(k, shape, fan):
        bound = 1.0 / np.sqrt(fan)
        return jax.random.uniform(k, shape, jnp.float32, -bound, bound)

    # ConvTranspose2d weight layout: (Cin, Cout/groups, KH, KW)
    w1 = uinit(ks[1], (32, 8, 3, 3), (32 // 2) * 3 * 3)
    b1 = uinit(ks[2], (16,),         (32 // 2) * 3 * 3)
    w2 = uinit(ks[3], (16, 8, 2, 2), 16 * 2 * 2)
    b2 = uinit(ks[4], (8,),          16 * 2 * 2)
    w3 = uinit(ks[5], (8, 8, 2, 2),  8 * 2 * 2)
    b3 = uinit(ks[6], (8,),          8 * 2 * 2)

    # one-time operator preprocessing (outside the hot path)
    arrays, meta = prepare_params((w1, b1), (w2, b2), (w3, b3), H, W)
    bps = pick_batches_per_step(N)

    out = jax.block_until_ready(model_forward_pallas(x_nchw, arrays, meta, bps))
    # expected spatial chain: 8 -> 17 -> 34 -> 35
    assert out.shape == (N, 8, 35, 35), out.shape

    ref = jax.block_until_ready(model_forward_ref(x_nchw, (w1, b1), (w2, b2), (w3, b3)))
    err = np.max(np.abs(np.asarray(out) - np.asarray(ref)))
    # bf16 weight operators + bf16 activation casts -> loosened tolerance
    assert np.allclose(np.asarray(out), np.asarray(ref), rtol=3e-2, atol=3e-2), err

    print("KERNEL_OK")
</pallas_src>

<mosaic_0001>
module attributes {stable_mosaic.version = 11 : i64} {
  func.func @kernel(%arg0: i32, %arg1: memref<16x256xf32, #tpu.memory_space<vmem>>, %arg2: memref<256x1152xbf16, #tpu.memory_space<vmem>>, %arg3: memref<1x384xf32, #tpu.memory_space<vmem>>, %arg4: memref<384x768xbf16, #tpu.memory_space<vmem>>, %arg5: memref<1x384xf32, #tpu.memory_space<vmem>>, %arg6: memref<384x768xbf16, #tpu.memory_space<vmem>>, %arg7: memref<35x68xbf16, #tpu.memory_space<vmem>>, %arg8: memref<1x384xf32, #tpu.memory_space<vmem>>, %arg9: memref<2x35x384xf32, #tpu.memory_space<vmem>>) attributes {dimension_semantics = [#tpu.dimension_semantics<arbitrary>], iteration_bounds = array<i64: 1>, scalar_prefetch = 0 : i64, scratch_operands = 0 : i64, tpu.core_type = #tpu.core_type<tc>, window_params = [{transform_indices = @transform_0, window_bounds = array<i64: 16, 256>}, {pipeline_mode = #tpu.pipeline_mode<synchronous>, transform_indices = @transform_1, window_bounds = array<i64: 256, 1152>}, {pipeline_mode = #tpu.pipeline_mode<synchronous>, transform_indices = @transform_2, window_bounds = array<i64: 1, 384>}, {pipeline_mode = #tpu.pipeline_mode<synchronous>, transform_indices = @transform_3, window_bounds = array<i64: 384, 768>}, {pipeline_mode = #tpu.pipeline_mode<synchronous>, transform_indices = @transform_4, window_bounds = array<i64: 1, 384>}, {pipeline_mode = #tpu.pipeline_mode<synchronous>, transform_indices = @transform_5, window_bounds = array<i64: 384, 768>}, {pipeline_mode = #tpu.pipeline_mode<synchronous>, transform_indices = @transform_6, window_bounds = array<i64: 35, 68>}, {pipeline_mode = #tpu.pipeline_mode<synchronous>, transform_indices = @transform_7, window_bounds = array<i64: 1, 384>}, {transform_indices = @transform_8, window_bounds = array<i64: 2, 35, 384>}]} {
    %c0 = arith.constant 0 : index
    %c0_0 = arith.constant 0 : index
    %0 = vector.load %arg1[%c0, %c0_0] : memref<16x256xf32, #tpu.memory_space<vmem>>, vector<16x256xf32>
    %1 = arith.truncf %0 : vector<16x256xf32> to vector<16x256xbf16>
    %c0_1 = arith.constant 0 : index
    %c0_2 = arith.constant 0 : index
    %2 = vector.load %arg2[%c0_1, %c0_2] : memref<256x1152xbf16, #tpu.memory_space<vmem>>, vector<256x1152xbf16>
    %cst = arith.constant dense<0.000000e+00> : vector<16x1152xf32>
    %3 = tpu.matmul %1, %2, %cst {dimension_numbers = #tpu.dot_dimension_numbers<[1], [0], [0], [1], [0, 0, 1, 1], [], []>} : vector<16x256xbf16>, vector<256x1152xbf16>, vector<16x1152xf32> -> vector<16x1152xf32>
    %cst_3 = arith.constant 0.000000e+00 : f32
    %4 = vector.broadcast %cst_3 : f32 to vector<1x384xf32>
    %5 = vector.extract_strided_slice %3 {offsets = [0, 0], sizes = [8, 384], strides = [1, 1]} : vector<16x1152xf32> to vector<8x384xf32>
    %6 = vector.extract_strided_slice %3 {offsets = [0, 384], sizes = [8, 384], strides = [1, 1]} : vector<16x1152xf32> to vector<8x384xf32>
    %7 = vector.extract_strided_slice %3 {offsets = [0, 768], sizes = [8, 384], strides = [1, 1]} : vector<16x1152xf32> to vector<8x384xf32>
    %8 = tpu.concatenate %5, %4 in 0 : vector<8x384xf32>, vector<1x384xf32> -> vector<9x384xf32>
    %9 = tpu.concatenate %4, %7 in 0 : vector<1x384xf32>, vector<8x384xf32> -> vector<9x384xf32>
    %10 = arith.addf %8, %9 : vector<9x384xf32>
    %11 = vector.extract_strided_slice %3 {offsets = [8, 0], sizes = [8, 384], strides = [1, 1]} : vector<16x1152xf32> to vector<8x384xf32>
    %12 = vector.extract_strided_slice %3 {offsets = [8, 384], sizes = [8, 384], strides = [1, 1]} : vector<16x1152xf32> to vector<8x384xf32>
    %13 = vector.extract_strided_slice %3 {offsets = [8, 768], sizes = [8, 384], strides = [1, 1]} : vector<16x1152xf32> to vector<8x384xf32>
    %14 = tpu.concatenate %11, %4 in 0 : vector<8x384xf32>, vector<1x384xf32> -> vector<9x384xf32>
    %15 = tpu.concatenate %4, %13 in 0 : vector<1x384xf32>, vector<8x384xf32> -> vector<9x384xf32>
    %16 = arith.addf %14, %15 : vector<9x384xf32>
    %17 = tpu.concatenate %10, %6, %16, %12 in 0 : vector<9x384xf32>, vector<8x384xf32>, vector<9x384xf32>, vector<8x384xf32> -> vector<34x384xf32>
    %c0_4 = arith.constant 0 : index
    %c0_5 = arith.constant 0 : index
    %18 = vector.load %arg3[%c0_4, %c0_5] : memref<1x384xf32, #tpu.memory_space<vmem>>, vector<1x384xf32>
    %19 = vector.broadcast %18 : vector<1x384xf32> to vector<34x384xf32>
    %20 = arith.addf %17, %19 : vector<34x384xf32>
    %21 = arith.negf %20 : vector<34x384xf32>
    %22 = math.exp %21 : vector<34x384xf32>
    %cst_6 = arith.constant 1.000000e+00 : f32
    %23 = vector.broadcast %cst_6 : f32 to vector<34x384xf32>
    %24 = arith.addf %23, %22 : vector<34x384xf32>
    %25 = arith.divf %23, %24 : vector<34x384xf32>
    %26 = arith.truncf %25 : vector<34x384xf32> to vector<34x384xbf16>
    %c0_7 = arith.constant 0 : index
    %c0_8 = arith.constant 0 : index
    %27 = vector.load %arg4[%c0_7, %c0_8] : memref<384x768xbf16, #tpu.memory_space<vmem>>, vector<384x768xbf16>
    %cst_9 = arith.constant dense<0.000000e+00> : vector<34x768xf32>
    %28 = tpu.matmul %26, %27, %cst_9 {dimension_numbers = #tpu.dot_dimension_numbers<[1], [0], [0], [1], [0, 0, 1, 1], [], []>} : vector<34x384xbf16>, vector<384x768xbf16>, vector<34x768xf32> -> vector<34x768xf32>
    %29 = vector.extract_strided_slice %28 {offsets = [0, 0], sizes = [17, 384], strides = [1, 1]} : vector<34x768xf32> to vector<17x384xf32>
    %30 = vector.extract_strided_slice %28 {offsets = [0, 384], sizes = [17, 384], strides = [1, 1]} : vector<34x768xf32> to vector<17x384xf32>
    %31 = vector.extract_strided_slice %28 {offsets = [17, 0], sizes = [17, 384], strides = [1, 1]} : vector<34x768xf32> to vector<17x384xf32>
    %32 = vector.extract_strided_slice %28 {offsets = [17, 384], sizes = [17, 384], strides = [1, 1]} : vector<34x768xf32> to vector<17x384xf32>
    %33 = tpu.concatenate %29, %30, %31, %32 in 0 : vector<17x384xf32>, vector<17x384xf32>, vector<17x384xf32>, vector<17x384xf32> -> vector<68x384xf32>
    %c0_10 = arith.constant 0 : index
    %c0_11 = arith.constant 0 : index
    %34 = vector.load %arg5[%c0_10, %c0_11] : memref<1x384xf32, #tpu.memory_space<vmem>>, vector<1x384xf32>
    %35 = vector.broadcast %34 : vector<1x384xf32> to vector<68x384xf32>
    %36 = arith.addf %33, %35 : vector<68x384xf32>
    %37 = math.tanh %36 : vector<68x384xf32>
    %38 = arith.truncf %37 : vector<68x384xf32> to vector<68x384xbf16>
    %c0_12 = arith.constant 0 : index
    %c0_13 = arith.constant 0 : index
    %39 = vector.load %arg6[%c0_12, %c0_13] : memref<384x768xbf16, #tpu.memory_space<vmem>>, vector<384x768xbf16>
    %cst_14 = arith.constant dense<0.000000e+00> : vector<68x768xf32>
    %40 = tpu.matmul %38, %39, %cst_14 {dimension_numbers = #tpu.dot_dimension_numbers<[1], [0], [0], [1], [0, 0, 1, 1], [], []>} : vector<68x384xbf16>, vector<384x768xbf16>, vector<68x768xf32> -> vector<68x768xf32>
    %41 = vector.extract_strided_slice %40 {offsets = [0, 0], sizes = [34, 384], strides = [1, 1]} : vector<68x768xf32> to vector<34x384xf32>
    %42 = vector.extract_strided_slice %40 {offsets = [0, 384], sizes = [34, 384], strides = [1, 1]} : vector<68x768xf32> to vector<34x384xf32>
    %43 = tpu.concatenate %41, %42 in 0 : vector<34x384xf32>, vector<34x384xf32> -> vector<68x384xf32>
    %c0_15 = arith.constant 0 : index
    %c0_16 = arith.constant 0 : index
    %44 = vector.load %arg7[%c0_15, %c0_16] : memref<35x68xbf16, #tpu.memory_space<vmem>>, vector<35x68xbf16>
    %45 = arith.truncf %43 : vector<68x384xf32> to vector<68x384xbf16>
    %cst_17 = arith.constant dense<0.000000e+00> : vector<35x384xf32>
    %46 = tpu.matmul %44, %45, %cst_17 {dimension_numbers = #tpu.dot_dimension_numbers<[1], [0], [0], [1], [0, 0, 1, 1], [], []>} : vector<35x68xbf16>, vector<68x384xbf16>, vector<35x384xf32> -> vector<35x384xf32>
    %c0_18 = arith.constant 0 : index
    %c0_19 = arith.constant 0 : index
    %47 = vector.load %arg8[%c0_18, %c0_19] : memref<1x384xf32, #tpu.memory_space<vmem>>, vector<1x384xf32>
    %48 = vector.broadcast %47 : vector<1x384xf32> to vector<35x384xf32>
    %49 = arith.addf %46, %48 : vector<35x384xf32>
    %c0_20 = arith.constant 0 : index
    %c0_21 = arith.constant 0 : index
    %c0_22 = arith.constant 0 : index
    %50 = vector.load %arg9[%c0_20, %c0_21, %c0_22] : memref<2x35x384xf32, #tpu.memory_space<vmem>>, vector<1x35x384xf32>
    %51 = vector.shape_cast %50 : vector<1x35x384xf32> to vector<35x384xf32>
    %52 = vector.shape_cast %49 : vector<35x384xf32> to vector<1x35x384xf32>
    tpu.vector_store %arg9[%c0_20, %c0_21, %c0_22], %52 {strides = array<i32>} : memref<2x35x384xf32, #tpu.memory_space<vmem>>, vector<1x35x384xf32>,
    %53 = vector.extract_strided_slice %40 {offsets = [34, 0], sizes = [34, 384], strides = [1, 1]} : vector<68x768xf32> to vector<34x384xf32>
    %54 = vector.extract_strided_slice %40 {offsets = [34, 384], sizes = [34, 384], strides = [1, 1]} : vector<68x768xf32> to vector<34x384xf32>
    %55 = tpu.concatenate %53, %54 in 0 : vector<34x384xf32>, vector<34x384xf32> -> vector<68x384xf32>
    %c0_23 = arith.constant 0 : index
    %c0_24 = arith.constant 0 : index
    %56 = vector.load %arg7[%c0_23, %c0_24] : memref<35x68xbf16, #tpu.memory_space<vmem>>, vector<35x68xbf16>
    %57 = arith.truncf %55 : vector<68x384xf32> to vector<68x384xbf16>
    %cst_25 = arith.constant dense<0.000000e+00> : vector<35x384xf32>
    %58 = tpu.matmul %56, %57, %cst_25 {dimension_numbers = #tpu.dot_dimension_numbers<[1], [0], [0], [1], [0, 0, 1, 1], [], []>} : vector<35x68xbf16>, vector<68x384xbf16>, vector<35x384xf32> -> vector<35x384xf32>
    %c0_26 = arith.constant 0 : index
    %c0_27 = arith.constant 0 : index
    %59 = vector.load %arg8[%c0_26, %c0_27] : memref<1x384xf32, #tpu.memory_space<vmem>>, vector<1x384xf32>
    %60 = vector.broadcast %59 : vector<1x384xf32> to vector<35x384xf32>
    %61 = arith.addf %58, %60 : vector<35x384xf32>
    %c1 = arith.constant 1 : index
    %c0_28 = arith.constant 0 : index
    %c0_29 = arith.constant 0 : index
    %62 = vector.load %arg9[%c1, %c0_28, %c0_29] : memref<2x35x384xf32, #tpu.memory_space<vmem>>, vector<1x35x384xf32>
    %63 = vector.shape_cast %62 : vector<1x35x384xf32> to vector<35x384xf32>
    %64 = vector.shape_cast %61 : vector<35x384xf32> to vector<1x35x384xf32>
    tpu.vector_store %arg9[%c1, %c0_28, %c0_29], %64 {strides = array<i32>} : memref<2x35x384xf32, #tpu.memory_space<vmem>>, vector<1x35x384xf32>,
    return
  }
  func.func @transform_0(%arg0: i32) -> (i32, i32) {
    %c0_i32 = arith.constant 0 : i32
    %c0_i32_0 = arith.constant 0 : i32
    return %arg0, %c0_i32 : i32, i32
  }
  func.func @transform_1(%arg0: i32) -> (i32, i32) {
    %c0_i32 = arith.constant 0 : i32
    %c0_i32_0 = arith.constant 0 : i32
    %c0_i32_1 = arith.constant 0 : i32
    return %c0_i32, %c0_i32_0 : i32, i32
  }
  func.func @transform_2(%arg0: i32) -> (i32, i32) {
    %c0_i32 = arith.constant 0 : i32
    %c0_i32_0 = arith.constant 0 : i32
    %c0_i32_1 = arith.constant 0 : i32
    return %c0_i32, %c0_i32_0 : i32, i32
  }
  func.func @transform_3(%arg0: i32) -> (i32, i32) {
    %c0_i32 = arith.constant 0 : i32
    %c0_i32_0 = arith.constant 0 : i32
    %c0_i32_1 = arith.constant 0 : i32
    return %c0_i32, %c0_i32_0 : i32, i32
  }
  func.func @transform_4(%arg0: i32) -> (i32, i32) {
    %c0_i32 = arith.constant 0 : i32
    %c0_i32_0 = arith.constant 0 : i32
    %c0_i32_1 = arith.constant 0 : i32
    return %c0_i32, %c0_i32_0 : i32, i32
  }
  func.func @transform_5(%arg0: i32) -> (i32, i32) {
    %c0_i32 = arith.constant 0 : i32
    %c0_i32_0 = arith.constant 0 : i32
    %c0_i32_1 = arith.constant 0 : i32
    return %c0_i32, %c0_i32_0 : i32, i32
  }
  func.func @transform_6(%arg0: i32) -> (i32, i32) {
    %c0_i32 = arith.constant 0 : i32
    %c0_i32_0 = arith.constant 0 : i32
    %c0_i32_1 = arith.constant 0 : i32
    return %c0_i32, %c0_i32_0 : i32, i32
  }
  func.func @transform_7(%arg0: i32) -> (i32, i32) {
    %c0_i32 = arith.constant 0 : i32
    %c0_i32_0 = arith.constant 0 : i32
    %c0_i32_1 = arith.constant 0 : i32
    return %c0_i32, %c0_i32_0 : i32, i32
  }
  func.func @transform_8(%arg0: i32) -> (i32, i32, i32) {
    %c0_i32 = arith.constant 0 : i32
    %c0_i32_0 = arith.constant 0 : i32
    %c0_i32_1 = arith.constant 0 : i32
    return %arg0, %c0_i32, %c0_i32_0 : i32, i32, i32
  }
}

</mosaic_0001>

<llo_original>
// kernel: model_forward_pallas.1
$region0: #{model_forward_pallas.1}
  #allocation0 [shape = 'u32[]', space=smem, size = 0x4, offset = 0x4, fixed_abs, tag = 'smem constant byte address 0x4 - core index']
  #allocation1 [shape = 'u32[144,128]{1,0:T(1,128)}', space=vmem, size = 0x12000, scoped, tag = 'internal scratch']
  %s0 = inlined_call_operand.vmem [shape: f32[16,256], index: 0, kind: input, shape index: {}]
  %s1 = inlined_call_operand.hbm [shape: bf16[256,1152], index: 1, kind: input, shape index: {}]
  %s2 = inlined_call_operand.vmem [shape: f32[1,384], index: 2, kind: input, shape index: {}]
  %s3 = inlined_call_operand.hbm [shape: bf16[384,768], index: 3, kind: input, shape index: {}]
  %s4 = inlined_call_operand.vmem [shape: f32[1,384], index: 4, kind: input, shape index: {}]
  %s5 = inlined_call_operand.hbm [shape: bf16[384,768], index: 5, kind: input, shape index: {}]
  %s6 = inlined_call_operand.vmem [shape: bf16[35,68], index: 6, kind: input, shape index: {}]
  %s7 = inlined_call_operand.vmem [shape: f32[1,384], index: 7, kind: input, shape index: {}]
  %s8 = inlined_call_operand.vmem [shape: f32[2,35,384], index: 8, kind: output, shape index: {}]
  %s9 = sld [smem:[#allocation0]]
  $region54: #{model_forward_pallas.1} parent=0
    _
  %s11 = ssub.s32 1, %s9
  %s12 = scalar_select 0, %s11, %s9
  $region1: #{model_forward_pallas.1} parent=0
    #allocation2 [shape = 'u8[589824]{0}', space=vmem, size = 0x90000, scoped, tag = 'input window, operand 1, single buffered']
    #allocation3 [shape = 's32[1]{0}', space=sflag, size = 0x4, scoped, tag = 'scoped memory for model_forward_pallas.1']
    #allocation4 [shape = 'u8[589824]{0}', space=vmem, size = 0x90000, scoped, tag = 'input window, operand 3, single buffered']
    #allocation5 [shape = 's32[1]{0}', space=sflag, size = 0x4, scoped, tag = 'scoped memory for model_forward_pallas.1']
    #allocation6 [shape = 'u8[589824]{0}', space=vmem, size = 0x90000, scoped, tag = 'input window, operand 5, single buffered']
    %13 = vsyncpa [#allocation3], 0
    %14 = vsyncpa [#allocation5], 0
    // Predicated region
    $region2: #{model_forward_pallas.1} parent=1 // pred_check
      _
    $region3: #{model_forward_pallas.1} parent=1 // pred_check_branch
      %16 = sbr.rel (0) target = $region5
    $region4: #{model_forward_pallas.1} parent=1 // pred_region
      _
    $region5: #{model_forward_pallas.1} parent=1 // pred_fallthru
      _
    // Predicated region
    $region6: #{model_forward_pallas.1} parent=1 // pred_check
      _
    $region7: #{model_forward_pallas.1} parent=1 // pred_check_branch
      %18 = sbr.rel (0) target = $region9
    $region8: #{model_forward_pallas.1} parent=1 // pred_region
      %s20 = ssub.s32 18432, 18432
      %21 = vsyncadd [#allocation3], %s20
      %s22 = sshll.u32 [#allocation2], 4
      %s23 = int_to_ptr.vmem [resolvable:$true] %s22
      %28 = dma.hbm_to_vmem [thread:$0]  %s1, 18432, %s23, [#allocation3], 576, 576, 36
    $region9: #{model_forward_pallas.1} parent=1 // pred_fallthru
      _
    // Predicated region
    $region10: #{model_forward_pallas.1} parent=1 // pred_check
      _
    $region11: #{model_forward_pallas.1} parent=1 // pred_check_branch
      %30 = sbr.rel (0) target = $region13
    $region12: #{model_forward_pallas.1} parent=1 // pred_region
      _
    $region13: #{model_forward_pallas.1} parent=1 // pred_fallthru
      _
    // Predicated region
    $region14: #{model_forward_pallas.1} parent=1 // pred_check
      _
    $region15: #{model_forward_pallas.1} parent=1 // pred_check_branch
      %32 = sbr.rel (0) target = $region17
    $region16: #{model_forward_pallas.1} parent=1 // pred_region
      %s34 = ssub.s32 18432, 18432
      %35 = vsyncadd [#allocation5], %s34
      %s36 = sshll.u32 [#allocation4], 4
      %s37 = int_to_ptr.vmem [resolvable:$true] %s36
      %42 = dma.hbm_to_vmem [thread:$0]  %s3, 18432, %s37, [#allocation5], 384, 384, 24
    $region17: #{model_forward_pallas.1} parent=1 // pred_fallthru
      _
    // Predicated region
    $region18: #{model_forward_pallas.1} parent=1 // pred_check
      _
    $region19: #{model_forward_pallas.1} parent=1 // pred_check_branch
      %44 = sbr.rel (0) target = $region21
    $region20: #{model_forward_pallas.1} parent=1 // pred_region
      _
    $region21: #{model_forward_pallas.1} parent=1 // pred_fallthru
      _
    // Predicated region
    $region22: #{model_forward_pallas.1} parent=1 // pred_check
      _
    $region23: #{model_forward_pallas.1} parent=1 // pred_check_branch
      %46 = sbr.rel (0) target = $region25
    $region24: #{model_forward_pallas.1} parent=1 // pred_region
      %s48 = ssub.s32 18432, 18432
      %49 = vsyncadd [#allocation5], %s48
      %s50 = sshll.u32 [#allocation6], 4
      %s51 = int_to_ptr.vmem [resolvable:$true] %s50
      %56 = dma.hbm_to_vmem [thread:$0]  %s5, 18432, %s51, [#allocation5], 384, 384, 24
    $region25: #{model_forward_pallas.1} parent=1 // pred_fallthru
      _
    // Predicated region
    $region26: #{model_forward_pallas.1} parent=1 // pred_check
      _
    $region27: #{model_forward_pallas.1} parent=1 // pred_check_branch
      %58 = sbr.rel (0) target = $region29
    $region28: #{model_forward_pallas.1} parent=1 // pred_region
      _
    $region29: #{model_forward_pallas.1} parent=1 // pred_fallthru
      _
    // Predicated region
    $region30: #{model_forward_pallas.1} parent=1 // pred_check
      _
    $region31: #{model_forward_pallas.1} parent=1 // pred_check_branch
      %60 = sbr.rel (0) target = $region33
    $region32: #{model_forward_pallas.1} parent=1 // pred_region
      _
    $region33: #{model_forward_pallas.1} parent=1 // pred_fallthru
      _
    // Predicated region
    $region34: #{model_forward_pallas.1} parent=1 // pred_check
      _
    $region35: #{model_forward_pallas.1} parent=1 // pred_check_branch
      %62 = sbr.rel (0) target = $region37
    $region36: #{model_forward_pallas.1} parent=1 // pred_region
      %63 = dma.done [#allocation3], 18432
    $region37: #{model_forward_pallas.1} parent=1 // pred_fallthru
      _
    // Predicated region
    $region38: #{model_forward_pallas.1} parent=1 // pred_check
      _
    $region39: #{model_forward_pallas.1} parent=1 // pred_check_branch
      %65 = sbr.rel (0) target = $region41
    $region40: #{model_forward_pallas.1} parent=1 // pred_region
      %66 = dma.done [#allocation5], 18432
    $region41: #{model_forward_pallas.1} parent=1 // pred_fallthru
      _
    // Predicated region
    $region42: #{model_forward_pallas.1} parent=1 // pred_check
      _
    $region43: #{model_forward_pallas.1} parent=1 // pred_check_branch
      %68 = sbr.rel (0) target = $region45
    $region44: #{model_forward_pallas.1} parent=1 // pred_region
      %69 = dma.done [#allocation5], 18432
    $region45: #{model_forward_pallas.1} parent=1 // pred_fallthru
      _
    %v71 = vld [vmem:[%s0] sm:$0xff]
    %v72 = vld [vmem:[%s0 + $0x8] sm:$0xff]
    %v73 = vld [vmem:[%s0 + $0x10] sm:$0xff]
    %v74 = vld [vmem:[%s0 + $0x18] sm:$0xff]
    %v75 = vpack.c.bf16 %v73, %v71
    %v76 = vpack.c.bf16 %v74, %v72
    %v77 = vld [vmem:[#allocation2] sm:$0xff]
    %v78 = vld [vmem:[#allocation2 + $0x8] sm:$0xff]
    %v79 = vld [vmem:[#allocation2 + $0x10] sm:$0xff]
    %v80 = vld [vmem:[#allocation2 + $0x18] sm:$0xff]
    %v81 = vld [vmem:[#allocation2 + $0x20] sm:$0xf]
    %v82 = vld [vmem:[#allocation2 + $0x24] sm:$0xff]
    %v83 = vld [vmem:[#allocation2 + $0x2c] sm:$0xff]
    %v84 = vld [vmem:[#allocation2 + $0x34] sm:$0xff]
    %v85 = vld [vmem:[#allocation2 + $0x3c] sm:$0xff]
    %v86 = vld [vmem:[#allocation2 + $0x44] sm:$0xf]
    %v87 = vld [vmem:[#allocation2 + $0x48] sm:$0xff]
    %v88 = vld [vmem:[#allocation2 + $0x50] sm:$0xff]
    %v89 = vld [vmem:[#allocation2 + $0x58] sm:$0xff]
    %v90 = vld [vmem:[#allocation2 + $0x60] sm:$0xff]
    %v91 = vld [vmem:[#allocation2 + $0x68] sm:$0xf]
    %v92 = vld [vmem:[#allocation2 + $0x6c] sm:$0xff]
    %v93 = vld [vmem:[#allocation2 + $0x74] sm:$0xff]
    %v94 = vld [vmem:[#allocation2 + $0x7c] sm:$0xff]
    %v95 = vld [vmem:[#allocation2 + $0x84] sm:$0xff]
    %v96 = vld [vmem:[#allocation2 + $0x8c] sm:$0xf]
    %v97 = vld [vmem:[#allocation2 + $0x90] sm:$0xff]
    %v98 = vld [vmem:[#allocation2 + $0x98] sm:$0xff]
    %v99 = vld [vmem:[#allocation2 + $0xa0] sm:$0xff]
    %v100 = vld [vmem:[#allocation2 + $0xa8] sm:$0xff]
    %v101 = vld [vmem:[#allocation2 + $0xb0] sm:$0xf]
    %v102 = vld [vmem:[#allocation2 + $0xb4] sm:$0xff]
    %v103 = vld [vmem:[#allocation2 + $0xbc] sm:$0xff]
    %v104 = vld [vmem:[#allocation2 + $0xc4] sm:$0xff]
    %v105 = vld [vmem:[#allocation2 + $0xcc] sm:$0xff]
    %v106 = vld [vmem:[#allocation2 + $0xd4] sm:$0xf]
    %v107 = vld [vmem:[#allocation2 + $0xd8] sm:$0xff]
    %v108 = vld [vmem:[#allocation2 + $0xe0] sm:$0xff]
    %v109 = vld [vmem:[#allocation2 + $0xe8] sm:$0xff]
    %v110 = vld [vmem:[#allocation2 + $0xf0] sm:$0xff]
    %v111 = vld [vmem:[#allocation2 + $0xf8] sm:$0xf]
    %v112 = vld [vmem:[#allocation2 + $0xfc] sm:$0xff]
    %v113 = vld [vmem:[#allocation2 + $0x104] sm:$0xff]
    %v114 = vld [vmem:[#allocation2 + $0x10c] sm:$0xff]
    %v115 = vld [vmem:[#allocation2 + $0x114] sm:$0xff]
    %v116 = vld [vmem:[#allocation2 + $0x11c] sm:$0xf]
    %v117 = vld [vmem:[#allocation2 + $0x120] sm:$0xff]
    %v118 = vld [vmem:[#allocation2 + $0x128] sm:$0xff]
    %v119 = vld [vmem:[#allocation2 + $0x130] sm:$0xff]
    %v120 = vld [vmem:[#allocation2 + $0x138] sm:$0xff]
    %v121 = vld [vmem:[#allocation2 + $0x140] sm:$0xf]
    %v122 = vld [vmem:[#allocation2 + $0x144] sm:$0xff]
    %v123 = vld [vmem:[#allocation2 + $0x14c] sm:$0xff]
    %v124 = vld [vmem:[#allocation2 + $0x154] sm:$0xff]
    %v125 = vld [vmem:[#allocation2 + $0x15c] sm:$0xff]
    %v126 = vld [vmem:[#allocation2 + $0x164] sm:$0xf]
    %v127 = vld [vmem:[#allocation2 + $0x168] sm:$0xff]
    %v128 = vld [vmem:[#allocation2 + $0x170] sm:$0xff]
    %v129 = vld [vmem:[#allocation2 + $0x178] sm:$0xff]
    %v130 = vld [vmem:[#allocation2 + $0x180] sm:$0xff]
    %v131 = vld [vmem:[#allocation2 + $0x188] sm:$0xf]
    %v132 = vld [vmem:[#allocation2 + $0x18c] sm:$0xff]
    %v133 = vld [vmem:[#allocation2 + $0x194] sm:$0xff]
    %v134 = vld [vmem:[#allocation2 + $0x19c] sm:$0xff]
    %v135 = vld [vmem:[#allocation2 + $0x1a4] sm:$0xff]
    %v136 = vld [vmem:[#allocation2 + $0x1ac] sm:$0xf]
    %v137 = vld [vmem:[#allocation2 + $0x1b0] sm:$0xff]
    %v138 = vld [vmem:[#allocation2 + $0x1b8] sm:$0xff]
    %v139 = vld [vmem:[#allocation2 + $0x1c0] sm:$0xff]
    %v140 = vld [vmem:[#allocation2 + $0x1c8] sm:$0xff]
    %v141 = vld [vmem:[#allocation2 + $0x1d0] sm:$0xf]
    %v142 = vld [vmem:[#allocation2 + $0x1d4] sm:$0xff]
    %v143 = vld [vmem:[#allocation2 + $0x1dc] sm:$0xff]
    %v144 = vld [vmem:[#allocation2 + $0x1e4] sm:$0xff]
    %v145 = vld [vmem:[#allocation2 + $0x1ec] sm:$0xff]
    %v146 = vld [vmem:[#allocation2 + $0x1f4] sm:$0xf]
    %v147 = vld [vmem:[#allocation2 + $0x1f8] sm:$0xff]
    %v148 = vld [vmem:[#allocation2 + $0x200] sm:$0xff]
    %v149 = vld [vmem:[#allocation2 + $0x208] sm:$0xff]
    %v150 = vld [vmem:[#allocation2 + $0x210] sm:$0xff]
    %v151 = vld [vmem:[#allocation2 + $0x218] sm:$0xf]
    %v152 = vld [vmem:[#allocation2 + $0x21c] sm:$0xff]
    %v153 = vld [vmem:[#allocation2 + $0x224] sm:$0xff]
    %v154 = vld [vmem:[#allocation2 + $0x22c] sm:$0xff]
    %v155 = vld [vmem:[#allocation2 + $0x234] sm:$0xff]
    %v156 = vld [vmem:[#allocation2 + $0x23c] sm:$0xf]
    %v157 = vld [vmem:[#allocation2 + $0x240] sm:$0xff]
    %v158 = vld [vmem:[#allocation2 + $0x248] sm:$0xff]
    %v159 = vld [vmem:[#allocation2 + $0x250] sm:$0xff]
    %v160 = vld [vmem:[#allocation2 + $0x258] sm:$0xff]
    %v161 = vld [vmem:[#allocation2 + $0x260] sm:$0xf]
    %v162 = vld [vmem:[#allocation2 + $0x264] sm:$0xff]
    %v163 = vld [vmem:[#allocation2 + $0x26c] sm:$0xff]
    %v164 = vld [vmem:[#allocation2 + $0x274] sm:$0xff]
    %v165 = vld [vmem:[#allocation2 + $0x27c] sm:$0xff]
    %v166 = vld [vmem:[#allocation2 + $0x284] sm:$0xf]
    %v167 = vld [vmem:[#allocation2 + $0x288] sm:$0xff]
    %v168 = vld [vmem:[#allocation2 + $0x290] sm:$0xff]
    %v169 = vld [vmem:[#allocation2 + $0x298] sm:$0xff]
    %v170 = vld [vmem:[#allocation2 + $0x2a0] sm:$0xff]
    %v171 = vld [vmem:[#allocation2 + $0x2a8] sm:$0xf]
    %v172 = vld [vmem:[#allocation2 + $0x2ac] sm:$0xff]
    %v173 = vld [vmem:[#allocation2 + $0x2b4] sm:$0xff]
    %v174 = vld [vmem:[#allocation2 + $0x2bc] sm:$0xff]
    %v175 = vld [vmem:[#allocation2 + $0x2c4] sm:$0xff]
    %v176 = vld [vmem:[#allocation2 + $0x2cc] sm:$0xf]
    %v177 = vld [vmem:[#allocation2 + $0x2d0] sm:$0xff]
    %v178 = vld [vmem:[#allocation2 + $0x2d8] sm:$0xff]
    %v179 = vld [vmem:[#allocation2 + $0x2e0] sm:$0xff]
    %v180 = vld [vmem:[#allocation2 + $0x2e8] sm:$0xff]
    %v181 = vld [vmem:[#allocation2 + $0x2f0] sm:$0xf]
    %v182 = vld [vmem:[#allocation2 + $0x2f4] sm:$0xff]
    %v183 = vld [vmem:[#allocation2 + $0x2fc] sm:$0xff]
    %v184 = vld [vmem:[#allocation2 + $0x304] sm:$0xff]
    %v185 = vld [vmem:[#allocation2 + $0x30c] sm:$0xff]
    %v186 = vld [vmem:[#allocation2 + $0x314] sm:$0xf]
    %v187 = vld [vmem:[#allocation2 + $0x318] sm:$0xff]
    %v188 = vld [vmem:[#allocation2 + $0x320] sm:$0xff]
    %v189 = vld [vmem:[#allocation2 + $0x328] sm:$0xff]
    %v190 = vld [vmem:[#allocation2 + $0x330] sm:$0xff]
    %v191 = vld [vmem:[#allocation2 + $0x338] sm:$0xf]
    %v192 = vld [vmem:[#allocation2 + $0x33c] sm:$0xff]
    %v193 = vld [vmem:[#allocation2 + $0x344] sm:$0xff]
    %v194 = vld [vmem:[#allocation2 + $0x34c] sm:$0xff]
    %v195 = vld [vmem:[#allocation2 + $0x354] sm:$0xff]
    %v196 = vld [vmem:[#allocation2 + $0x35c] sm:$0xf]
    %v197 = vld [vmem:[#allocation2 + $0x360] sm:$0xff]
    %v198 = vld [vmem:[#allocation2 + $0x368] sm:$0xff]
    %v199 = vld [vmem:[#allocation2 + $0x370] sm:$0xff]
    %v200 = vld [vmem:[#allocation2 + $0x378] sm:$0xff]
    %v201 = vld [vmem:[#allocation2 + $0x380] sm:$0xf]
    %v202 = vld [vmem:[#allocation2 + $0x384] sm:$0xff]
    %v203 = vld [vmem:[#allocation2 + $0x38c] sm:$0xff]
    %v204 = vld [vmem:[#allocation2 + $0x394] sm:$0xff]
    %v205 = vld [vmem:[#allocation2 + $0x39c] sm:$0xff]
    %v206 = vld [vmem:[#allocation2 + $0x3a4] sm:$0xf]
    %v207 = vld [vmem:[#allocation2 + $0x3a8] sm:$0xff]
    %v208 = vld [vmem:[#allocation2 + $0x3b0] sm:$0xff]
    %v209 = vld [vmem:[#allocation2 + $0x3b8] sm:$0xff]
    %v210 = vld [vmem:[#allocation2 + $0x3c0] sm:$0xff]
    %v211 = vld [vmem:[#allocation2 + $0x3c8] sm:$0xf]
    %v212 = vld [vmem:[#allocation2 + $0x3cc] sm:$0xff]
    %v213 = vld [vmem:[#allocation2 + $0x3d4] sm:$0xff]
    %v214 = vld [vmem:[#allocation2 + $0x3dc] sm:$0xff]
    %v215 = vld [vmem:[#allocation2 + $0x3e4] sm:$0xff]
    %v216 = vld [vmem:[#allocation2 + $0x3ec] sm:$0xf]
    %v217 = vld [vmem:[#allocation2 + $0x3f0] sm:$0xff]
    %v218 = vld [vmem:[#allocation2 + $0x3f8] sm:$0xff]
    %v219 = vld [vmem:[#allocation2 + $0x400] sm:$0xff]
    %v220 = vld [vmem:[#allocation2 + $0x408] sm:$0xff]
    %v221 = vld [vmem:[#allocation2 + $0x410] sm:$0xf]
    %v222 = vld [vmem:[#allocation2 + $0x414] sm:$0xff]
    %v223 = vld [vmem:[#allocation2 + $0x41c] sm:$0xff]
    %v224 = vld [vmem:[#allocation2 + $0x424] sm:$0xff]
    %v225 = vld [vmem:[#allocation2 + $0x42c] sm:$0xff]
    %v226 = vld [vmem:[#allocation2 + $0x434] sm:$0xf]
    %v227 = vld [vmem:[#allocation2 + $0x438] sm:$0xff]
    %v228 = vld [vmem:[#allocation2 + $0x440] sm:$0xff]
    %v229 = vld [vmem:[#allocation2 + $0x448] sm:$0xff]
    %v230 = vld [vmem:[#allocation2 + $0x450] sm:$0xff]
    %v231 = vld [vmem:[#allocation2 + $0x458] sm:$0xf]
    %v232 = vld [vmem:[#allocation2 + $0x45c] sm:$0xff]
    %v233 = vld [vmem:[#allocation2 + $0x464] sm:$0xff]
    %v234 = vld [vmem:[#allocation2 + $0x46c] sm:$0xff]
    %v235 = vld [vmem:[#allocation2 + $0x474] sm:$0xff]
    %v236 = vld [vmem:[#allocation2 + $0x47c] sm:$0xf]
    %v397 = vunpack.c.l.b16 %v77
    %v398 = vunpack.c.h.b16 %v77
    %v399 = vunpack.c.l.b16 %v78
    %v400 = vunpack.c.h.b16 %v78
    %v401 = vunpack.c.l.b16 %v79
    %v402 = vunpack.c.h.b16 %v79
    %v403 = vunpack.c.l.b16 %v80
    %v404 = vunpack.c.h.b16 %v80
    %v405 = vunpack.c.l.b16 %v81
    %v406 = vunpack.c.l.b16 %v82
    %v407 = vunpack.c.h.b16 %v82
    %v408 = vunpack.c.l.b16 %v83
    %v409 = vunpack.c.h.b16 %v83
    %v410 = vunpack.c.l.b16 %v84
    %v411 = vunpack.c.h.b16 %v84
    %v412 = vunpack.c.l.b16 %v85
    %v413 = vunpack.c.h.b16 %v85
    %v414 = vunpack.c.l.b16 %v86
    %v415 = vunpack.c.l.b16 %v87
    %v416 = vunpack.c.h.b16 %v87
    %v417 = vunpack.c.l.b16 %v88
    %v418 = vunpack.c.h.b16 %v88
    %v419 = vunpack.c.l.b16 %v89
    %v420 = vunpack.c.h.b16 %v89
    %v421 = vunpack.c.l.b16 %v90
    %v422 = vunpack.c.h.b16 %v90
    %v423 = vunpack.c.l.b16 %v91
    %v424 = vunpack.c.l.b16 %v92
    %v425 = vunpack.c.h.b16 %v92
    %v426 = vunpack.c.l.b16 %v93
    %v427 = vunpack.c.h.b16 %v93
    %v428 = vunpack.c.l.b16 %v94
    %v429 = vunpack.c.h.b16 %v94
    %v430 = vunpack.c.l.b16 %v95
    %v431 = vunpack.c.h.b16 %v95
    %v432 = vunpack.c.l.b16 %v96
    %v433 = vunpack.c.l.b16 %v97
    %v434 = vunpack.c.h.b16 %v97
    %v435 = vunpack.c.l.b16 %v98
    %v436 = vunpack.c.h.b16 %v98
    %v437 = vunpack.c.l.b16 %v99
    %v438 = vunpack.c.h.b16 %v99
    %v439 = vunpack.c.l.b16 %v100
    %v440 = vunpack.c.h.b16 %v100
    %v441 = vunpack.c.l.b16 %v101
    %v442 = vunpack.c.l.b16 %v102
    %v443 = vunpack.c.h.b16 %v102
    %v444 = vunpack.c.l.b16 %v103
    %v445 = vunpack.c.h.b16 %v103
    %v446 = vunpack.c.l.b16 %v104
    %v447 = vunpack.c.h.b16 %v104
    %v448 = vunpack.c.l.b16 %v105
    %v449 = vunpack.c.h.b16 %v105
    %v450 = vunpack.c.l.b16 %v106
    %v451 = vunpack.c.l.b16 %v107
    %v452 = vunpack.c.h.b16 %v107
    %v453 = vunpack.c.l.b16 %v108
    %v454 = vunpack.c.h.b16 %v108
    %v455 = vunpack.c.l.b16 %v109
    %v456 = vunpack.c.h.b16 %v109
    %v457 = vunpack.c.l.b16 %v110
    %v458 = vunpack.c.h.b16 %v110
    %v459 = vunpack.c.l.b16 %v111
    %v460 = vunpack.c.l.b16 %v112
    %v461 = vunpack.c.h.b16 %v112
    %v462 = vunpack.c.l.b16 %v113
    %v463 = vunpack.c.h.b16 %v113
    %v464 = vunpack.c.l.b16 %v114
    %v465 = vunpack.c.h.b16 %v114
    %v466 = vunpack.c.l.b16 %v115
    %v467 = vunpack.c.h.b16 %v115
    %v468 = vunpack.c.l.b16 %v116
    %v469 = vunpack.c.l.b16 %v117
    %v470 = vunpack.c.h.b16 %v117
    %v471 = vunpack.c.l.b16 %v118
    %v472 = vunpack.c.h.b16 %v118
    %v473 = vunpack.c.l.b16 %v119
    %v474 = vunpack.c.h.b16 %v119
    %v475 = vunpack.c.l.b16 %v120
    %v476 = vunpack.c.h.b16 %v120
    %v477 = vunpack.c.l.b16 %v121
    %v478 = vunpack.c.l.b16 %v122
    %v479 = vunpack.c.h.b16 %v122
    %v480 = vunpack.c.l.b16 %v123
    %v481 = vunpack.c.h.b16 %v123
    %v482 = vunpack.c.l.b16 %v124
    %v483 = vunpack.c.h.b16 %v124
    %v484 = vunpack.c.l.b16 %v125
    %v485 = vunpack.c.h.b16 %v125
    %v486 = vunpack.c.l.b16 %v126
    %v487 = vunpack.c.l.b16 %v127
    %v488 = vunpack.c.h.b16 %v127
    %v489 = vunpack.c.l.b16 %v128
    %v490 = vunpack.c.h.b16 %v128
    %v491 = vunpack.c.l.b16 %v129
    %v492 = vunpack.c.h.b16 %v129
    %v493 = vunpack.c.l.b16 %v130
    %v494 = vunpack.c.h.b16 %v130
    %v495 = vunpack.c.l.b16 %v131
    %v496 = vunpack.c.l.b16 %v132
    %v497 = vunpack.c.h.b16 %v132
    %v498 = vunpack.c.l.b16 %v133
    %v499 = vunpack.c.h.b16 %v133
    %v500 = vunpack.c.l.b16 %v134
    %v501 = vunpack.c.h.b16 %v134
    %v502 = vunpack.c.l.b16 %v135
    %v503 = vunpack.c.h.b16 %v135
    %v504 = vunpack.c.l.b16 %v136
    %v505 = vunpack.c.l.b16 %v137
    %v506 = vunpack.c.h.b16 %v137
    %v507 = vunpack.c.l.b16 %v138
    %v508 = vunpack.c.h.b16 %v138
    %v509 = vunpack.c.l.b16 %v139
    %v510 = vunpack.c.h.b16 %v139
    %v511 = vunpack.c.l.b16 %v140
    %v512 = vunpack.c.h.b16 %v140
    %v513 = vunpack.c.l.b16 %v141
    %v514 = vunpack.c.l.b16 %v142
    %v515 = vunpack.c.h.b16 %v142
    %v516 = vunpack.c.l.b16 %v143
    %v517 = vunpack.c.h.b16 %v143
    %v518 = vunpack.c.l.b16 %v144
    %v519 = vunpack.c.h.b16 %v144
    %v520 = vunpack.c.l.b16 %v145
    %v521 = vunpack.c.h.b16 %v145
    %v522 = vunpack.c.l.b16 %v146
    %v523 = vunpack.c.l.b16 %v147
    %v524 = vunpack.c.h.b16 %v147
    %v525 = vunpack.c.l.b16 %v148
    %v526 = vunpack.c.h.b16 %v148
    %v527 = vunpack.c.l.b16 %v149
    %v528 = vunpack.c.h.b16 %v149
    %v529 = vunpack.c.l.b16 %v150
    %v530 = vunpack.c.h.b16 %v150
    %v531 = vunpack.c.l.b16 %v151
    %v532 = vunpack.c.l.b16 %v152
    %v533 = vunpack.c.h.b16 %v152
    %v534 = vunpack.c.l.b16 %v153
    %v535 = vunpack.c.h.b16 %v153
    %v536 = vunpack.c.l.b16 %v154
    %v537 = vunpack.c.h.b16 %v154
    %v538 = vunpack.c.l.b16 %v155
    %v539 = vunpack.c.h.b16 %v155
    %v540 = vunpack.c.l.b16 %v156
    %v541 = vunpack.c.l.b16 %v157
    %v542 = vunpack.c.h.b16 %v157
    %v543 = vunpack.c.l.b16 %v158
    %v544 = vunpack.c.h.b16 %v158
    %v545 = vunpack.c.l.b16 %v159
    %v546 = vunpack.c.h.b16 %v159
    %v547 = vunpack.c.l.b16 %v160
    %v548 = vunpack.c.h.b16 %v160
    %v549 = vunpack.c.l.b16 %v161
    %v550 = vunpack.c.l.b16 %v162
    %v551 = vunpack.c.h.b16 %v162
    %v552 = vunpack.c.l.b16 %v163
    %v553 = vunpack.c.h.b16 %v163
    %v554 = vunpack.c.l.b16 %v164
    %v555 = vunpack.c.h.b16 %v164
    %v556 = vunpack.c.l.b16 %v165
    %v557 = vunpack.c.h.b16 %v165
    %v558 = vunpack.c.l.b16 %v166
    %v559 = vunpack.c.l.b16 %v167
    %v560 = vunpack.c.h.b16 %v167
    %v561 = vunpack.c.l.b16 %v168
    %v562 = vunpack.c.h.b16 %v168
    %v563 = vunpack.c.l.b16 %v169
    %v564 = vunpack.c.h.b16 %v169
    %v565 = vunpack.c.l.b16 %v170
    %v566 = vunpack.c.h.b16 %v170
    %v567 = vunpack.c.l.b16 %v171
    %v568 = vunpack.c.l.b16 %v172
    %v569 = vunpack.c.h.b16 %v172
    %v570 = vunpack.c.l.b16 %v173
    %v571 = vunpack.c.h.b16 %v173
    %v572 = vunpack.c.l.b16 %v174
    %v573 = vunpack.c.h.b16 %v174
    %v574 = vunpack.c.l.b16 %v175
    %v575 = vunpack.c.h.b16 %v175
    %v576 = vunpack.c.l.b16 %v176
    %v577 = vunpack.c.l.b16 %v177
    %v578 = vunpack.c.h.b16 %v177
    %v579 = vunpack.c.l.b16 %v178
    %v580 = vunpack.c.h.b16 %v178
    %v581 = vunpack.c.l.b16 %v179
    %v582 = vunpack.c.h.b16 %v179
    %v583 = vunpack.c.l.b16 %v180
    %v584 = vunpack.c.h.b16 %v180
    %v585 = vunpack.c.l.b16 %v181
    %v586 = vunpack.c.l.b16 %v182
    %v587 = vunpack.c.h.b16 %v182
    %v588 = vunpack.c.l.b16 %v183
    %v589 = vunpack.c.h.b16 %v183
    %v590 = vunpack.c.l.b16 %v184
    %v591 = vunpack.c.h.b16 %v184
    %v592 = vunpack.c.l.b16 %v185
    %v593 = vunpack.c.h.b16 %v185
    %v594 = vunpack.c.l.b16 %v186
    %v595 = vunpack.c.l.b16 %v187
    %v596 = vunpack.c.h.b16 %v187
    %v597 = vunpack.c.l.b16 %v188
    %v598 = vunpack.c.h.b16 %v188
    %v599 = vunpack.c.l.b16 %v189
    %v600 = vunpack.c.h.b16 %v189
    %v601 = vunpack.c.l.b16 %v190
    %v602 = vunpack.c.h.b16 %v190
    %v603 = vunpack.c.l.b16 %v191
    %v604 = vunpack.c.l.b16 %v192
    %v605 = vunpack.c.h.b16 %v192
    %v606 = vunpack.c.l.b16 %v193
    %v607 = vunpack.c.h.b16 %v193
    %v608 = vunpack.c.l.b16 %v194
    %v609 = vunpack.c.h.b16 %v194
    %v610 = vunpack.c.l.b16 %v195
    %v611 = vunpack.c.h.b16 %v195
    %v612 = vunpack.c.l.b16 %v196
    %v613 = vunpack.c.l.b16 %v197
    %v614 = vunpack.c.h.b16 %v197
    %v615 = vunpack.c.l.b16 %v198
    %v616 = vunpack.c.h.b16 %v198
    %v617 = vunpack.c.l.b16 %v199
    %v618 = vunpack.c.h.b16 %v199
    %v619 = vunpack.c.l.b16 %v200
    %v620 = vunpack.c.h.b16 %v200
    %v621 = vunpack.c.l.b16 %v201
    %v622 = vunpack.c.l.b16 %v202
    %v623 = vunpack.c.h.b16 %v202
    %v624 = vunpack.c.l.b16 %v203
    %v625 = vunpack.c.h.b16 %v203
    %v626 = vunpack.c.l.b16 %v204
    %v627 = vunpack.c.h.b16 %v204
    %v628 = vunpack.c.l.b16 %v205
    %v629 = vunpack.c.h.b16 %v205
    %v630 = vunpack.c.l.b16 %v206
    %v631 = vunpack.c.l.b16 %v207
    %v632 = vunpack.c.h.b16 %v207
    %v633 = vunpack.c.l.b16 %v208
    %v634 = vunpack.c.h.b16 %v208
    %v635 = vunpack.c.l.b16 %v209
    %v636 = vunpack.c.h.b16 %v209
    %v637 = vunpack.c.l.b16 %v210
    %v638 = vunpack.c.h.b16 %v210
    %v639 = vunpack.c.l.b16 %v211
    %v640 = vunpack.c.l.b16 %v212
    %v641 = vunpack.c.h.b16 %v212
    %v642 = vunpack.c.l.b16 %v213
    %v643 = vunpack.c.h.b16 %v213
    %v644 = vunpack.c.l.b16 %v214
    %v645 = vunpack.c.h.b16 %v214
    %v646 = vunpack.c.l.b16 %v215
    %v647 = vunpack.c.h.b16 %v215
    %v648 = vunpack.c.l.b16 %v216
    %v649 = vunpack.c.l.b16 %v217
    %v650 = vunpack.c.h.b16 %v217
    %v651 = vunpack.c.l.b16 %v218
    %v652 = vunpack.c.h.b16 %v218
    %v653 = vunpack.c.l.b16 %v219
    %v654 = vunpack.c.h.b16 %v219
    %v655 = vunpack.c.l.b16 %v220
    %v656 = vunpack.c.h.b16 %v220
    %v657 = vunpack.c.l.b16 %v221
    %v658 = vunpack.c.l.b16 %v222
    %v659 = vunpack.c.h.b16 %v222
    %v660 = vunpack.c.l.b16 %v223
    %v661 = vunpack.c.h.b16 %v223
    %v662 = vunpack.c.l.b16 %v224
    %v663 = vunpack.c.h.b16 %v224
    %v664 = vunpack.c.l.b16 %v225
    %v665 = vunpack.c.h.b16 %v225
    %v666 = vunpack.c.l.b16 %v226
    %v667 = vunpack.c.l.b16 %v227
    %v668 = vunpack.c.h.b16 %v227
    %v669 = vunpack.c.l.b16 %v228
    %v670 = vunpack.c.h.b16 %v228
    %v671 = vunpack.c.l.b16 %v229
    %v672 = vunpack.c.h.b16 %v229
    %v673 = vunpack.c.l.b16 %v230
    %v674 = vunpack.c.h.b16 %v230
    %v675 = vunpack.c.l.b16 %v231
    %v676 = vunpack.c.l.b16 %v232
    %v677 = vunpack.c.h.b16 %v232
    %v678 = vunpack.c.l.b16 %v233
    %v679 = vunpack.c.h.b16 %v233
    %v680 = vunpack.c.l.b16 %v234
    %v681 = vunpack.c.h.b16 %v234
    %v682 = vunpack.c.l.b16 %v235
    %v683 = vunpack.c.h.b16 %v235
    %v684 = vunpack.c.l.b16 %v236
    %v685 = vpack.c.b16 %v406, %v397
    %v686 = vpack.c.b16 %v407, %v398
    %v687 = vpack.c.b16 %v408, %v399
    %v688 = vpack.c.b16 %v409, %v400
    %v689 = vpack.c.b16 %v410, %v401
    %v690 = vpack.c.b16 %v411, %v402
    %v691 = vpack.c.b16 %v412, %v403
    %v692 = vpack.c.b16 %v413, %v404
    %v693 = vpack.c.b16 %v414, %v405
    %v694 = vpack.c.b16 %v424, %v415
    %v695 = vpack.c.b16 %v425, %v416
    %v696 = vpack.c.b16 %v426, %v417
    %v697 = vpack.c.b16 %v427, %v418
    %v698 = vpack.c.b16 %v428, %v419
    %v699 = vpack.c.b16 %v429, %v420
    %v700 = vpack.c.b16 %v430, %v421
    %v701 = vpack.c.b16 %v431, %v422
    %v702 = vpack.c.b16 %v432, %v423
    %v703 = vpack.c.b16 %v442, %v433
    %v704 = vpack.c.b16 %v443, %v434
    %v705 = vpack.c.b16 %v444, %v435
    %v706 = vpack.c.b16 %v445, %v436
    %v707 = vpack.c.b16 %v446, %v437
    %v708 = vpack.c.b16 %v447, %v438
    %v709 = vpack.c.b16 %v448, %v439
    %v710 = vpack.c.b16 %v449, %v440
    %v711 = vpack.c.b16 %v450, %v441
    %v712 = vpack.c.b16 %v460, %v451
    %v713 = vpack.c.b16 %v461, %v452
    %v714 = vpack.c.b16 %v462, %v453
    %v715 = vpack.c.b16 %v463, %v454
    %v716 = vpack.c.b16 %v464, %v455
    %v717 = vpack.c.b16 %v465, %v456
    %v718 = vpack.c.b16 %v466, %v457
    %v719 = vpack.c.b16 %v467, %v458
    %v720 = vpack.c.b16 %v468, %v459
    %v721 = vpack.c.b16 %v478, %v469
    %v722 = vpack.c.b16 %v479, %v470
    %v723 = vpack.c.b16 %v480, %v471
    %v724 = vpack.c.b16 %v481, %v472
    %v725 = vpack.c.b16 %v482, %v473
    %v726 = vpack.c.b16 %v483, %v474
    %v727 = vpack.c.b16 %v484, %v475
    %v728 = vpack.c.b16 %v485, %v476
    %v729 = vpack.c.b16 %v486, %v477
    %v730 = vpack.c.b16 %v496, %v487
    %v731 = vpack.c.b16 %v497, %v488
    %v732 = vpack.c.b16 %v498, %v489
    %v733 = vpack.c.b16 %v499, %v490
    %v734 = vpack.c.b16 %v500, %v491
    %v735 = vpack.c.b16 %v501, %v492
    %v736 = vpack.c.b16 %v502, %v493
    %v737 = vpack.c.b16 %v503, %v494
    %v738 = vpack.c.b16 %v504, %v495
    %v739 = vpack.c.b16 %v514, %v505
    %v740 = vpack.c.b16 %v515, %v506
    %v741 = vpack.c.b16 %v516, %v507
    %v742 = vpack.c.b16 %v517, %v508
    %v743 = vpack.c.b16 %v518, %v509
    %v744 = vpack.c.b16 %v519, %v510
    %v745 = vpack.c.b16 %v520, %v511
    %v746 = vpack.c.b16 %v521, %v512
    %v747 = vpack.c.b16 %v522, %v513
    %v748 = vpack.c.b16 %v532, %v523
    %v749 = vpack.c.b16 %v533, %v524
    %v750 = vpack.c.b16 %v534, %v525
    %v751 = vpack.c.b16 %v535, %v526
    %v752 = vpack.c.b16 %v536, %v527
    %v753 = vpack.c.b16 %v537, %v528
    %v754 = vpack.c.b16 %v538, %v529
    %v755 = vpack.c.b16 %v539, %v530
    %v756 = vpack.c.b16 %v540, %v531
    %v757 = vpack.c.b16 %v550, %v541
    %v758 = vpack.c.b16 %v551, %v542
    %v759 = vpack.c.b16 %v552, %v543
    %v760 = vpack.c.b16 %v553, %v544
    %v761 = vpack.c.b16 %v554, %v545
    %v762 = vpack.c.b16 %v555, %v546
    %v763 = vpack.c.b16 %v556, %v547
    %v764 = vpack.c.b16 %v557, %v548
    %v765 = vpack.c.b16 %v558, %v549
    %v766 = vpack.c.b16 %v568, %v559
    %v767 = vpack.c.b16 %v569, %v560
    %v768 = vpack.c.b16 %v570, %v561
    %v769 = vpack.c.b16 %v571, %v562
    %v770 = vpack.c.b16 %v572, %v563
    %v771 = vpack.c.b16 %v573, %v564
    %v772 = vpack.c.b16 %v574, %v565
    %v773 = vpack.c.b16 %v575, %v566
    %v774 = vpack.c.b16 %v576, %v567
    %v775 = vpack.c.b16 %v586, %v577
    %v776 = vpack.c.b16 %v587, %v578
    %v777 = vpack.c.b16 %v588, %v579
    %v778 = vpack.c.b16 %v589, %v580
    %v779 = vpack.c.b16 %v590, %v581
    %v780 = vpack.c.b16 %v591, %v582
    %v781 = vpack.c.b16 %v592, %v583
    %v782 = vpack.c.b16 %v593, %v584
    %v783 = vpack.c.b16 %v594, %v585
    %v784 = vpack.c.b16 %v604, %v595
    %v785 = vpack.c.b16 %v605, %v596
    %v786 = vpack.c.b16 %v606, %v597
    %v787 = vpack.c.b16 %v607, %v598
    %v788 = vpack.c.b16 %v608, %v599
    %v789 = vpack.c.b16 %v609, %v600
    %v790 = vpack.c.b16 %v610, %v601
    %v791 = vpack.c.b16 %v611, %v602
    %v792 = vpack.c.b16 %v612, %v603
    %v793 = vpack.c.b16 %v622, %v613
    %v794 = vpack.c.b16 %v623, %v614
    %v795 = vpack.c.b16 %v624, %v615
    %v796 = vpack.c.b16 %v625, %v616
    %v797 = vpack.c.b16 %v626, %v617
    %v798 = vpack.c.b16 %v627, %v618
    %v799 = vpack.c.b16 %v628, %v619
    %v800 = vpack.c.b16 %v629, %v620
    %v801 = vpack.c.b16 %v630, %v621
    %v802 = vpack.c.b16 %v640, %v631
    %v803 = vpack.c.b16 %v641, %v632
    %v804 = vpack.c.b16 %v642, %v633
    %v805 = vpack.c.b16 %v643, %v634
    %v806 = vpack.c.b16 %v644, %v635
    %v807 = vpack.c.b16 %v645, %v636
    %v808 = vpack.c.b16 %v646, %v637
    %v809 = vpack.c.b16 %v647, %v638
    %v810 = vpack.c.b16 %v648, %v639
    %v811 = vpack.c.b16 %v658, %v649
    %v812 = vpack.c.b16 %v659, %v650
    %v813 = vpack.c.b16 %v660, %v651
    %v814 = vpack.c.b16 %v661, %v652
    %v815 = vpack.c.b16 %v662, %v653
    %v816 = vpack.c.b16 %v663, %v654
    %v817 = vpack.c.b16 %v664, %v655
    %v818 = vpack.c.b16 %v665, %v656
    %v819 = vpack.c.b16 %v666, %v657
    %v820 = vpack.c.b16 %v676, %v667
    %v821 = vpack.c.b16 %v677, %v668
    %v822 = vpack.c.b16 %v678, %v669
    %v823 = vpack.c.b16 %v679, %v670
    %v824 = vpack.c.b16 %v680, %v671
    %v825 = vpack.c.b16 %v681, %v672
    %v826 = vpack.c.b16 %v682, %v673
    %v827 = vpack.c.b16 %v683, %v674
    %v828 = vpack.c.b16 %v684, %v675
    %973 = vmatprep.subr.bf16.mxu0 %v686
    %974 = vmatpush1.bf16.msra.mxu0 %v685
    %975 = vmatprep.subr.bf16.mxu0 %v695
    %976 = vmatpush1.bf16.msra.mxu0 %v694
    %977 = vmatprep.subr.bf16.mxu0 %v704
    %978 = vmatpush1.bf16.msra.mxu0 %v703
    %979 = vmatprep.subr.bf16.mxu0 %v713
    %980 = vmatpush1.bf16.msra.mxu0 %v712
    %981 = vmatprep.subr.bf16.mxu0 %v722
    %982 = vmatpush1.bf16.msra.mxu0 %v721
    %983 = vmatprep.subr.bf16.mxu0 %v731
    %984 = vmatpush1.bf16.msra.mxu0 %v730
    %985 = vmatprep.subr.bf16.mxu0 %v740
    %986 = vmatpush1.bf16.msra.mxu0 %v739
    %987 = vmatprep.subr.bf16.mxu0 %v749
    %988 = vmatpush1.bf16.msra.mxu0 %v748
    %989 = vmatprep.subr.bf16.mxu0 %v758
    %990 = vmatpush1.bf16.msra.mxu0 %v757
    %991 = vmatprep.subr.bf16.mxu0 %v767
    %992 = vmatpush1.bf16.msra.mxu0 %v766
    %993 = vmatprep.subr.bf16.mxu0 %v776
    %994 = vmatpush1.bf16.msra.mxu0 %v775
    %995 = vmatprep.subr.bf16.mxu0 %v785
    %996 = vmatpush1.bf16.msra.mxu0 %v784
    %997 = vmatprep.subr.bf16.mxu0 %v794
    %998 = vmatpush1.bf16.msra.mxu0 %v793
    %999 = vmatprep.subr.bf16.mxu0 %v803
    %1000 = vmatpush1.bf16.msra.mxu0 %v802
    %1001 = vmatprep.subr.bf16.mxu0 %v812
    %1002 = vmatpush1.bf16.msra.mxu0 %v811
    %1003 = vmatprep.subr.bf16.mxu0 %v821
    %1004 = vmatpush1.bf16.msra.mxu0 %v820
    %1005 = vmatprep.mubr.bf16.mxu0 %v76
    %1006 = vmatmul.mubr.bf16.gmra.mrb[0].mxu0 %v75
    %v1007 = vpop.f32.mrb[0].mxu0
    %v1008 = vadd.f32 0.0, %v1007
    %v1009 = vpop.f32.mrb[0].mxu0
    %v1010 = vadd.f32 0.0, %v1009
    %v1011 = vpop.f32.mrb[0].mxu0
    %v1012 = vadd.f32 0.0, %v1011
    %v1013 = vpop.f32.mrb[0].mxu0
    %v1014 = vadd.f32 0.0, %v1013
    %1015 = vdwg.mxu0
    %1016 = vmatprep.subr.bf16.mxu0 %v688
    %1017 = vmatpush1.bf16.msra.mxu0 %v687
    %1018 = vmatprep.subr.bf16.mxu0 %v697
    %1019 = vmatpush1.bf16.msra.mxu0 %v696
    %1020 = vmatprep.subr.bf16.mxu0 %v706
    %1021 = vmatpush1.bf16.msra.mxu0 %v705
    %1022 = vmatprep.subr.bf16.mxu0 %v715
    %1023 = vmatpush1.bf16.msra.mxu0 %v714
    %1024 = vmatprep.subr.bf16.mxu0 %v724
    %1025 = vmatpush1.bf16.msra.mxu0 %v723
    %1026 = vmatprep.subr.bf16.mxu0 %v733
    %1027 = vmatpush1.bf16.msra.mxu0 %v732
    %1028 = vmatprep.subr.bf16.mxu0 %v742
    %1029 = vmatpush1.bf16.msra.mxu0 %v741
    %1030 = vmatprep.subr.bf16.mxu0 %v751
    %1031 = vmatpush1.bf16.msra.mxu0 %v750
    %1032 = vmatprep.subr.bf16.mxu0 %v760
    %1033 = vmatpush1.bf16.msra.mxu0 %v759
    %1034 = vmatprep.subr.bf16.mxu0 %v769
    %1035 = vmatpush1.bf16.msra.mxu0 %v768
    %1036 = vmatprep.subr.bf16.mxu0 %v778
    %1037 = vmatpush1.bf16.msra.mxu0 %v777
    %1038 = vmatprep.subr.bf16.mxu0 %v787
    %1039 = vmatpush1.bf16.msra.mxu0 %v786
    %1040 = vmatprep.subr.bf16.mxu0 %v796
    %1041 = vmatpush1.bf16.msra.mxu0 %v795
    %1042 = vmatprep.subr.bf16.mxu0 %v805
    %1043 = vmatpush1.bf16.msra.mxu0 %v804
    %1044 = vmatprep.subr.bf16.mxu0 %v814
    %1045 = vmatpush1.bf16.msra.mxu0 %v813
    %1046 = vmatprep.subr.bf16.mxu0 %v823
    %1047 = vmatpush1.bf16.msra.mxu0 %v822
    %1048 = vmatprep.mubr.bf16.mxu0 %v76
    %1049 = vmatmul.mubr.bf16.gmra.mrb[0].mxu0 %v75
    %v1050 = vpop.f32.mrb[0].mxu0
    %v1051 = vadd.f32 0.0, %v1050
    %v1052 = vpop.f32.mrb[0].mxu0
    %v1053 = vadd.f32 0.0, %v1052
    %v1054 = vpop.f32.mrb[0].mxu0
    %v1055 = vadd.f32 0.0, %v1054
    %v1056 = vpop.f32.mrb[0].mxu0
    %v1057 = vadd.f32 0.0, %v1056
    %1058 = vdwg.mxu0
    %1059 = vmatprep.subr.bf16.mxu0 %v690
    %1060 = vmatpush1.bf16.msra.mxu0 %v689
    %1061 = vmatprep.subr.bf16.mxu0 %v699
    %1062 = vmatpush1.bf16.msra.mxu0 %v698
    %1063 = vmatprep.subr.bf16.mxu0 %v708
    %1064 = vmatpush1.bf16.msra.mxu0 %v707
    %1065 = vmatprep.subr.bf16.mxu0 %v717
    %1066 = vmatpush1.bf16.msra.mxu0 %v716
    %1067 = vmatprep.subr.bf16.mxu0 %v726
    %1068 = vmatpush1.bf16.msra.mxu0 %v725
    %1069 = vmatprep.subr.bf16.mxu0 %v735
    %1070 = vmatpush1.bf16.msra.mxu0 %v734
    %1071 = vmatprep.subr.bf16.mxu0 %v744
    %1072 = vmatpush1.bf16.msra.mxu0 %v743
    %1073 = vmatprep.subr.bf16.mxu0 %v753
    %1074 = vmatpush1.bf16.msra.mxu0 %v752
    %1075 = vmatprep.subr.bf16.mxu0 %v762
    %1076 = vmatpush1.bf16.msra.mxu0 %v761
    %1077 = vmatprep.subr.bf16.mxu0 %v771
    %1078 = vmatpush1.bf16.msra.mxu0 %v770
    %1079 = vmatprep.subr.bf16.mxu0 %v780
    %1080 = vmatpush1.bf16.msra.mxu0 %v779
    %1081 = vmatprep.subr.bf16.mxu0 %v789
    %1082 = vmatpush1.bf16.msra.mxu0 %v788
    %1083 = vmatprep.subr.bf16.mxu0 %v798
    %1084 = vmatpush1.bf16.msra.mxu0 %v797
    %1085 = vmatprep.subr.bf16.mxu0 %v807
    %1086 = vmatpush1.bf16.msra.mxu0 %v806
    %1087 = vmatprep.subr.bf16.mxu0 %v816
    %1088 = vmatpush1.bf16.msra.mxu0 %v815
    %1089 = vmatprep.subr.bf16.mxu0 %v825
    %1090 = vmatpush1.bf16.msra.mxu0 %v824
    %1091 = vmatprep.mubr.bf16.mxu0 %v76
    %1092 = vmatmul.mubr.bf16.gmra.mrb[0].mxu0 %v75
    %v1093 = vpop.f32.mrb[0].mxu0
    %v1094 = vadd.f32 0.0, %v1093
    %v1095 = vpop.f32.mrb[0].mxu0
    %v1096 = vadd.f32 0.0, %v1095
    %v1097 = vpop.f32.mrb[0].mxu0
    %v1098 = vadd.f32 0.0, %v1097
    %v1099 = vpop.f32.mrb[0].mxu0
    %v1100 = vadd.f32 0.0, %v1099
    %1101 = vdwg.mxu0
    %1102 = vmatprep.subr.bf16.mxu0 %v692
    %1103 = vmatpush1.bf16.msra.mxu0 %v691
    %1104 = vmatprep.subr.bf16.mxu0 %v701
    %1105 = vmatpush1.bf16.msra.mxu0 %v700
    %1106 = vmatprep.subr.bf16.mxu0 %v710
    %1107 = vmatpush1.bf16.msra.mxu0 %v709
    %1108 = vmatprep.subr.bf16.mxu0 %v719
    %1109 = vmatpush1.bf16.msra.mxu0 %v718
    %1110 = vmatprep.subr.bf16.mxu0 %v728
    %1111 = vmatpush1.bf16.msra.mxu0 %v727
    %1112 = vmatprep.subr.bf16.mxu0 %v737
    %1113 = vmatpush1.bf16.msra.mxu0 %v736
    %1114 = vmatprep.subr.bf16.mxu0 %v746
    %1115 = vmatpush1.bf16.msra.mxu0 %v745
    %1116 = vmatprep.subr.bf16.mxu0 %v755
    %1117 = vmatpush1.bf16.msra.mxu0 %v754
    %1118 = vmatprep.subr.bf16.mxu0 %v764
    %1119 = vmatpush1.bf16.msra.mxu0 %v763
    %1120 = vmatprep.subr.bf16.mxu0 %v773
    %1121 = vmatpush1.bf16.msra.mxu0 %v772
    %1122 = vmatprep.subr.bf16.mxu0 %v782
    %1123 = vmatpush1.bf16.msra.mxu0 %v781
    %1124 = vmatprep.subr.bf16.mxu0 %v791
    %1125 = vmatpush1.bf16.msra.mxu0 %v790
    %1126 = vmatprep.subr.bf16.mxu0 %v800
    %1127 = vmatpush1.bf16.msra.mxu0 %v799
    %1128 = vmatprep.subr.bf16.mxu0 %v809
    %1129 = vmatpush1.bf16.msra.mxu0 %v808
    %1130 = vmatprep.subr.bf16.mxu0 %v818
    %1131 = vmatpush1.bf16.msra.mxu0 %v817
    %1132 = vmatprep.subr.bf16.mxu0 %v827
    %1133 = vmatpush1.bf16.msra.mxu0 %v826
    %1134 = vmatprep.mubr.bf16.mxu0 %v76
    %1135 = vmatmul.mubr.bf16.gmra.mrb[0].mxu0 %v75
    %v1136 = vpop.f32.mrb[0].mxu0
    %v1137 = vadd.f32 0.0, %v1136
    %v1138 = vpop.f32.mrb[0].mxu0
    %v1139 = vadd.f32 0.0, %v1138
    %v1140 = vpop.f32.mrb[0].mxu0
    %v1141 = vadd.f32 0.0, %v1140
    %v1142 = vpop.f32.mrb[0].mxu0
    %v1143 = vadd.f32 0.0, %v1142
    %1144 = vdwg.mxu0
    %1145 = vmatprep.subr.bf16.mxu0 0
    %1146 = vmatpush1.bf16.msra.mxu0 %v693
    %1147 = vmatprep.subr.bf16.mxu0 0
    %1148 = vmatpush1.bf16.msra.mxu0 %v702
    %1149 = vmatprep.subr.bf16.mxu0 0
    %1150 = vmatpush1.bf16.msra.mxu0 %v711
    %1151 = vmatprep.subr.bf16.mxu0 0
    %1152 = vmatpush1.bf16.msra.mxu0 %v720
    %1153 = vmatprep.subr.bf16.mxu0 0
    %1154 = vmatpush1.bf16.msra.mxu0 %v729
    %1155 = vmatprep.subr.bf16.mxu0 0
    %1156 = vmatpush1.bf16.msra.mxu0 %v738
    %1157 = vmatprep.subr.bf16.mxu0 0
    %1158 = vmatpush1.bf16.msra.mxu0 %v747
    %1159 = vmatprep.subr.bf16.mxu0 0
    %1160 = vmatpush1.bf16.msra.mxu0 %v756
    %1161 = vmatprep.subr.bf16.mxu0 0
    %1162 = vmatpush1.bf16.msra.mxu0 %v765
    %1163 = vmatprep.subr.bf16.mxu0 0
    %1164 = vmatpush1.bf16.msra.mxu0 %v774
    %1165 = vmatprep.subr.bf16.mxu0 0
    %1166 = vmatpush1.bf16.msra.mxu0 %v783
    %1167 = vmatprep.subr.bf16.mxu0 0
    %1168 = vmatpush1.bf16.msra.mxu0 %v792
    %1169 = vmatprep.subr.bf16.mxu0 0
    %1170 = vmatpush1.bf16.msra.mxu0 %v801
    %1171 = vmatprep.subr.bf16.mxu0 0
    %1172 = vmatpush1.bf16.msra.mxu0 %v810
    %1173 = vmatprep.subr.bf16.mxu0 0
    %1174 = vmatpush1.bf16.msra.mxu0 %v819
    %1175 = vmatprep.subr.bf16.mxu0 0
    %1176 = vmatpush1.bf16.msra.mxu0 %v828
    %1177 = vmatprep.mubr.bf16.mxu0 %v76
    %1178 = vmatmul.mubr.bf16.gmra.mrb[0].mxu0 %v75
    %v1179 = vpop.f32.mrb[0].mxu0
    %v1180 = vadd.f32 0.0, %v1179
    %v1181 = vpop.f32.mrb[0].mxu0
    %v1182 = vpop.f32.mrb[0].mxu0
    %v1183 = vadd.f32 0.0, %v1182
    %v1184 = vpop.f32.mrb[0].mxu0
    %1185 = vdwg.mxu0
    %v1189 = vrot.slane %v1137, 7
    %v1190 = vrot.slane %v1139, 7
    %v1191 = vrot.slane %v1180, 7
    %vm1195 = vcmask 1040384
    %v1196 = vsel %vm1195, 0.0, %v1189
    %v1197 = vsel %vm1195, 0.0, %v1190
    %v1198 = vsel %vm1195, 0.0, %v1191
    %v1199 = vadd.f32 %v1008, %v1196
    %v1200 = vadd.f32 %v1010, %v1197
    %v1201 = vadd.f32 %v1051, %v1198
    %v1202 = vadd.f32 %v1189, 0.0
    %v1203 = vadd.f32 %v1190, 0.0
    %v1204 = vadd.f32 %v1191, 0.0
    %v1208 = vrot.slane %v1141, 7
    %v1209 = vrot.slane %v1143, 7
    %v1210 = vrot.slane %v1183, 7
    %v1214 = vsel %vm1195, 0.0, %v1208
    %v1215 = vsel %vm1195, 0.0, %v1209
    %v1216 = vsel %vm1195, 0.0, %v1210
    %v1217 = vadd.f32 %v1012, %v1214
    %v1218 = vadd.f32 %v1014, %v1215
    %v1219 = vadd.f32 %v1055, %v1216
    %v1220 = vadd.f32 %v1208, 0.0
    %v1221 = vadd.f32 %v1209, 0.0
    %v1222 = vadd.f32 %v1210, 0.0
    %v1226 = vrot.slane %v1053, 7
    %v1227 = vrot.slane %v1094, 7
    %v1228 = vrot.slane %v1096, 7
    %v1238 = vrot.slane %v1217, 7
    %v1239 = vrot.slane %v1218, 7
    %v1240 = vrot.slane %v1219, 7
    %v1241 = vrot.slane %v1220, 7
    %v1242 = vsel %vm1195, %v1238, %v1241
    %v1243 = vrot.slane %v1221, 7
    %v1244 = vsel %vm1195, %v1239, %v1243
    %v1245 = vrot.slane %v1222, 7
    %v1246 = vsel %vm1195, %v1240, %v1245
    %v1256 = vrot.slane %v1057, 6
    %v1257 = vrot.slane %v1098, 6
    %v1258 = vrot.slane %v1100, 6
    %v1262 = vsel %vm1195, %v1202, %v1226
    %v1263 = vsel %vm1195, %v1203, %v1227
    %v1264 = vsel %vm1195, %v1204, %v1228
    %v1265 = vsel %vm1195, %v1226, %v1238
    %v1266 = vsel %vm1195, %v1227, %v1239
    %v1267 = vsel %vm1195, %v1228, %v1240
    %vm1268 = vcmask 1041408
    %v1269 = vsel %vm1268, %v1242, %v1256
    %v1270 = vsel %vm1268, %v1244, %v1257
    %v1271 = vsel %vm1268, %v1246, %v1258
    %v1272 = vld [vmem:[%s2] sm:$0x7]
    %v1274 = vlaneseq
    %v1275 = vshrl.u32 %v1274, 7
    %v1276 = vsub.s32 0, %v1275
    %v1277 = vrot.slane %v1272, %v1276
    %v1278 = vlaneseq
    %v1279 = vshrl.u32 %v1278, 7
    %v1280 = vsub.s32 1, %v1279
    %v1281 = vrot.slane %v1272, %v1280
    %v1282 = vlaneseq
    %v1283 = vshrl.u32 %v1282, 7
    %v1284 = vsub.s32 2, %v1283
    %v1285 = vrot.slane %v1272, %v1284
    %v1289 = vadd.f32 %v1199, %v1277
    %v1290 = vadd.f32 %v1200, %v1281
    %v1291 = vadd.f32 %v1201, %v1285
    %v1292 = vadd.f32 %v1262, %v1277
    %v1293 = vadd.f32 %v1263, %v1281
    %v1294 = vadd.f32 %v1264, %v1285
    %v1295 = vadd.f32 %v1265, %v1277
    %v1296 = vadd.f32 %v1266, %v1281
    %v1297 = vadd.f32 %v1267, %v1285
    %v1298 = vadd.f32 %v1269, %v1277
    %v1299 = vadd.f32 %v1270, %v1281
    %v1300 = vadd.f32 %v1271, %v1285
    %v1301 = vadd.f32 %v1256, %v1277
    %v1302 = vadd.f32 %v1257, %v1281
    %v1303 = vadd.f32 %v1258, %v1285
    %v1304 = vxor.u32 %v1289, 2147483648
    %v1305 = vxor.u32 %v1290, 2147483648
    %v1306 = vxor.u32 %v1291, 2147483648
    %v1307 = vxor.u32 %v1292, 2147483648
    %v1308 = vxor.u32 %v1293, 2147483648
    %v1309 = vxor.u32 %v1294, 2147483648
    %v1310 = vxor.u32 %v1295, 2147483648
    %v1311 = vxor.u32 %v1296, 2147483648
    %v1312 = vxor.u32 %v1297, 2147483648
    %v1313 = vxor.u32 %v1298, 2147483648
    %v1314 = vxor.u32 %v1299, 2147483648
    %v1315 = vxor.u32 %v1300, 2147483648
    %v1316 = vxor.u32 %v1301, 2147483648
    %v1317 = vxor.u32 %v1302, 2147483648
    %v1318 = vxor.u32 %v1303, 2147483648
    %v1319 = vmul.f32 %v1304, 1.442695
    %v1320 = vpow.pop %v1319
    %v1321 = vmul.f32 %v1305, 1.442695
    %v1322 = vpow.pop %v1321
    %v1323 = vmul.f32 %v1306, 1.442695
    %v1324 = vpow.pop %v1323
    %v1325 = vmul.f32 %v1307, 1.442695
    %v1326 = vpow.pop %v1325
    %v1327 = vmul.f32 %v1308, 1.442695
    %v1328 = vpow.pop %v1327
    %v1329 = vmul.f32 %v1309, 1.442695
    %v1330 = vpow.pop %v1329
    %v1331 = vmul.f32 %v1310, 1.442695
    %v1332 = vpow.pop %v1331
    %v1333 = vmul.f32 %v1311, 1.442695
    %v1334 = vpow.pop %v1333
    %v1335 = vmul.f32 %v1312, 1.442695
    %v1336 = vpow.pop %v1335
    %v1337 = vmul.f32 %v1313, 1.442695
    %v1338 = vpow.pop %v1337
    %v1339 = vmul.f32 %v1314, 1.442695
    %v1340 = vpow.pop %v1339
    %v1341 = vmul.f32 %v1315, 1.442695
    %v1342 = vpow.pop %v1341
    %v1343 = vmul.f32 %v1316, 1.442695
    %v1344 = vpow.pop %v1343
    %v1345 = vmul.f32 %v1317, 1.442695
    %v1346 = vpow.pop %v1345
    %v1347 = vmul.f32 %v1318, 1.442695
    %v1348 = vpow.pop %v1347
    %v1349 = vadd.f32 %v1320, 1.0
    %v1350 = vadd.f32 %v1322, 1.0
    %v1351 = vadd.f32 %v1324, 1.0
    %v1352 = vadd.f32 %v1326, 1.0
    %v1353 = vadd.f32 %v1328, 1.0
    %v1354 = vadd.f32 %v1330, 1.0
    %v1355 = vadd.f32 %v1332, 1.0
    %v1356 = vadd.f32 %v1334, 1.0
    %v1357 = vadd.f32 %v1336, 1.0
    %v1358 = vadd.f32 %v1338, 1.0
    %v1359 = vadd.f32 %v1340, 1.0
    %v1360 = vadd.f32 %v1342, 1.0
    %v1361 = vadd.f32 %v1344, 1.0
    %v1362 = vadd.f32 %v1346, 1.0
    %v1363 = vadd.f32 %v1348, 1.0
    %v1364 = vrcp.pop %v1349
    %v1365 = vmul.f32 1.0, %v1364
    %v1366 = vrcp.pop %v1350
    %v1367 = vmul.f32 1.0, %v1366
    %v1368 = vrcp.pop %v1351
    %v1369 = vmul.f32 1.0, %v1368
    %v1370 = vrcp.pop %v1352
    %v1371 = vmul.f32 1.0, %v1370
    %v1372 = vrcp.pop %v1353
    %v1373 = vmul.f32 1.0, %v1372
    %v1374 = vrcp.pop %v1354
    %v1375 = vmul.f32 1.0, %v1374
    %v1376 = vrcp.pop %v1355
    %v1377 = vmul.f32 1.0, %v1376
    %v1378 = vrcp.pop %v1356
    %v1379 = vmul.f32 1.0, %v1378
    %v1380 = vrcp.pop %v1357
    %v1381 = vmul.f32 1.0, %v1380
    %v1382 = vrcp.pop %v1358
    %v1383 = vmul.f32 1.0, %v1382
    %v1384 = vrcp.pop %v1359
    %v1385 = vmul.f32 1.0, %v1384
    %v1386 = vrcp.pop %v1360
    %v1387 = vmul.f32 1.0, %v1386
    %v1388 = vrcp.pop %v1361
    %v1389 = vmul.f32 1.0, %v1388
    %v1390 = vrcp.pop %v1362
    %v1391 = vmul.f32 1.0, %v1390
    %v1392 = vrcp.pop %v1363
    %v1393 = vmul.f32 1.0, %v1392
    %v1394 = vpack.c.bf16 %v1371, %v1365
    %v1395 = vpack.c.bf16 %v1373, %v1367
    %v1396 = vpack.c.bf16 %v1375, %v1369
    %v1397 = vpack.c.bf16 %v1383, %v1377
    %v1398 = vpack.c.bf16 %v1385, %v1379
    %v1399 = vpack.c.bf16 %v1387, %v1381
    %v1400 = vpack.c.bf16 %v1389, %v1389
    %v1401 = vpack.c.bf16 %v1391, %v1391
    %v1402 = vpack.c.bf16 %v1393, %v1393
    %v1403 = vld [vmem:[#allocation4] sm:$0xff]
    %v1404 = vld [vmem:[#allocation4 + $0x8] sm:$0xff]
    %v1405 = vld [vmem:[#allocation4 + $0x10] sm:$0xff]
    %v1406 = vld [vmem:[#allocation4 + $0x18] sm:$0xff]
    %v1407 = vld [vmem:[#allocation4 + $0x20] sm:$0xff]
    %v1408 = vld [vmem:[#allocation4 + $0x28] sm:$0xff]
    %v1409 = vld [vmem:[#allocation4 + $0x30] sm:$0xff]
    %v1410 = vld [vmem:[#allocation4 + $0x38] sm:$0xff]
    %v1411 = vld [vmem:[#allocation4 + $0x40] sm:$0xff]
    %v1412 = vld [vmem:[#allocation4 + $0x48] sm:$0xff]
    %v1413 = vld [vmem:[#allocation4 + $0x50] sm:$0xff]
    %v1414 = vld [vmem:[#allocation4 + $0x58] sm:$0xff]
    %v1415 = vld [vmem:[#allocation4 + $0x60] sm:$0xff]
    %v1416 = vld [vmem:[#allocation4 + $0x68] sm:$0xff]
    %v1417 = vld [vmem:[#allocation4 + $0x70] sm:$0xff]
    %v1418 = vld [vmem:[#allocation4 + $0x78] sm:$0xff]
    %v1419 = vld [vmem:[#allocation4 + $0x80] sm:$0xff]
    %v1420 = vld [vmem:[#allocation4 + $0x88] sm:$0xff]
    %v1421 = vld [vmem:[#allocation4 + $0x90] sm:$0xff]
    %v1422 = vld [vmem:[#allocation4 + $0x98] sm:$0xff]
    %v1423 = vld [vmem:[#allocation4 + $0xa0] sm:$0xff]
    %v1424 = vld [vmem:[#allocation4 + $0xa8] sm:$0xff]
    %v1425 = vld [vmem:[#allocation4 + $0xb0] sm:$0xff]
    %v1426 = vld [vmem:[#allocation4 + $0xb8] sm:$0xff]
    %v1427 = vld [vmem:[#allocation4 + $0xc0] sm:$0xff]
    %v1428 = vld [vmem:[#allocation4 + $0xc8] sm:$0xff]
    %v1429 = vld [vmem:[#allocation4 + $0xd0] sm:$0xff]
    %v1430 = vld [vmem:[#allocation4 + $0xd8] sm:$0xff]
    %v1431 = vld [vmem:[#allocation4 + $0xe0] sm:$0xff]
    %v1432 = vld [vmem:[#allocation4 + $0xe8] sm:$0xff]
    %v1433 = vld [vmem:[#allocation4 + $0xf0] sm:$0xff]
    %v1434 = vld [vmem:[#allocation4 + $0xf8] sm:$0xff]
    %v1435 = vld [vmem:[#allocation4 + $0x100] sm:$0xff]
    %v1436 = vld [vmem:[#allocation4 + $0x108] sm:$0xff]
    %v1437 = vld [vmem:[#allocation4 + $0x110] sm:$0xff]
    %v1438 = vld [vmem:[#allocation4 + $0x118] sm:$0xff]
    %v1439 = vld [vmem:[#allocation4 + $0x120] sm:$0xff]
    %v1440 = vld [vmem:[#allocation4 + $0x128] sm:$0xff]
    %v1441 = vld [vmem:[#allocation4 + $0x130] sm:$0xff]
    %v1442 = vld [vmem:[#allocation4 + $0x138] sm:$0xff]
    %v1443 = vld [vmem:[#allocation4 + $0x140] sm:$0xff]
    %v1444 = vld [vmem:[#allocation4 + $0x148] sm:$0xff]
    %v1445 = vld [vmem:[#allocation4 + $0x150] sm:$0xff]
    %v1446 = vld [vmem:[#allocation4 + $0x158] sm:$0xff]
    %v1447 = vld [vmem:[#allocation4 + $0x160] sm:$0xff]
    %v1448 = vld [vmem:[#allocation4 + $0x168] sm:$0xff]
    %v1449 = vld [vmem:[#allocation4 + $0x170] sm:$0xff]
    %v1450 = vld [vmem:[#allocation4 + $0x178] sm:$0xff]
    %v1451 = vld [vmem:[#allocation4 + $0x180] sm:$0xff]
    %v1452 = vld [vmem:[#allocation4 + $0x188] sm:$0xff]
    %v1453 = vld [vmem:[#allocation4 + $0x190] sm:$0xff]
    %v1454 = vld [vmem:[#allocation4 + $0x198] sm:$0xff]
    %v1455 = vld [vmem:[#allocation4 + $0x1a0] sm:$0xff]
    %v1456 = vld [vmem:[#allocation4 + $0x1a8] sm:$0xff]
    %v1457 = vld [vmem:[#allocation4 + $0x1b0] sm:$0xff]
    %v1458 = vld [vmem:[#allocation4 + $0x1b8] sm:$0xff]
    %v1459 = vld [vmem:[#allocation4 + $0x1c0] sm:$0xff]
    %v1460 = vld [vmem:[#allocation4 + $0x1c8] sm:$0xff]
    %v1461 = vld [vmem:[#allocation4 + $0x1d0] sm:$0xff]
    %v1462 = vld [vmem:[#allocation4 + $0x1d8] sm:$0xff]
    %v1463 = vld [vmem:[#allocation4 + $0x1e0] sm:$0xff]
    %v1464 = vld [vmem:[#allocation4 + $0x1e8] sm:$0xff]
    %v1465 = vld [vmem:[#allocation4 + $0x1f0] sm:$0xff]
    %v1466 = vld [vmem:[#allocation4 + $0x1f8] sm:$0xff]
    %v1467 = vld [vmem:[#allocation4 + $0x200] sm:$0xff]
    %v1468 = vld [vmem:[#allocation4 + $0x208] sm:$0xff]
    %v1469 = vld [vmem:[#allocation4 + $0x210] sm:$0xff]
    %v1470 = vld [vmem:[#allocation4 + $0x218] sm:$0xff]
    %v1471 = vld [vmem:[#allocation4 + $0x220] sm:$0xff]
    %v1472 = vld [vmem:[#allocation4 + $0x228] sm:$0xff]
    %v1473 = vld [vmem:[#allocation4 + $0x230] sm:$0xff]
    %v1474 = vld [vmem:[#allocation4 + $0x238] sm:$0xff]
    %v1475 = vld [vmem:[#allocation4 + $0x240] sm:$0xff]
    %v1476 = vld [vmem:[#allocation4 + $0x248] sm:$0xff]
    %v1477 = vld [vmem:[#allocation4 + $0x250] sm:$0xff]
    %v1478 = vld [vmem:[#allocation4 + $0x258] sm:$0xff]
    %v1479 = vld [vmem:[#allocation4 + $0x260] sm:$0xff]
    %v1480 = vld [vmem:[#allocation4 + $0x268] sm:$0xff]
    %v1481 = vld [vmem:[#allocation4 + $0x270] sm:$0xff]
    %v1482 = vld [vmem:[#allocation4 + $0x278] sm:$0xff]
    %v1483 = vld [vmem:[#allocation4 + $0x280] sm:$0xff]
    %v1484 = vld [vmem:[#allocation4 + $0x288] sm:$0xff]
    %v1485 = vld [vmem:[#allocation4 + $0x290] sm:$0xff]
    %v1486 = vld [vmem:[#allocation4 + $0x298] sm:$0xff]
    %v1487 = vld [vmem:[#allocation4 + $0x2a0] sm:$0xff]
    %v1488 = vld [vmem:[#allocation4 + $0x2a8] sm:$0xff]
    %v1489 = vld [vmem:[#allocation4 + $0x2b0] sm:$0xff]
    %v1490 = vld [vmem:[#allocation4 + $0x2b8] sm:$0xff]
    %v1491 = vld [vmem:[#allocation4 + $0x2c0] sm:$0xff]
    %v1492 = vld [vmem:[#allocation4 + $0x2c8] sm:$0xff]
    %v1493 = vld [vmem:[#allocation4 + $0x2d0] sm:$0xff]
    %v1494 = vld [vmem:[#allocation4 + $0x2d8] sm:$0xff]
    %v1495 = vld [vmem:[#allocation4 + $0x2e0] sm:$0xff]
    %v1496 = vld [vmem:[#allocation4 + $0x2e8] sm:$0xff]
    %v1497 = vld [vmem:[#allocation4 + $0x2f0] sm:$0xff]
    %v1498 = vld [vmem:[#allocation4 + $0x2f8] sm:$0xff]
    %v1499 = vld [vmem:[#allocation4 + $0x300] sm:$0xff]
    %v1500 = vld [vmem:[#allocation4 + $0x308] sm:$0xff]
    %v1501 = vld [vmem:[#allocation4 + $0x310] sm:$0xff]
    %v1502 = vld [vmem:[#allocation4 + $0x318] sm:$0xff]
    %v1503 = vld [vmem:[#allocation4 + $0x320] sm:$0xff]
    %v1504 = vld [vmem:[#allocation4 + $0x328] sm:$0xff]
    %v1505 = vld [vmem:[#allocation4 + $0x330] sm:$0xff]
    %v1506 = vld [vmem:[#allocation4 + $0x338] sm:$0xff]
    %v1507 = vld [vmem:[#allocation4 + $0x340] sm:$0xff]
    %v1508 = vld [vmem:[#allocation4 + $0x348] sm:$0xff]
    %v1509 = vld [vmem:[#allocation4 + $0x350] sm:$0xff]
    %v1510 = vld [vmem:[#allocation4 + $0x358] sm:$0xff]
    %v1511 = vld [vmem:[#allocation4 + $0x360] sm:$0xff]
    %v1512 = vld [vmem:[#allocation4 + $0x368] sm:$0xff]
    %v1513 = vld [vmem:[#allocation4 + $0x370] sm:$0xff]
    %v1514 = vld [vmem:[#allocation4 + $0x378] sm:$0xff]
    %v1515 = vld [vmem:[#allocation4 + $0x380] sm:$0xff]
    %v1516 = vld [vmem:[#allocation4 + $0x388] sm:$0xff]
    %v1517 = vld [vmem:[#allocation4 + $0x390] sm:$0xff]
    %v1518 = vld [vmem:[#allocation4 + $0x398] sm:$0xff]
    %v1519 = vld [vmem:[#allocation4 + $0x3a0] sm:$0xff]
    %v1520 = vld [vmem:[#allocation4 + $0x3a8] sm:$0xff]
    %v1521 = vld [vmem:[#allocation4 + $0x3b0] sm:$0xff]
    %v1522 = vld [vmem:[#allocation4 + $0x3b8] sm:$0xff]
    %v1523 = vld [vmem:[#allocation4 + $0x3c0] sm:$0xff]
    %v1524 = vld [vmem:[#allocation4 + $0x3c8] sm:$0xff]
    %v1525 = vld [vmem:[#allocation4 + $0x3d0] sm:$0xff]
    %v1526 = vld [vmem:[#allocation4 + $0x3d8] sm:$0xff]
    %v1527 = vld [vmem:[#allocation4 + $0x3e0] sm:$0xff]
    %v1528 = vld [vmem:[#allocation4 + $0x3e8] sm:$0xff]
    %v1529 = vld [vmem:[#allocation4 + $0x3f0] sm:$0xff]
    %v1530 = vld [vmem:[#allocation4 + $0x3f8] sm:$0xff]
    %v1531 = vld [vmem:[#allocation4 + $0x400] sm:$0xff]
    %v1532 = vld [vmem:[#allocation4 + $0x408] sm:$0xff]
    %v1533 = vld [vmem:[#allocation4 + $0x410] sm:$0xff]
    %v1534 = vld [vmem:[#allocation4 + $0x418] sm:$0xff]
    %v1535 = vld [vmem:[#allocation4 + $0x420] sm:$0xff]
    %v1536 = vld [vmem:[#allocation4 + $0x428] sm:$0xff]
    %v1537 = vld [vmem:[#allocation4 + $0x430] sm:$0xff]
    %v1538 = vld [vmem:[#allocation4 + $0x438] sm:$0xff]
    %v1539 = vld [vmem:[#allocation4 + $0x440] sm:$0xff]
    %v1540 = vld [vmem:[#allocation4 + $0x448] sm:$0xff]
    %v1541 = vld [vmem:[#allocation4 + $0x450] sm:$0xff]
    %v1542 = vld [vmem:[#allocation4 + $0x458] sm:$0xff]
    %v1543 = vld [vmem:[#allocation4 + $0x460] sm:$0xff]
    %v1544 = vld [vmem:[#allocation4 + $0x468] sm:$0xff]
    %v1545 = vld [vmem:[#allocation4 + $0x470] sm:$0xff]
    %v1546 = vld [vmem:[#allocation4 + $0x478] sm:$0xff]
    %v1691 = vunpack.c.l.b16 %v1403
    %v1692 = vunpack.c.h.b16 %v1403
    %v1693 = vunpack.c.l.b16 %v1404
    %v1694 = vunpack.c.h.b16 %v1404
    %v1695 = vunpack.c.l.b16 %v1405
    %v1696 = vunpack.c.h.b16 %v1405
    %v1697 = vunpack.c.l.b16 %v1406
    %v1698 = vunpack.c.h.b16 %v1406
    %v1699 = vunpack.c.l.b16 %v1407
    %v1700 = vunpack.c.h.b16 %v1407
    %v1701 = vunpack.c.l.b16 %v1408
    %v1702 = vunpack.c.h.b16 %v1408
    %v1703 = vunpack.c.l.b16 %v1409
    %v1704 = vunpack.c.h.b16 %v1409
    %v1705 = vunpack.c.l.b16 %v1410
    %v1706 = vunpack.c.h.b16 %v1410
    %v1707 = vunpack.c.l.b16 %v1411
    %v1708 = vunpack.c.h.b16 %v1411
    %v1709 = vunpack.c.l.b16 %v1412
    %v1710 = vunpack.c.h.b16 %v1412
    %v1711 = vunpack.c.l.b16 %v1413
    %v1712 = vunpack.c.h.b16 %v1413
    %v1713 = vunpack.c.l.b16 %v1414
    %v1714 = vunpack.c.h.b16 %v1414
    %v1715 = vunpack.c.l.b16 %v1415
    %v1716 = vunpack.c.h.b16 %v1415
    %v1717 = vunpack.c.l.b16 %v1416
    %v1718 = vunpack.c.h.b16 %v1416
    %v1719 = vunpack.c.l.b16 %v1417
    %v1720 = vunpack.c.h.b16 %v1417
    %v1721 = vunpack.c.l.b16 %v1418
    %v1722 = vunpack.c.h.b16 %v1418
    %v1723 = vunpack.c.l.b16 %v1419
    %v1724 = vunpack.c.h.b16 %v1419
    %v1725 = vunpack.c.l.b16 %v1420
    %v1726 = vunpack.c.h.b16 %v1420
    %v1727 = vunpack.c.l.b16 %v1421
    %v1728 = vunpack.c.h.b16 %v1421
    %v1729 = vunpack.c.l.b16 %v1422
    %v1730 = vunpack.c.h.b16 %v1422
    %v1731 = vunpack.c.l.b16 %v1423
    %v1732 = vunpack.c.h.b16 %v1423
    %v1733 = vunpack.c.l.b16 %v1424
    %v1734 = vunpack.c.h.b16 %v1424
    %v1735 = vunpack.c.l.b16 %v1425
    %v1736 = vunpack.c.h.b16 %v1425
    %v1737 = vunpack.c.l.b16 %v1426
    %v1738 = vunpack.c.h.b16 %v1426
    %v1739 = vunpack.c.l.b16 %v1427
    %v1740 = vunpack.c.h.b16 %v1427
    %v1741 = vunpack.c.l.b16 %v1428
    %v1742 = vunpack.c.h.b16 %v1428
    %v1743 = vunpack.c.l.b16 %v1429
    %v1744 = vunpack.c.h.b16 %v1429
    %v1745 = vunpack.c.l.b16 %v1430
    %v1746 = vunpack.c.h.b16 %v1430
    %v1747 = vunpack.c.l.b16 %v1431
    %v1748 = vunpack.c.h.b16 %v1431
    %v1749 = vunpack.c.l.b16 %v1432
    %v1750 = vunpack.c.h.b16 %v1432
    %v1751 = vunpack.c.l.b16 %v1433
    %v1752 = vunpack.c.h.b16 %v1433
    %v1753 = vunpack.c.l.b16 %v1434
    %v1754 = vunpack.c.h.b16 %v1434
    %v1755 = vunpack.c.l.b16 %v1435
    %v1756 = vunpack.c.h.b16 %v1435
    %v1757 = vunpack.c.l.b16 %v1436
    %v1758 = vunpack.c.h.b16 %v1436
    %v1759 = vunpack.c.l.b16 %v1437
    %v1760 = vunpack.c.h.b16 %v1437
    %v1761 = vunpack.c.l.b16 %v1438
    %v1762 = vunpack.c.h.b16 %v1438
    %v1763 = vunpack.c.l.b16 %v1439
    %v1764 = vunpack.c.h.b16 %v1439
    %v1765 = vunpack.c.l.b16 %v1440
    %v1766 = vunpack.c.h.b16 %v1440
    %v1767 = vunpack.c.l.b16 %v1441
    %v1768 = vunpack.c.h.b16 %v1441
    %v1769 = vunpack.c.l.b16 %v1442
    %v1770 = vunpack.c.h.b16 %v1442
    %v1771 = vunpack.c.l.b16 %v1443
    %v1772 = vunpack.c.h.b16 %v1443
    %v1773 = vunpack.c.l.b16 %v1444
    %v1774 = vunpack.c.h.b16 %v1444
    %v1775 = vunpack.c.l.b16 %v1445
    %v1776 = vunpack.c.h.b16 %v1445
    %v1777 = vunpack.c.l.b16 %v1446
    %v1778 = vunpack.c.h.b16 %v1446
    %v1779 = vunpack.c.l.b16 %v1447
    %v1780 = vunpack.c.h.b16 %v1447
    %v1781 = vunpack.c.l.b16 %v1448
    %v1782 = vunpack.c.h.b16 %v1448
    %v1783 = vunpack.c.l.b16 %v1449
    %v1784 = vunpack.c.h.b16 %v1449
    %v1785 = vunpack.c.l.b16 %v1450
    %v1786 = vunpack.c.h.b16 %v1450
    %v1787 = vunpack.c.l.b16 %v1451
    %v1788 = vunpack.c.h.b16 %v1451
    %v1789 = vunpack.c.l.b16 %v1452
    %v1790 = vunpack.c.h.b16 %v1452
    %v1791 = vunpack.c.l.b16 %v1453
    %v1792 = vunpack.c.h.b16 %v1453
    %v1793 = vunpack.c.l.b16 %v1454
    %v1794 = vunpack.c.h.b16 %v1454
    %v1795 = vunpack.c.l.b16 %v1455
    %v1796 = vunpack.c.h.b16 %v1455
    %v1797 = vunpack.c.l.b16 %v1456
    %v1798 = vunpack.c.h.b16 %v1456
    %v1799 = vunpack.c.l.b16 %v1457
    %v1800 = vunpack.c.h.b16 %v1457
    %v1801 = vunpack.c.l.b16 %v1458
    %v1802 = vunpack.c.h.b16 %v1458
    %v1803 = vunpack.c.l.b16 %v1459
    %v1804 = vunpack.c.h.b16 %v1459
    %v1805 = vunpack.c.l.b16 %v1460
    %v1806 = vunpack.c.h.b16 %v1460
    %v1807 = vunpack.c.l.b16 %v1461
    %v1808 = vunpack.c.h.b16 %v1461
    %v1809 = vunpack.c.l.b16 %v1462
    %v1810 = vunpack.c.h.b16 %v1462
    %v1811 = vunpack.c.l.b16 %v1463
    %v1812 = vunpack.c.h.b16 %v1463
    %v1813 = vunpack.c.l.b16 %v1464
    %v1814 = vunpack.c.h.b16 %v1464
    %v1815 = vunpack.c.l.b16 %v1465
    %v1816 = vunpack.c.h.b16 %v1465
    %v1817 = vunpack.c.l.b16 %v1466
    %v1818 = vunpack.c.h.b16 %v1466
    %v1819 = vunpack.c.l.b16 %v1467
    %v1820 = vunpack.c.h.b16 %v1467
    %v1821 = vunpack.c.l.b16 %v1468
    %v1822 = vunpack.c.h.b16 %v1468
    %v1823 = vunpack.c.l.b16 %v1469
    %v1824 = vunpack.c.h.b16 %v1469
    %v1825 = vunpack.c.l.b16 %v1470
    %v1826 = vunpack.c.h.b16 %v1470
    %v1827 = vunpack.c.l.b16 %v1471
    %v1828 = vunpack.c.h.b16 %v1471
    %v1829 = vunpack.c.l.b16 %v1472
    %v1830 = vunpack.c.h.b16 %v1472
    %v1831 = vunpack.c.l.b16 %v1473
    %v1832 = vunpack.c.h.b16 %v1473
    %v1833 = vunpack.c.l.b16 %v1474
    %v1834 = vunpack.c.h.b16 %v1474
    %v1835 = vunpack.c.l.b16 %v1475
    %v1836 = vunpack.c.h.b16 %v1475
    %v1837 = vunpack.c.l.b16 %v1476
    %v1838 = vunpack.c.h.b16 %v1476
    %v1839 = vunpack.c.l.b16 %v1477
    %v1840 = vunpack.c.h.b16 %v1477
    %v1841 = vunpack.c.l.b16 %v1478
    %v1842 = vunpack.c.h.b16 %v1478
    %v1843 = vunpack.c.l.b16 %v1479
    %v1844 = vunpack.c.h.b16 %v1479
    %v1845 = vunpack.c.l.b16 %v1480
    %v1846 = vunpack.c.h.b16 %v1480
    %v1847 = vunpack.c.l.b16 %v1481
    %v1848 = vunpack.c.h.b16 %v1481
    %v1849 = vunpack.c.l.b16 %v1482
    %v1850 = vunpack.c.h.b16 %v1482
    %v1851 = vunpack.c.l.b16 %v1483
    %v1852 = vunpack.c.h.b16 %v1483
    %v1853 = vunpack.c.l.b16 %v1484
    %v1854 = vunpack.c.h.b16 %v1484
    %v1855 = vunpack.c.l.b16 %v1485
    %v1856 = vunpack.c.h.b16 %v1485
    %v1857 = vunpack.c.l.b16 %v1486
    %v1858 = vunpack.c.h.b16 %v1486
    %v1859 = vunpack.c.l.b16 %v1487
    %v1860 = vunpack.c.h.b16 %v1487
    %v1861 = vunpack.c.l.b16 %v1488
    %v1862 = vunpack.c.h.b16 %v1488
    %v1863 = vunpack.c.l.b16 %v1489
    %v1864 = vunpack.c.h.b16 %v1489
    %v1865 = vunpack.c.l.b16 %v1490
    %v1866 = vunpack.c.h.b16 %v1490
    %v1867 = vunpack.c.l.b16 %v1491
    %v1868 = vunpack.c.h.b16 %v1491
    %v1869 = vunpack.c.l.b16 %v1492
    %v1870 = vunpack.c.h.b16 %v1492
    %v1871 = vunpack.c.l.b16 %v1493
    %v1872 = vunpack.c.h.b16 %v1493
    %v1873 = vunpack.c.l.b16 %v1494
    %v1874 = vunpack.c.h.b16 %v1494
    %v1875 = vunpack.c.l.b16 %v1495
    %v1876 = vunpack.c.h.b16 %v1495
    %v1877 = vunpack.c.l.b16 %v1496
    %v1878 = vunpack.c.h.b16 %v1496
    %v1879 = vunpack.c.l.b16 %v1497
    %v1880 = vunpack.c.h.b16 %v1497
    %v1881 = vunpack.c.l.b16 %v1498
    %v1882 = vunpack.c.h.b16 %v1498
    %v1883 = vunpack.c.l.b16 %v1499
    %v1884 = vunpack.c.h.b16 %v1499
    %v1885 = vunpack.c.l.b16 %v1500
    %v1886 = vunpack.c.h.b16 %v1500
    %v1887 = vunpack.c.l.b16 %v1501
    %v1888 = vunpack.c.h.b16 %v1501
    %v1889 = vunpack.c.l.b16 %v1502
    %v1890 = vunpack.c.h.b16 %v1502
    %v1891 = vunpack.c.l.b16 %v1503
    %v1892 = vunpack.c.h.b16 %v1503
    %v1893 = vunpack.c.l.b16 %v1504
    %v1894 = vunpack.c.h.b16 %v1504
    %v1895 = vunpack.c.l.b16 %v1505
    %v1896 = vunpack.c.h.b16 %v1505
    %v1897 = vunpack.c.l.b16 %v1506
    %v1898 = vunpack.c.h.b16 %v1506
    %v1899 = vunpack.c.l.b16 %v1507
    %v1900 = vunpack.c.h.b16 %v1507
    %v1901 = vunpack.c.l.b16 %v1508
    %v1902 = vunpack.c.h.b16 %v1508
    %v1903 = vunpack.c.l.b16 %v1509
    %v1904 = vunpack.c.h.b16 %v1509
    %v1905 = vunpack.c.l.b16 %v1510
    %v1906 = vunpack.c.h.b16 %v1510
    %v1907 = vunpack.c.l.b16 %v1511
    %v1908 = vunpack.c.h.b16 %v1511
    %v1909 = vunpack.c.l.b16 %v1512
    %v1910 = vunpack.c.h.b16 %v1512
    %v1911 = vunpack.c.l.b16 %v1513
    %v1912 = vunpack.c.h.b16 %v1513
    %v1913 = vunpack.c.l.b16 %v1514
    %v1914 = vunpack.c.h.b16 %v1514
    %v1915 = vunpack.c.l.b16 %v1515
    %v1916 = vunpack.c.h.b16 %v1515
    %v1917 = vunpack.c.l.b16 %v1516
    %v1918 = vunpack.c.h.b16 %v1516
    %v1919 = vunpack.c.l.b16 %v1517
    %v1920 = vunpack.c.h.b16 %v1517
    %v1921 = vunpack.c.l.b16 %v1518
    %v1922 = vunpack.c.h.b16 %v1518
    %v1923 = vunpack.c.l.b16 %v1519
    %v1924 = vunpack.c.h.b16 %v1519
    %v1925 = vunpack.c.l.b16 %v1520
    %v1926 = vunpack.c.h.b16 %v1520
    %v1927 = vunpack.c.l.b16 %v1521
    %v1928 = vunpack.c.h.b16 %v1521
    %v1929 = vunpack.c.l.b16 %v1522
    %v1930 = vunpack.c.h.b16 %v1522
    %v1931 = vunpack.c.l.b16 %v1523
    %v1932 = vunpack.c.h.b16 %v1523
    %v1933 = vunpack.c.l.b16 %v1524
    %v1934 = vunpack.c.h.b16 %v1524
    %v1935 = vunpack.c.l.b16 %v1525
    %v1936 = vunpack.c.h.b16 %v1525
    %v1937 = vunpack.c.l.b16 %v1526
    %v1938 = vunpack.c.h.b16 %v1526
    %v1939 = vunpack.c.l.b16 %v1527
    %v1940 = vunpack.c.h.b16 %v1527
    %v1941 = vunpack.c.l.b16 %v1528
    %v1942 = vunpack.c.h.b16 %v1528
    %v1943 = vunpack.c.l.b16 %v1529
    %v1944 = vunpack.c.h.b16 %v1529
    %v1945 = vunpack.c.l.b16 %v1530
    %v1946 = vunpack.c.h.b16 %v1530
    %v1947 = vunpack.c.l.b16 %v1531
    %v1948 = vunpack.c.h.b16 %v1531
    %v1949 = vunpack.c.l.b16 %v1532
    %v1950 = vunpack.c.h.b16 %v1532
    %v1951 = vunpack.c.l.b16 %v1533
    %v1952 = vunpack.c.h.b16 %v1533
    %v1953 = vunpack.c.l.b16 %v1534
    %v1954 = vunpack.c.h.b16 %v1534
    %v1955 = vunpack.c.l.b16 %v1535
    %v1956 = vunpack.c.h.b16 %v1535
    %v1957 = vunpack.c.l.b16 %v1536
    %v1958 = vunpack.c.h.b16 %v1536
    %v1959 = vunpack.c.l.b16 %v1537
    %v1960 = vunpack.c.h.b16 %v1537
    %v1961 = vunpack.c.l.b16 %v1538
    %v1962 = vunpack.c.h.b16 %v1538
    %v1963 = vunpack.c.l.b16 %v1539
    %v1964 = vunpack.c.h.b16 %v1539
    %v1965 = vunpack.c.l.b16 %v1540
    %v1966 = vunpack.c.h.b16 %v1540
    %v1967 = vunpack.c.l.b16 %v1541
    %v1968 = vunpack.c.h.b16 %v1541
    %v1969 = vunpack.c.l.b16 %v1542
    %v1970 = vunpack.c.h.b16 %v1542
    %v1971 = vunpack.c.l.b16 %v1543
    %v1972 = vunpack.c.h.b16 %v1543
    %v1973 = vunpack.c.l.b16 %v1544
    %v1974 = vunpack.c.h.b16 %v1544
    %v1975 = vunpack.c.l.b16 %v1545
    %v1976 = vunpack.c.h.b16 %v1545
    %v1977 = vunpack.c.l.b16 %v1546
    %v1978 = vunpack.c.h.b16 %v1546
    %v1979 = vpack.c.b16 %v1697, %v1691
    %v1980 = vpack.c.b16 %v1698, %v1692
    %v1981 = vpack.c.b16 %v1699, %v1693
    %v1982 = vpack.c.b16 %v1700, %v1694
    %v1983 = vpack.c.b16 %v1701, %v1695
    %v1984 = vpack.c.b16 %v1702, %v1696
    %v1985 = vpack.c.b16 %v1709, %v1703
    %v1986 = vpack.c.b16 %v1710, %v1704
    %v1987 = vpack.c.b16 %v1711, %v1705
    %v1988 = vpack.c.b16 %v1712, %v1706
    %v1989 = vpack.c.b16 %v1713, %v1707
    %v1990 = vpack.c.b16 %v1714, %v1708
    %v1991 = vpack.c.b16 %v1721, %v1715
    %v1992 = vpack.c.b16 %v1722, %v1716
    %v1993 = vpack.c.b16 %v1723, %v1717
    %v1994 = vpack.c.b16 %v1724, %v1718
    %v1995 = vpack.c.b16 %v1725, %v1719
    %v1996 = vpack.c.b16 %v1726, %v1720
    %v1997 = vpack.c.b16 %v1733, %v1727
    %v1998 = vpack.c.b16 %v1734, %v1728
    %v1999 = vpack.c.b16 %v1735, %v1729
    %v2000 = vpack.c.b16 %v1736, %v1730
    %v2001 = vpack.c.b16 %v1737, %v1731
    %v2002 = vpack.c.b16 %v1738, %v1732
    %v2003 = vpack.c.b16 %v1745, %v1739
    %v2004 = vpack.c.b16 %v1746, %v1740
    %v2005 = vpack.c.b16 %v1747, %v1741
    %v2006 = vpack.c.b16 %v1748, %v1742
    %v2007 = vpack.c.b16 %v1749, %v1743
    %v2008 = vpack.c.b16 %v1750, %v1744
    %v2009 = vpack.c.b16 %v1757, %v1751
    %v2010 = vpack.c.b16 %v1758, %v1752
    %v2011 = vpack.c.b16 %v1759, %v1753
    %v2012 = vpack.c.b16 %v1760, %v1754
    %v2013 = vpack.c.b16 %v1761, %v1755
    %v2014 = vpack.c.b16 %v1762, %v1756
    %v2015 = vpack.c.b16 %v1769, %v1763
    %v2016 = vpack.c.b16 %v1770, %v1764
    %v2017 = vpack.c.b16 %v1771, %v1765
    %v2018 = vpack.c.b16 %v1772, %v1766
    %v2019 = vpack.c.b16 %v1773, %v1767
    %v2020 = vpack.c.b16 %v1774, %v1768
    %v2021 = vpack.c.b16 %v1781, %v1775
    %v2022 = vpack.c.b16 %v1782, %v1776
    %v2023 = vpack.c.b16 %v1783, %v1777
    %v2024 = vpack.c.b16 %v1784, %v1778
    %v2025 = vpack.c.b16 %v1785, %v1779
    %v2026 = vpack.c.b16 %v1786, %v1780
    %v2027 = vpack.c.b16 %v1793, %v1787
    %v2028 = vpack.c.b16 %v1794, %v1788
    %v2029 = vpack.c.b16 %v1795, %v1789
    %v2030 = vpack.c.b16 %v1796, %v1790
    %v2031 = vpack.c.b16 %v1797, %v1791
    %v2032 = vpack.c.b16 %v1798, %v1792
    %v2033 = vpack.c.b16 %v1805, %v1799
    %v2034 = vpack.c.b16 %v1806, %v1800
    %v2035 = vpack.c.b16 %v1807, %v1801
    %v2036 = vpack.c.b16 %v1808, %v1802
    %v2037 = vpack.c.b16 %v1809, %v1803
    %v2038 = vpack.c.b16 %v1810, %v1804
    %v2039 = vpack.c.b16 %v1817, %v1811
    %v2040 = vpack.c.b16 %v1818, %v1812
    %v2041 = vpack.c.b16 %v1819, %v1813
    %v2042 = vpack.c.b16 %v1820, %v1814
    %v2043 = vpack.c.b16 %v1821, %v1815
    %v2044 = vpack.c.b16 %v1822, %v1816
    %v2045 = vpack.c.b16 %v1829, %v1823
    %v2046 = vpack.c.b16 %v1830, %v1824
    %v2047 = vpack.c.b16 %v1831, %v1825
    %v2048 = vpack.c.b16 %v1832, %v1826
    %v2049 = vpack.c.b16 %v1833, %v1827
    %v2050 = vpack.c.b16 %v1834, %v1828
    %v2051 = vpack.c.b16 %v1841, %v1835
    %v2052 = vpack.c.b16 %v1842, %v1836
    %v2053 = vpack.c.b16 %v1843, %v1837
    %v2054 = vpack.c.b16 %v1844, %v1838
    %v2055 = vpack.c.b16 %v1845, %v1839
    %v2056 = vpack.c.b16 %v1846, %v1840
    %v2057 = vpack.c.b16 %v1853, %v1847
    %v2058 = vpack.c.b16 %v1854, %v1848
    %v2059 = vpack.c.b16 %v1855, %v1849
    %v2060 = vpack.c.b16 %v1856, %v1850
    %v2061 = vpack.c.b16 %v1857, %v1851
    %v2062 = vpack.c.b16 %v1858, %v1852
    %v2063 = vpack.c.b16 %v1865, %v1859
    %v2064 = vpack.c.b16 %v1866, %v1860
    %v2065 = vpack.c.b16 %v1867, %v1861
    %v2066 = vpack.c.b16 %v1868, %v1862
    %v2067 = vpack.c.b16 %v1869, %v1863
    %v2068 = vpack.c.b16 %v1870, %v1864
    %v2069 = vpack.c.b16 %v1877, %v1871
    %v2070 = vpack.c.b16 %v1878, %v1872
    %v2071 = vpack.c.b16 %v1879, %v1873
    %v2072 = vpack.c.b16 %v1880, %v1874
    %v2073 = vpack.c.b16 %v1881, %v1875
    %v2074 = vpack.c.b16 %v1882, %v1876
    %v2075 = vpack.c.b16 %v1889, %v1883
    %v2076 = vpack.c.b16 %v1890, %v1884
    %v2077 = vpack.c.b16 %v1891, %v1885
    %v2078 = vpack.c.b16 %v1892, %v1886
    %v2079 = vpack.c.b16 %v1893, %v1887
    %v2080 = vpack.c.b16 %v1894, %v1888
    %v2081 = vpack.c.b16 %v1901, %v1895
    %v2082 = vpack.c.b16 %v1902, %v1896
    %v2083 = vpack.c.b16 %v1903, %v1897
    %v2084 = vpack.c.b16 %v1904, %v1898
    %v2085 = vpack.c.b16 %v1905, %v1899
    %v2086 = vpack.c.b16 %v1906, %v1900
    %v2087 = vpack.c.b16 %v1913, %v1907
    %v2088 = vpack.c.b16 %v1914, %v1908
    %v2089 = vpack.c.b16 %v1915, %v1909
    %v2090 = vpack.c.b16 %v1916, %v1910
    %v2091 = vpack.c.b16 %v1917, %v1911
    %v2092 = vpack.c.b16 %v1918, %v1912
    %v2093 = vpack.c.b16 %v1925, %v1919
    %v2094 = vpack.c.b16 %v1926, %v1920
    %v2095 = vpack.c.b16 %v1927, %v1921
    %v2096 = vpack.c.b16 %v1928, %v1922
    %v2097 = vpack.c.b16 %v1929, %v1923
    %v2098 = vpack.c.b16 %v1930, %v1924
    %v2099 = vpack.c.b16 %v1937, %v1931
    %v2100 = vpack.c.b16 %v1938, %v1932
    %v2101 = vpack.c.b16 %v1939, %v1933
    %v2102 = vpack.c.b16 %v1940, %v1934
    %v2103 = vpack.c.b16 %v1941, %v1935
    %v2104 = vpack.c.b16 %v1942, %v1936
    %v2105 = vpack.c.b16 %v1949, %v1943
    %v2106 = vpack.c.b16 %v1950, %v1944
    %v2107 = vpack.c.b16 %v1951, %v1945
    %v2108 = vpack.c.b16 %v1952, %v1946
    %v2109 = vpack.c.b16 %v1953, %v1947
    %v2110 = vpack.c.b16 %v1954, %v1948
    %v2111 = vpack.c.b16 %v1961, %v1955
    %v2112 = vpack.c.b16 %v1962, %v1956
    %v2113 = vpack.c.b16 %v1963, %v1957
    %v2114 = vpack.c.b16 %v1964, %v1958
    %v2115 = vpack.c.b16 %v1965, %v1959
    %v2116 = vpack.c.b16 %v1966, %v1960
    %v2117 = vpack.c.b16 %v1973, %v1967
    %v2118 = vpack.c.b16 %v1974, %v1968
    %v2119 = vpack.c.b16 %v1975, %v1969
    %v2120 = vpack.c.b16 %v1976, %v1970
    %v2121 = vpack.c.b16 %v1977, %v1971
    %v2122 = vpack.c.b16 %v1978, %v1972
    %2267 = vmatprep.subr.bf16.mxu0 %v1980
    %2268 = vmatpush1.bf16.msra.mxu0 %v1979
    %2269 = vmatprep.subr.bf16.mxu0 %v1986
    %2270 = vmatpush1.bf16.msra.mxu0 %v1985
    %2271 = vmatprep.subr.bf16.mxu0 %v1992
    %2272 = vmatpush1.bf16.msra.mxu0 %v1991
    %2273 = vmatprep.subr.bf16.mxu0 %v1998
    %2274 = vmatpush1.bf16.msra.mxu0 %v1997
    %2275 = vmatprep.subr.bf16.mxu0 %v2004
    %2276 = vmatpush1.bf16.msra.mxu0 %v2003
    %2277 = vmatprep.subr.bf16.mxu0 %v2010
    %2278 = vmatpush1.bf16.msra.mxu0 %v2009
    %2279 = vmatprep.subr.bf16.mxu0 %v2016
    %2280 = vmatpush1.bf16.msra.mxu0 %v2015
    %2281 = vmatprep.subr.bf16.mxu0 %v2022
    %2282 = vmatpush1.bf16.msra.mxu0 %v2021
    %2283 = vmatprep.subr.bf16.mxu0 %v2028
    %2284 = vmatpush1.bf16.msra.mxu0 %v2027
    %2285 = vmatprep.subr.bf16.mxu0 %v2034
    %2286 = vmatpush1.bf16.msra.mxu0 %v2033
    %2287 = vmatprep.subr.bf16.mxu0 %v2040
    %2288 = vmatpush1.bf16.msra.mxu0 %v2039
    %2289 = vmatprep.subr.bf16.mxu0 %v2046
    %2290 = vmatpush1.bf16.msra.mxu0 %v2045
    %2291 = vmatprep.subr.bf16.mxu0 %v2052
    %2292 = vmatpush1.bf16.msra.mxu0 %v2051
    %2293 = vmatprep.subr.bf16.mxu0 %v2058
    %2294 = vmatpush1.bf16.msra.mxu0 %v2057
    %2295 = vmatprep.subr.bf16.mxu0 %v2064
    %2296 = vmatpush1.bf16.msra.mxu0 %v2063
    %2297 = vmatprep.subr.bf16.mxu0 %v2070
    %2298 = vmatpush1.bf16.msra.mxu0 %v2069
    %2299 = vmatprep.mubr.bf16.mxu0 %v1395
    %2300 = vmatmul.mubr.bf16.gmra.mrb[0].mxu0 %v1394
    %v2301 = vpop.f32.mrb[0].mxu0
    %v2302 = vadd.f32 0.0, %v2301
    %v2303 = vpop.f32.mrb[0].mxu0
    %v2304 = vadd.f32 0.0, %v2303
    %v2305 = vpop.f32.mrb[0].mxu0
    %v2306 = vadd.f32 0.0, %v2305
    %v2307 = vpop.f32.mrb[0].mxu0
    %v2308 = vadd.f32 0.0, %v2307
    %2309 = vmatprep.mubr.bf16.mxu0 %v1398
    %2310 = vmatmul.mubr.bf16.gmra.mrb[0].mxu0 %v1397
    %v2311 = vpop.f32.mrb[0].mxu0
    %v2312 = vadd.f32 0.0, %v2311
    %v2313 = vpop.f32.mrb[0].mxu0
    %v2314 = vadd.f32 0.0, %v2313
    %v2315 = vpop.f32.mrb[0].mxu0
    %v2316 = vadd.f32 0.0, %v2315
    %v2317 = vpop.f32.mrb[0].mxu0
    %v2318 = vadd.f32 0.0, %v2317
    %2319 = vmatprep.mubr.bf16.mxu0 %v1401
    %2320 = vmatmul.mubr.bf16.gmra.mrb[0].mxu0 %v1400
    %v2321 = vpop.f32.mrb[0].mxu0
    %v2322 = vadd.f32 0.0, %v2321
    %v2323 = vpop.f32.mrb[0].mxu0
    %v2324 = vadd.f32 0.0, %v2323
    %v2325 = vpop.f32.mrb[0].mxu0
    %v2326 = vpop.f32.mrb[0].mxu0
    %2327 = vdwg.mxu0
    %2328 = vmatprep.subr.bf16.mxu0 %v2076
    %2329 = vmatpush1.bf16.msra.mxu0 %v2075
    %2330 = vmatprep.subr.bf16.mxu0 %v2082
    %2331 = vmatpush1.bf16.msra.mxu0 %v2081
    %2332 = vmatprep.subr.bf16.mxu0 %v2088
    %2333 = vmatpush1.bf16.msra.mxu0 %v2087
    %2334 = vmatprep.subr.bf16.mxu0 %v2094
    %2335 = vmatpush1.bf16.msra.mxu0 %v2093
    %2336 = vmatprep.subr.bf16.mxu0 %v2100
    %2337 = vmatpush1.bf16.msra.mxu0 %v2099
    %2338 = vmatprep.subr.bf16.mxu0 %v2106
    %2339 = vmatpush1.bf16.msra.mxu0 %v2105
    %2340 = vmatprep.subr.bf16.mxu0 %v2112
    %2341 = vmatpush1.bf16.msra.mxu0 %v2111
    %2342 = vmatprep.subr.bf16.mxu0 %v2118
    %2343 = vmatpush1.bf16.msra.mxu0 %v2117
    %2344 = vmatprep.subr.bf16.mxu0 0
    %2345 = vmatpush1.bf16.msra.mxu0 0
    %2346 = vmatprep.subr.bf16.mxu0 0
    %2347 = vmatpush1.bf16.msra.mxu0 0
    %2348 = vmatprep.subr.bf16.mxu0 0
    %2349 = vmatpush1.bf16.msra.mxu0 0
    %2350 = vmatprep.subr.bf16.mxu0 0
    %2351 = vmatpush1.bf16.msra.mxu0 0
    %2352 = vmatprep.subr.bf16.mxu0 0
    %2353 = vmatpush1.bf16.msra.mxu0 0
    %2354 = vmatprep.subr.bf16.mxu0 0
    %2355 = vmatpush1.bf16.msra.mxu0 0
    %2356 = vmatprep.subr.bf16.mxu0 0
    %2357 = vmatpush1.bf16.msra.mxu0 0
    %2358 = vmatprep.subr.bf16.mxu0 0
    %2359 = vmatpush1.bf16.msra.mxu0 0
    %2360 = vmatprep.mubr.bf16.mxu0 0
    %2361 = vmatmul.mubr.bf16.gmra.mrb[0].mxu0 %v1396
    %v2362 = vpop.f32.mrb[0].mxu0
    %v2363 = vadd.f32 %v2302, %v2362
    %v2364 = vpop.f32.mrb[0].mxu0
    %v2365 = vadd.f32 %v2304, %v2364
    %v2366 = vpop.f32.mrb[0].mxu0
    %v2367 = vadd.f32 %v2306, %v2366
    %v2368 = vpop.f32.mrb[0].mxu0
    %v2369 = vadd.f32 %v2308, %v2368
    %2370 = vmatprep.mubr.bf16.mxu0 0
    %2371 = vmatmul.mubr.bf16.gmra.mrb[0].mxu0 %v1399
    %v2372 = vpop.f32.mrb[0].mxu0
    %v2373 = vadd.f32 %v2312, %v2372
    %v2374 = vpop.f32.mrb[0].mxu0
    %v2375 = vadd.f32 %v2314, %v2374
    %v2376 = vpop.f32.mrb[0].mxu0
    %v2377 = vadd.f32 %v2316, %v2376
    %v2378 = vpop.f32.mrb[0].mxu0
    %v2379 = vadd.f32 %v2318, %v2378
    %2380 = vmatprep.mubr.bf16.mxu0 0
    %2381 = vmatmul.mubr.bf16.gmra.mrb[0].mxu0 %v1402
    %v2382 = vpop.f32.mrb[0].mxu0
    %v2383 = vadd.f32 %v2322, %v2382
    %v2384 = vpop.f32.mrb[0].mxu0
    %v2385 = vadd.f32 %v2324, %v2384
    %v2386 = vpop.f32.mrb[0].mxu0
    %v2387 = vpop.f32.mrb[0].mxu0
    %2388 = vdwg.mxu0
    %2389 = vmatprep.subr.bf16.mxu0 %v1982
    %2390 = vmatpush1.bf16.msra.mxu0 %v1981
    %2391 = vmatprep.subr.bf16.mxu0 %v1988
    %2392 = vmatpush1.bf16.msra.mxu0 %v1987
    %2393 = vmatprep.subr.bf16.mxu0 %v1994
    %2394 = vmatpush1.bf16.msra.mxu0 %v1993
    %2395 = vmatprep.subr.bf16.mxu0 %v2000
    %2396 = vmatpush1.bf16.msra.mxu0 %v1999
    %2397 = vmatprep.subr.bf16.mxu0 %v2006
    %2398 = vmatpush1.bf16.msra.mxu0 %v2005
    %2399 = vmatprep.subr.bf16.mxu0 %v2012
    %2400 = vmatpush1.bf16.msra.mxu0 %v2011
    %2401 = vmatprep.subr.bf16.mxu0 %v2018
    %2402 = vmatpush1.bf16.msra.mxu0 %v2017
    %2403 = vmatprep.subr.bf16.mxu0 %v2024
    %2404 = vmatpush1.bf16.msra.mxu0 %v2023
    %2405 = vmatprep.subr.bf16.mxu0 %v2030
    %2406 = vmatpush1.bf16.msra.mxu0 %v2029
    %2407 = vmatprep.subr.bf16.mxu0 %v2036
    %2408 = vmatpush1.bf16.msra.mxu0 %v2035
    %2409 = vmatprep.subr.bf16.mxu0 %v2042
    %2410 = vmatpush1.bf16.msra.mxu0 %v2041
    %2411 = vmatprep.subr.bf16.mxu0 %v2048
    %2412 = vmatpush1.bf16.msra.mxu0 %v2047
    %2413 = vmatprep.subr.bf16.mxu0 %v2054
    %2414 = vmatpush1.bf16.msra.mxu0 %v2053
    %2415 = vmatprep.subr.bf16.mxu0 %v2060
    %2416 = vmatpush1.bf16.msra.mxu0 %v2059
    %2417 = vmatprep.subr.bf16.mxu0 %v2066
    %2418 = vmatpush1.bf16.msra.mxu0 %v2065
    %2419 = vmatprep.subr.bf16.mxu0 %v2072
    %2420 = vmatpush1.bf16.msra.mxu0 %v2071
    %2421 = vmatprep.mubr.bf16.mxu0 %v1395
    %2422 = vmatmul.mubr.bf16.gmra.mrb[0].mxu0 %v1394
    %v2423 = vpop.f32.mrb[0].mxu0
    %v2424 = vadd.f32 0.0, %v2423
    %v2425 = vpop.f32.mrb[0].mxu0
    %v2426 = vadd.f32 0.0, %v2425
    %v2427 = vpop.f32.mrb[0].mxu0
    %v2428 = vadd.f32 0.0, %v2427
    %v2429 = vpop.f32.mrb[0].mxu0
    %v2430 = vadd.f32 0.0, %v2429
    %2431 = vmatprep.mubr.bf16.mxu0 %v1398
    %2432 = vmatmul.mubr.bf16.gmra.mrb[0].mxu0 %v1397
    %v2433 = vpop.f32.mrb[0].mxu0
    %v2434 = vadd.f32 0.0, %v2433
    %v2435 = vpop.f32.mrb[0].mxu0
    %v2436 = vadd.f32 0.0, %v2435
    %v2437 = vpop.f32.mrb[0].mxu0
    %v2438 = vadd.f32 0.0, %v2437
    %v2439 = vpop.f32.mrb[0].mxu0
    %v2440 = vadd.f32 0.0, %v2439
    %2441 = vmatprep.mubr.bf16.mxu0 %v1401
    %2442 = vmatmul.mubr.bf16.gmra.mrb[0].mxu0 %v1400
    %v2443 = vpop.f32.mrb[0].mxu0
    %v2444 = vadd.f32 0.0, %v2443
    %v2445 = vpop.f32.mrb[0].mxu0
    %v2446 = vadd.f32 0.0, %v2445
    %v2447 = vpop.f32.mrb[0].mxu0
    %v2448 = vpop.f32.mrb[0].mxu0
    %2449 = vdwg.mxu0
    %2450 = vmatprep.subr.bf16.mxu0 %v2078
    %2451 = vmatpush1.bf16.msra.mxu0 %v2077
    %2452 = vmatprep.subr.bf16.mxu0 %v2084
    %2453 = vmatpush1.bf16.msra.mxu0 %v2083
    %2454 = vmatprep.subr.bf16.mxu0 %v2090
    %2455 = vmatpush1.bf16.msra.mxu0 %v2089
    %2456 = vmatprep.subr.bf16.mxu0 %v2096
    %2457 = vmatpush1.bf16.msra.mxu0 %v2095
    %2458 = vmatprep.subr.bf16.mxu0 %v2102
    %2459 = vmatpush1.bf16.msra.mxu0 %v2101
    %2460 = vmatprep.subr.bf16.mxu0 %v2108
    %2461 = vmatpush1.bf16.msra.mxu0 %v2107
    %2462 = vmatprep.subr.bf16.mxu0 %v2114
    %2463 = vmatpush1.bf16.msra.mxu0 %v2113
    %2464 = vmatprep.subr.bf16.mxu0 %v2120
    %2465 = vmatpush1.bf16.msra.mxu0 %v2119
    %2466 = vmatprep.subr.bf16.mxu0 0
    %2467 = vmatpush1.bf16.msra.mxu0 0
    %2468 = vmatprep.subr.bf16.mxu0 0
    %2469 = vmatpush1.bf16.msra.mxu0 0
    %2470 = vmatprep.subr.bf16.mxu0 0
    %2471 = vmatpush1.bf16.msra.mxu0 0
    %2472 = vmatprep.subr.bf16.mxu0 0
    %2473 = vmatpush1.bf16.msra.mxu0 0
    %2474 = vmatprep.subr.bf16.mxu0 0
    %2475 = vmatpush1.bf16.msra.mxu0 0
    %2476 = vmatprep.subr.bf16.mxu0 0
    %2477 = vmatpush1.bf16.msra.mxu0 0
    %2478 = vmatprep.subr.bf16.mxu0 0
    %2479 = vmatpush1.bf16.msra.mxu0 0
    %2480 = vmatprep.subr.bf16.mxu0 0
    %2481 = vmatpush1.bf16.msra.mxu0 0
    %2482 = vmatprep.mubr.bf16.mxu0 0
    %2483 = vmatmul.mubr.bf16.gmra.mrb[0].mxu0 %v1396
    %v2484 = vpop.f32.mrb[0].mxu0
    %v2485 = vadd.f32 %v2424, %v2484
    %v2486 = vpop.f32.mrb[0].mxu0
    %v2487 = vadd.f32 %v2426, %v2486
    %v2488 = vpop.f32.mrb[0].mxu0
    %v2489 = vadd.f32 %v2428, %v2488
    %v2490 = vpop.f32.mrb[0].mxu0
    %v2491 = vadd.f32 %v2430, %v2490
    %2492 = vmatprep.mubr.bf16.mxu0 0
    %2493 = vmatmul.mubr.bf16.gmra.mrb[0].mxu0 %v1399
    %v2494 = vpop.f32.mrb[0].mxu0
    %v2495 = vadd.f32 %v2434, %v2494
    %v2496 = vpop.f32.mrb[0].mxu0
    %v2497 = vadd.f32 %v2436, %v2496
    %v2498 = vpop.f32.mrb[0].mxu0
    %v2499 = vadd.f32 %v2438, %v2498
    %v2500 = vpop.f32.mrb[0].mxu0
    %v2501 = vadd.f32 %v2440, %v2500
    %2502 = vmatprep.mubr.bf16.mxu0 0
    %2503 = vmatmul.mubr.bf16.gmra.mrb[0].mxu0 %v1402
    %v2504 = vpop.f32.mrb[0].mxu0
    %v2505 = vadd.f32 %v2444, %v2504
    %v2506 = vpop.f32.mrb[0].mxu0
    %v2507 = vadd.f32 %v2446, %v2506
    %v2508 = vpop.f32.mrb[0].mxu0
    %v2509 = vpop.f32.mrb[0].mxu0
    %2510 = vdwg.mxu0
    %2511 = vmatprep.subr.bf16.mxu0 %v1984
    %2512 = vmatpush1.bf16.msra.mxu0 %v1983
    %2513 = vmatprep.subr.bf16.mxu0 %v1990
    %2514 = vmatpush1.bf16.msra.mxu0 %v1989
    %2515 = vmatprep.subr.bf16.mxu0 %v1996
    %2516 = vmatpush1.bf16.msra.mxu0 %v1995
    %2517 = vmatprep.subr.bf16.mxu0 %v2002
    %2518 = vmatpush1.bf16.msra.mxu0 %v2001
    %2519 = vmatprep.subr.bf16.mxu0 %v2008
    %2520 = vmatpush1.bf16.msra.mxu0 %v2007
    %2521 = vmatprep.subr.bf16.mxu0 %v2014
    %2522 = vmatpush1.bf16.msra.mxu0 %v2013
    %2523 = vmatprep.subr.bf16.mxu0 %v2020
    %2524 = vmatpush1.bf16.msra.mxu0 %v2019
    %2525 = vmatprep.subr.bf16.mxu0 %v2026
    %2526 = vmatpush1.bf16.msra.mxu0 %v2025
    %2527 = vmatprep.subr.bf16.mxu0 %v2032
    %2528 = vmatpush1.bf16.msra.mxu0 %v2031
    %2529 = vmatprep.subr.bf16.mxu0 %v2038
    %2530 = vmatpush1.bf16.msra.mxu0 %v2037
    %2531 = vmatprep.subr.bf16.mxu0 %v2044
    %2532 = vmatpush1.bf16.msra.mxu0 %v2043
    %2533 = vmatprep.subr.bf16.mxu0 %v2050
    %2534 = vmatpush1.bf16.msra.mxu0 %v2049
    %2535 = vmatprep.subr.bf16.mxu0 %v2056
    %2536 = vmatpush1.bf16.msra.mxu0 %v2055
    %2537 = vmatprep.subr.bf16.mxu0 %v2062
    %2538 = vmatpush1.bf16.msra.mxu0 %v2061
    %2539 = vmatprep.subr.bf16.mxu0 %v2068
    %2540 = vmatpush1.bf16.msra.mxu0 %v2067
    %2541 = vmatprep.subr.bf16.mxu0 %v2074
    %2542 = vmatpush1.bf16.msra.mxu0 %v2073
    %2543 = vmatprep.mubr.bf16.mxu0 %v1395
    %2544 = vmatmul.mubr.bf16.gmra.mrb[0].mxu0 %v1394
    %v2545 = vpop.f32.mrb[0].mxu0
    %v2546 = vadd.f32 0.0, %v2545
    %v2547 = vpop.f32.mrb[0].mxu0
    %v2548 = vadd.f32 0.0, %v2547
    %v2549 = vpop.f32.mrb[0].mxu0
    %v2550 = vadd.f32 0.0, %v2549
    %v2551 = vpop.f32.mrb[0].mxu0
    %v2552 = vadd.f32 0.0, %v2551
    %2553 = vmatprep.mubr.bf16.mxu0 %v1398
    %2554 = vmatmul.mubr.bf16.gmra.mrb[0].mxu0 %v1397
    %v2555 = vpop.f32.mrb[0].mxu0
    %v2556 = vadd.f32 0.0, %v2555
    %v2557 = vpop.f32.mrb[0].mxu0
    %v2558 = vadd.f32 0.0, %v2557
    %v2559 = vpop.f32.mrb[0].mxu0
    %v2560 = vadd.f32 0.0, %v2559
    %v2561 = vpop.f32.mrb[0].mxu0
    %v2562 = vadd.f32 0.0, %v2561
    %2563 = vmatprep.mubr.bf16.mxu0 %v1401
    %2564 = vmatmul.mubr.bf16.gmra.mrb[0].mxu0 %v1400
    %v2565 = vpop.f32.mrb[0].mxu0
    %v2566 = vadd.f32 0.0, %v2565
    %v2567 = vpop.f32.mrb[0].mxu0
    %v2568 = vadd.f32 0.0, %v2567
    %v2569 = vpop.f32.mrb[0].mxu0
    %v2570 = vpop.f32.mrb[0].mxu0
    %2571 = vdwg.mxu0
    %2572 = vmatprep.subr.bf16.mxu0 %v2080
    %2573 = vmatpush1.bf16.msra.mxu0 %v2079
    %2574 = vmatprep.subr.bf16.mxu0 %v2086
    %2575 = vmatpush1.bf16.msra.mxu0 %v2085
    %2576 = vmatprep.subr.bf16.mxu0 %v2092
    %2577 = vmatpush1.bf16.msra.mxu0 %v2091
    %2578 = vmatprep.subr.bf16.mxu0 %v2098
    %2579 = vmatpush1.bf16.msra.mxu0 %v2097
    %2580 = vmatprep.subr.bf16.mxu0 %v2104
    %2581 = vmatpush1.bf16.msra.mxu0 %v2103
    %2582 = vmatprep.subr.bf16.mxu0 %v2110
    %2583 = vmatpush1.bf16.msra.mxu0 %v2109
    %2584 = vmatprep.subr.bf16.mxu0 %v2116
    %2585 = vmatpush1.bf16.msra.mxu0 %v2115
    %2586 = vmatprep.subr.bf16.mxu0 %v2122
    %2587 = vmatpush1.bf16.msra.mxu0 %v2121
    %2588 = vmatprep.subr.bf16.mxu0 0
    %2589 = vmatpush1.bf16.msra.mxu0 0
    %2590 = vmatprep.subr.bf16.mxu0 0
    %2591 = vmatpush1.bf16.msra.mxu0 0
    %2592 = vmatprep.subr.bf16.mxu0 0
    %2593 = vmatpush1.bf16.msra.mxu0 0
    %2594 = vmatprep.subr.bf16.mxu0 0
    %2595 = vmatpush1.bf16.msra.mxu0 0
    %2596 = vmatprep.subr.bf16.mxu0 0
    %2597 = vmatpush1.bf16.msra.mxu0 0
    %2598 = vmatprep.subr.bf16.mxu0 0
    %2599 = vmatpush1.bf16.msra.mxu0 0
    %2600 = vmatprep.subr.bf16.mxu0 0
    %2601 = vmatpush1.bf16.msra.mxu0 0
    %2602 = vmatprep.subr.bf16.mxu0 0
    %2603 = vmatpush1.bf16.msra.mxu0 0
    %2604 = vmatprep.mubr.bf16.mxu0 0
    %2605 = vmatmul.mubr.bf16.gmra.mrb[0].mxu0 %v1396
    %v2606 = vpop.f32.mrb[0].mxu0
    %v2607 = vadd.f32 %v2546, %v2606
    %v2608 = vpop.f32.mrb[0].mxu0
    %v2609 = vadd.f32 %v2548, %v2608
    %v2610 = vpop.f32.mrb[0].mxu0
    %v2611 = vadd.f32 %v2550, %v2610
    %v2612 = vpop.f32.mrb[0].mxu0
    %v2613 = vadd.f32 %v2552, %v2612
    %2614 = vmatprep.mubr.bf16.mxu0 0
    %2615 = vmatmul.mubr.bf16.gmra.mrb[0].mxu0 %v1399
    %v2616 = vpop.f32.mrb[0].mxu0
    %v2617 = vadd.f32 %v2556, %v2616
    %v2618 = vpop.f32.mrb[0].mxu0
    %v2619 = vadd.f32 %v2558, %v2618
    %v2620 = vpop.f32.mrb[0].mxu0
    %v2621 = vadd.f32 %v2560, %v2620
    %v2622 = vpop.f32.mrb[0].mxu0
    %v2623 = vadd.f32 %v2562, %v2622
    %2624 = vmatprep.mubr.bf16.mxu0 0
    %2625 = vmatmul.mubr.bf16.gmra.mrb[0].mxu0 %v1402
    %v2626 = vpop.f32.mrb[0].mxu0
    %v2627 = vadd.f32 %v2566, %v2626
    %v2628 = vpop.f32.mrb[0].mxu0
    %v2629 = vadd.f32 %v2568, %v2628
    %v2630 = vpop.f32.mrb[0].mxu0
    %v2631 = vpop.f32.mrb[0].mxu0
    %2632 = vdwg.mxu0
    %v2642 = vrot.slane %v2487, 7
    %v2643 = vrot.slane %v2607, 7
    %v2644 = vrot.slane %v2609, 7
    %v2645 = vrot.slane %v2491, 7
    %v2646 = vsel %vm1195, %v2642, %v2645
    %v2647 = vrot.slane %v2611, 7
    %v2648 = vsel %vm1195, %v2643, %v2647
    %v2649 = vrot.slane %v2613, 7
    %v2650 = vsel %vm1195, %v2644, %v2649
    %v2651 = vrot.slane %v2497, 7
    %v2652 = vsel %vm1195, %v2645, %v2651
    %v2653 = vrot.slane %v2617, 7
    %v2654 = vsel %vm1195, %v2647, %v2653
    %v2655 = vrot.slane %v2619, 7
    %v2656 = vsel %vm1195, %v2649, %v2655
    %v2675 = vrot.slane %v2373, 7
    %v2676 = vrot.slane %v2375, 7
    %v2677 = vrot.slane %v2495, 7
    %v2678 = vrot.slane %v2377, 7
    %v2679 = vsel %vm1195, %v2675, %v2678
    %v2680 = vrot.slane %v2379, 7
    %v2681 = vsel %vm1195, %v2676, %v2680
    %v2682 = vrot.slane %v2499, 7
    %v2683 = vsel %vm1195, %v2677, %v2682
    %v2684 = vrot.slane %v2383, 7
    %v2685 = vsel %vm1195, %v2678, %v2684
    %v2686 = vrot.slane %v2385, 7
    %v2687 = vsel %vm1195, %v2680, %v2686
    %v2688 = vrot.slane %v2505, 7
    %v2689 = vsel %vm1195, %v2682, %v2688
    %v2705 = vrot.slane %v2497, 6
    %v2706 = vrot.slane %v2617, 6
    %v2707 = vrot.slane %v2619, 6
    %v2708 = vrot.slane %v2501, 6
    %v2709 = vsel %vm1268, %v2705, %v2708
    %v2710 = vrot.slane %v2621, 6
    %v2711 = vsel %vm1268, %v2706, %v2710
    %v2712 = vrot.slane %v2623, 6
    %v2713 = vsel %vm1268, %v2707, %v2712
    %v2714 = vrot.slane %v2507, 6
    %v2715 = vsel %vm1268, %v2708, %v2714
    %v2716 = vrot.slane %v2627, 6
    %v2717 = vsel %vm1268, %v2710, %v2716
    %v2718 = vrot.slane %v2629, 6
    %v2719 = vsel %vm1268, %v2712, %v2718
    %v2729 = vsel %vm1195, %v2373, %v2642
    %v2730 = vsel %vm1195, %v2375, %v2643
    %v2731 = vsel %vm1195, %v2495, %v2644
    %v2732 = vsel %vm1268, %v2652, %v2675
    %v2733 = vsel %vm1268, %v2654, %v2676
    %v2734 = vsel %vm1268, %v2656, %v2677
    %vm2735 = vcmask 1042432
    %v2736 = vsel %vm2735, %v2685, %v2705
    %v2737 = vsel %vm2735, %v2687, %v2706
    %v2738 = vsel %vm2735, %v2689, %v2707
    %v2739 = vld [vmem:[%s4] sm:$0x7]
    %v2741 = vlaneseq
    %v2742 = vshrl.u32 %v2741, 7
    %v2743 = vsub.s32 0, %v2742
    %v2744 = vrot.slane %v2739, %v2743
    %v2745 = vlaneseq
    %v2746 = vshrl.u32 %v2745, 7
    %v2747 = vsub.s32 1, %v2746
    %v2748 = vrot.slane %v2739, %v2747
    %v2749 = vlaneseq
    %v2750 = vshrl.u32 %v2749, 7
    %v2751 = vsub.s32 2, %v2750
    %v2752 = vrot.slane %v2739, %v2751
    %v2756 = vadd.f32 %v2363, %v2744
    %v2757 = vadd.f32 %v2365, %v2748
    %v2758 = vadd.f32 %v2485, %v2752
    %v2759 = vadd.f32 %v2367, %v2744
    %v2760 = vadd.f32 %v2369, %v2748
    %v2761 = vadd.f32 %v2489, %v2752
    %v2762 = vadd.f32 %v2729, %v2744
    %v2763 = vadd.f32 %v2730, %v2748
    %v2764 = vadd.f32 %v2731, %v2752
    %v2765 = vadd.f32 %v2646, %v2744
    %v2766 = vadd.f32 %v2648, %v2748
    %v2767 = vadd.f32 %v2650, %v2752
    %v2768 = vadd.f32 %v2732, %v2744
    %v2769 = vadd.f32 %v2733, %v2748
    %v2770 = vadd.f32 %v2734, %v2752
    %v2771 = vadd.f32 %v2679, %v2744
    %v2772 = vadd.f32 %v2681, %v2748
    %v2773 = vadd.f32 %v2683, %v2752
    %v2774 = vadd.f32 %v2736, %v2744
    %v2775 = vadd.f32 %v2737, %v2748
    %v2776 = vadd.f32 %v2738, %v2752
    %v2777 = vadd.f32 %v2709, %v2744
    %v2778 = vadd.f32 %v2711, %v2748
    %v2779 = vadd.f32 %v2713, %v2752
    %v2780 = vadd.f32 %v2715, %v2744
    %v2781 = vadd.f32 %v2717, %v2748
    %v2782 = vadd.f32 %v2719, %v2752
    %v2783 = vtanh.pop %v2756
    %v2784 = vtanh.pop %v2757
    %v2785 = vtanh.pop %v2758
    %v2786 = vtanh.pop %v2759
    %v2787 = vtanh.pop %v2760
    %v2788 = vtanh.pop %v2761
    %v2789 = vtanh.pop %v2762
    %v2790 = vtanh.pop %v2763
    %v2791 = vtanh.pop %v2764
    %v2792 = vtanh.pop %v2765
    %v2793 = vtanh.pop %v2766
    %v2794 = vtanh.pop %v2767
    %v2795 = vtanh.pop %v2768
    %v2796 = vtanh.pop %v2769
    %v2797 = vtanh.pop %v2770
    %v2798 = vtanh.pop %v2771
    %v2799 = vtanh.pop %v2772
    %v2800 = vtanh.pop %v2773
    %v2801 = vtanh.pop %v2774
    %v2802 = vtanh.pop %v2775
    %v2803 = vtanh.pop %v2776
    %v2804 = vtanh.pop %v2777
    %v2805 = vtanh.pop %v2778
    %v2806 = vtanh.pop %v2779
    %v2807 = vtanh.pop %v2780
    %v2808 = vtanh.pop %v2781
    %v2809 = vtanh.pop %v2782
    %v2810 = vpack.c.bf16 %v2786, %v2783
    %v2811 = vpack.c.bf16 %v2787, %v2784
    %v2812 = vpack.c.bf16 %v2788, %v2785
    %v2813 = vpack.c.bf16 %v2792, %v2789
    %v2814 = vpack.c.bf16 %v2793, %v2790
    %v2815 = vpack.c.bf16 %v2794, %v2791
    %v2816 = vpack.c.bf16 %v2798, %v2795
    %v2817 = vpack.c.bf16 %v2799, %v2796
    %v2818 = vpack.c.bf16 %v2800, %v2797
    %v2819 = vpack.c.bf16 %v2804, %v2801
    %v2820 = vpack.c.bf16 %v2805, %v2802
    %v2821 = vpack.c.bf16 %v2806, %v2803
    %v2822 = vpack.c.bf16 %v2807, %v2807
    %v2823 = vpack.c.bf16 %v2808, %v2808
    %v2824 = vpack.c.bf16 %v2809, %v2809
    %v2825 = vld [vmem:[#allocation6] sm:$0xff]
    %v2826 = vld [vmem:[#allocation6 + $0x8] sm:$0xff]
    %v2827 = vld [vmem:[#allocation6 + $0x10] sm:$0xff]
    %v2828 = vld [vmem:[#allocation6 + $0x18] sm:$0xff]
    %v2829 = vld [vmem:[#allocation6 + $0x20] sm:$0xff]
    %v2830 = vld [vmem:[#allocation6 + $0x28] sm:$0xff]
    %v2831 = vld [vmem:[#allocation6 + $0x30] sm:$0xff]
    %v2832 = vld [vmem:[#allocation6 + $0x38] sm:$0xff]
    %v2833 = vld [vmem:[#allocation6 + $0x40] sm:$0xff]
    %v2834 = vld [vmem:[#allocation6 + $0x48] sm:$0xff]
    %v2835 = vld [vmem:[#allocation6 + $0x50] sm:$0xff]
    %v2836 = vld [vmem:[#allocation6 + $0x58] sm:$0xff]
    %v2837 = vld [vmem:[#allocation6 + $0x60] sm:$0xff]
    %v2838 = vld [vmem:[#allocation6 + $0x68] sm:$0xff]
    %v2839 = vld [vmem:[#allocation6 + $0x70] sm:$0xff]
    %v2840 = vld [vmem:[#allocation6 + $0x78] sm:$0xff]
    %v2841 = vld [vmem:[#allocation6 + $0x80] sm:$0xff]
    %v2842 = vld [vmem:[#allocation6 + $0x88] sm:$0xff]
    %v2843 = vld [vmem:[#allocation6 + $0x90] sm:$0xff]
    %v2844 = vld [vmem:[#allocation6 + $0x98] sm:$0xff]
    %v2845 = vld [vmem:[#allocation6 + $0xa0] sm:$0xff]
    %v2846 = vld [vmem:[#allocation6 + $0xa8] sm:$0xff]
    %v2847 = vld [vmem:[#allocation6 + $0xb0] sm:$0xff]
    %v2848 = vld [vmem:[#allocation6 + $0xb8] sm:$0xff]
    %v2849 = vld [vmem:[#allocation6 + $0xc0] sm:$0xff]
    %v2850 = vld [vmem:[#allocation6 + $0xc8] sm:$0xff]
    %v2851 = vld [vmem:[#allocation6 + $0xd0] sm:$0xff]
    %v2852 = vld [vmem:[#allocation6 + $0xd8] sm:$0xff]
    %v2853 = vld [vmem:[#allocation6 + $0xe0] sm:$0xff]
    %v2854 = vld [vmem:[#allocation6 + $0xe8] sm:$0xff]
    %v2855 = vld [vmem:[#allocation6 + $0xf0] sm:$0xff]
    %v2856 = vld [vmem:[#allocation6 + $0xf8] sm:$0xff]
    %v2857 = vld [vmem:[#allocation6 + $0x100] sm:$0xff]
    %v2858 = vld [vmem:[#allocation6 + $0x108] sm:$0xff]
    %v2859 = vld [vmem:[#allocation6 + $0x110] sm:$0xff]
    %v2860 = vld [vmem:[#allocation6 + $0x118] sm:$0xff]
    %v2861 = vld [vmem:[#allocation6 + $0x120] sm:$0xff]
    %v2862 = vld [vmem:[#allocation6 + $0x128] sm:$0xff]
    %v2863 = vld [vmem:[#allocation6 + $0x130] sm:$0xff]
    %v2864 = vld [vmem:[#allocation6 + $0x138] sm:$0xff]
    %v2865 = vld [vmem:[#allocation6 + $0x140] sm:$0xff]
    %v2866 = vld [vmem:[#allocation6 + $0x148] sm:$0xff]
    %v2867 = vld [vmem:[#allocation6 + $0x150] sm:$0xff]
    %v2868 = vld [vmem:[#allocation6 + $0x158] sm:$0xff]
    %v2869 = vld [vmem:[#allocation6 + $0x160] sm:$0xff]
    %v2870 = vld [vmem:[#allocation6 + $0x168] sm:$0xff]
    %v2871 = vld [vmem:[#allocation6 + $0x170] sm:$0xff]
    %v2872 = vld [vmem:[#allocation6 + $0x178] sm:$0xff]
    %v2873 = vld [vmem:[#allocation6 + $0x180] sm:$0xff]
    %v2874 = vld [vmem:[#allocation6 + $0x188] sm:$0xff]
    %v2875 = vld [vmem:[#allocation6 + $0x190] sm:$0xff]
    %v2876 = vld [vmem:[#allocation6 + $0x198] sm:$0xff]
    %v2877 = vld [vmem:[#allocation6 + $0x1a0] sm:$0xff]
    %v2878 = vld [vmem:[#allocation6 + $0x1a8] sm:$0xff]
    %v2879 = vld [vmem:[#allocation6 + $0x1b0] sm:$0xff]
    %v2880 = vld [vmem:[#allocation6 + $0x1b8] sm:$0xff]
    %v2881 = vld [vmem:[#allocation6 + $0x1c0] sm:$0xff]
    %v2882 = vld [vmem:[#allocation6 + $0x1c8] sm:$0xff]
    %v2883 = vld [vmem:[#allocation6 + $0x1d0] sm:$0xff]
    %v2884 = vld [vmem:[#allocation6 + $0x1d8] sm:$0xff]
    %v2885 = vld [vmem:[#allocation6 + $0x1e0] sm:$0xff]
    %v2886 = vld [vmem:[#allocation6 + $0x1e8] sm:$0xff]
    %v2887 = vld [vmem:[#allocation6 + $0x1f0] sm:$0xff]
    %v2888 = vld [vmem:[#allocation6 + $0x1f8] sm:$0xff]
    %v2889 = vld [vmem:[#allocation6 + $0x200] sm:$0xff]
    %v2890 = vld [vmem:[#allocation6 + $0x208] sm:$0xff]
    %v2891 = vld [vmem:[#allocation6 + $0x210] sm:$0xff]
    %v2892 = vld [vmem:[#allocation6 + $0x218] sm:$0xff]
    %v2893 = vld [vmem:[#allocation6 + $0x220] sm:$0xff]
    %v2894 = vld [vmem:[#allocation6 + $0x228] sm:$0xff]
    %v2895 = vld [vmem:[#allocation6 + $0x230] sm:$0xff]
    %v2896 = vld [vmem:[#allocation6 + $0x238] sm:$0xff]
    %v2897 = vld [vmem:[#allocation6 + $0x240] sm:$0xff]
    %v2898 = vld [vmem:[#allocation6 + $0x248] sm:$0xff]
    %v2899 = vld [vmem:[#allocation6 + $0x250] sm:$0xff]
    %v2900 = vld [vmem:[#allocation6 + $0x258] sm:$0xff]
    %v2901 = vld [vmem:[#allocation6 + $0x260] sm:$0xff]
    %v2902 = vld [vmem:[#allocation6 + $0x268] sm:$0xff]
    %v2903 = vld [vmem:[#allocation6 + $0x270] sm:$0xff]
    %v2904 = vld [vmem:[#allocation6 + $0x278] sm:$0xff]
    %v2905 = vld [vmem:[#allocation6 + $0x280] sm:$0xff]
    %v2906 = vld [vmem:[#allocation6 + $0x288] sm:$0xff]
    %v2907 = vld [vmem:[#allocation6 + $0x290] sm:$0xff]
    %v2908 = vld [vmem:[#allocation6 + $0x298] sm:$0xff]
    %v2909 = vld [vmem:[#allocation6 + $0x2a0] sm:$0xff]
    %v2910 = vld [vmem:[#allocation6 + $0x2a8] sm:$0xff]
    %v2911 = vld [vmem:[#allocation6 + $0x2b0] sm:$0xff]
    %v2912 = vld [vmem:[#allocation6 + $0x2b8] sm:$0xff]
    %v2913 = vld [vmem:[#allocation6 + $0x2c0] sm:$0xff]
    %v2914 = vld [vmem:[#allocation6 + $0x2c8] sm:$0xff]
    %v2915 = vld [vmem:[#allocation6 + $0x2d0] sm:$0xff]
    %v2916 = vld [vmem:[#allocation6 + $0x2d8] sm:$0xff]
    %v2917 = vld [vmem:[#allocation6 + $0x2e0] sm:$0xff]
    %v2918 = vld [vmem:[#allocation6 + $0x2e8] sm:$0xff]
    %v2919 = vld [vmem:[#allocation6 + $0x2f0] sm:$0xff]
    %v2920 = vld [vmem:[#allocation6 + $0x2f8] sm:$0xff]
    %v2921 = vld [vmem:[#allocation6 + $0x300] sm:$0xff]
    %v2922 = vld [vmem:[#allocation6 + $0x308] sm:$0xff]
    %v2923 = vld [vmem:[#allocation6 + $0x310] sm:$0xff]
    %v2924 = vld [vmem:[#allocation6 + $0x318] sm:$0xff]
    %v2925 = vld [vmem:[#allocation6 + $0x320] sm:$0xff]
    %v2926 = vld [vmem:[#allocation6 + $0x328] sm:$0xff]
    %v2927 = vld [vmem:[#allocation6 + $0x330] sm:$0xff]
    %v2928 = vld [vmem:[#allocation6 + $0x338] sm:$0xff]
    %v2929 = vld [vmem:[#allocation6 + $0x340] sm:$0xff]
    %v2930 = vld [vmem:[#allocation6 + $0x348] sm:$0xff]
    %v2931 = vld [vmem:[#allocation6 + $0x350] sm:$0xff]
    %v2932 = vld [vmem:[#allocation6 + $0x358] sm:$0xff]
    %v2933 = vld [vmem:[#allocation6 + $0x360] sm:$0xff]
    %v2934 = vld [vmem:[#allocation6 + $0x368] sm:$0xff]
    %v2935 = vld [vmem:[#allocation6 + $0x370] sm:$0xff]
    %v2936 = vld [vmem:[#allocation6 + $0x378] sm:$0xff]
    %v2937 = vld [vmem:[#allocation6 + $0x380] sm:$0xff]
    %v2938 = vld [vmem:[#allocation6 + $0x388] sm:$0xff]
    %v2939 = vld [vmem:[#allocation6 + $0x390] sm:$0xff]
    %v2940 = vld [vmem:[#allocation6 + $0x398] sm:$0xff]
    %v2941 = vld [vmem:[#allocation6 + $0x3a0] sm:$0xff]
    %v2942 = vld [vmem:[#allocation6 + $0x3a8] sm:$0xff]
    %v2943 = vld [vmem:[#allocation6 + $0x3b0] sm:$0xff]
    %v2944 = vld [vmem:[#allocation6 + $0x3b8] sm:$0xff]
    %v2945 = vld [vmem:[#allocation6 + $0x3c0] sm:$0xff]
    %v2946 = vld [vmem:[#allocation6 + $0x3c8] sm:$0xff]
    %v2947 = vld [vmem:[#allocation6 + $0x3d0] sm:$0xff]
    %v2948 = vld [vmem:[#allocation6 + $0x3d8] sm:$0xff]
    %v2949 = vld [vmem:[#allocation6 + $0x3e0] sm:$0xff]
    %v2950 = vld [vmem:[#allocation6 + $0x3e8] sm:$0xff]
    %v2951 = vld [vmem:[#allocation6 + $0x3f0] sm:$0xff]
    %v2952 = vld [vmem:[#allocation6 + $0x3f8] sm:$0xff]
    %v2953 = vld [vmem:[#allocation6 + $0x400] sm:$0xff]
    %v2954 = vld [vmem:[#allocation6 + $0x408] sm:$0xff]
    %v2955 = vld [vmem:[#allocation6 + $0x410] sm:$0xff]
    %v2956 = vld [vmem:[#allocation6 + $0x418] sm:$0xff]
    %v2957 = vld [vmem:[#allocation6 + $0x420] sm:$0xff]
    %v2958 = vld [vmem:[#allocation6 + $0x428] sm:$0xff]
    %v2959 = vld [vmem:[#allocation6 + $0x430] sm:$0xff]
    %v2960 = vld [vmem:[#allocation6 + $0x438] sm:$0xff]
    %v2961 = vld [vmem:[#allocation6 + $0x440] sm:$0xff]
    %v2962 = vld [vmem:[#allocation6 + $0x448] sm:$0xff]
    %v2963 = vld [vmem:[#allocation6 + $0x450] sm:$0xff]
    %v2964 = vld [vmem:[#allocation6 + $0x458] sm:$0xff]
    %v2965 = vld [vmem:[#allocation6 + $0x460] sm:$0xff]
    %v2966 = vld [vmem:[#allocation6 + $0x468] sm:$0xff]
    %v2967 = vld [vmem:[#allocation6 + $0x470] sm:$0xff]
    %v2968 = vld [vmem:[#allocation6 + $0x478] sm:$0xff]
    %v3113 = vunpack.c.l.b16 %v2825
    %v3114 = vunpack.c.h.b16 %v2825
    %v3115 = vunpack.c.l.b16 %v2826
    %v3116 = vunpack.c.h.b16 %v2826
    %v3117 = vunpack.c.l.b16 %v2827
    %v3118 = vunpack.c.h.b16 %v2827
    %v3119 = vunpack.c.l.b16 %v2828
    %v3120 = vunpack.c.h.b16 %v2828
    %v3121 = vunpack.c.l.b16 %v2829
    %v3122 = vunpack.c.h.b16 %v2829
    %v3123 = vunpack.c.l.b16 %v2830
    %v3124 = vunpack.c.h.b16 %v2830
    %v3125 = vunpack.c.l.b16 %v2831
    %v3126 = vunpack.c.h.b16 %v2831
    %v3127 = vunpack.c.l.b16 %v2832
    %v3128 = vunpack.c.h.b16 %v2832
    %v3129 = vunpack.c.l.b16 %v2833
    %v3130 = vunpack.c.h.b16 %v2833
    %v3131 = vunpack.c.l.b16 %v2834
    %v3132 = vunpack.c.h.b16 %v2834
    %v3133 = vunpack.c.l.b16 %v2835
    %v3134 = vunpack.c.h.b16 %v2835
    %v3135 = vunpack.c.l.b16 %v2836
    %v3136 = vunpack.c.h.b16 %v2836
    %v3137 = vunpack.c.l.b16 %v2837
    %v3138 = vunpack.c.h.b16 %v2837
    %v3139 = vunpack.c.l.b16 %v2838
    %v3140 = vunpack.c.h.b16 %v2838
    %v3141 = vunpack.c.l.b16 %v2839
    %v3142 = vunpack.c.h.b16 %v2839
    %v3143 = vunpack.c.l.b16 %v2840
    %v3144 = vunpack.c.h.b16 %v2840
    %v3145 = vunpack.c.l.b16 %v2841
    %v3146 = vunpack.c.h.b16 %v2841
    %v3147 = vunpack.c.l.b16 %v2842
    %v3148 = vunpack.c.h.b16 %v2842
    %v3149 = vunpack.c.l.b16 %v2843
    %v3150 = vunpack.c.h.b16 %v2843
    %v3151 = vunpack.c.l.b16 %v2844
    %v3152 = vunpack.c.h.b16 %v2844
    %v3153 = vunpack.c.l.b16 %v2845
    %v3154 = vunpack.c.h.b16 %v2845
    %v3155 = vunpack.c.l.b16 %v2846
    %v3156 = vunpack.c.h.b16 %v2846
    %v3157 = vunpack.c.l.b16 %v2847
    %v3158 = vunpack.c.h.b16 %v2847
    %v3159 = vunpack.c.l.b16 %v2848
    %v3160 = vunpack.c.h.b16 %v2848
    %v3161 = vunpack.c.l.b16 %v2849
    %v3162 = vunpack.c.h.b16 %v2849
    %v3163 = vunpack.c.l.b16 %v2850
    %v3164 = vunpack.c.h.b16 %v2850
    %v3165 = vunpack.c.l.b16 %v2851
    %v3166 = vunpack.c.h.b16 %v2851
    %v3167 = vunpack.c.l.b16 %v2852
    %v3168 = vunpack.c.h.b16 %v2852
    %v3169 = vunpack.c.l.b16 %v2853
    %v3170 = vunpack.c.h.b16 %v2853
    %v3171 = vunpack.c.l.b16 %v2854
    %v3172 = vunpack.c.h.b16 %v2854
    %v3173 = vunpack.c.l.b16 %v2855
    %v3174 = vunpack.c.h.b16 %v2855
    %v3175 = vunpack.c.l.b16 %v2856
    %v3176 = vunpack.c.h.b16 %v2856
    %v3177 = vunpack.c.l.b16 %v2857
    %v3178 = vunpack.c.h.b16 %v2857
    %v3179 = vunpack.c.l.b16 %v2858
    %v3180 = vunpack.c.h.b16 %v2858
    %v3181 = vunpack.c.l.b16 %v2859
    %v3182 = vunpack.c.h.b16 %v2859
    %v3183 = vunpack.c.l.b16 %v2860
    %v3184 = vunpack.c.h.b16 %v2860
    %v3185 = vunpack.c.l.b16 %v2861
    %v3186 = vunpack.c.h.b16 %v2861
    %v3187 = vunpack.c.l.b16 %v2862
    %v3188 = vunpack.c.h.b16 %v2862
    %v3189 = vunpack.c.l.b16 %v2863
    %v3190 = vunpack.c.h.b16 %v2863
    %v3191 = vunpack.c.l.b16 %v2864
    %v3192 = vunpack.c.h.b16 %v2864
    %v3193 = vunpack.c.l.b16 %v2865
    %v3194 = vunpack.c.h.b16 %v2865
    %v3195 = vunpack.c.l.b16 %v2866
    %v3196 = vunpack.c.h.b16 %v2866
    %v3197 = vunpack.c.l.b16 %v2867
    %v3198 = vunpack.c.h.b16 %v2867
    %v3199 = vunpack.c.l.b16 %v2868
    %v3200 = vunpack.c.h.b16 %v2868
    %v3201 = vunpack.c.l.b16 %v2869
    %v3202 = vunpack.c.h.b16 %v2869
    %v3203 = vunpack.c.l.b16 %v2870
    %v3204 = vunpack.c.h.b16 %v2870
    %v3205 = vunpack.c.l.b16 %v2871
    %v3206 = vunpack.c.h.b16 %v2871
    %v3207 = vunpack.c.l.b16 %v2872
    %v3208 = vunpack.c.h.b16 %v2872
    %v3209 = vunpack.c.l.b16 %v2873
    %v3210 = vunpack.c.h.b16 %v2873
    %v3211 = vunpack.c.l.b16 %v2874
    %v3212 = vunpack.c.h.b16 %v2874
    %v3213 = vunpack.c.l.b16 %v2875
    %v3214 = vunpack.c.h.b16 %v2875
    %v3215 = vunpack.c.l.b16 %v2876
    %v3216 = vunpack.c.h.b16 %v2876
    %v3217 = vunpack.c.l.b16 %v2877
    %v3218 = vunpack.c.h.b16 %v2877
    %v3219 = vunpack.c.l.b16 %v2878
    %v3220 = vunpack.c.h.b16 %v2878
    %v3221 = vunpack.c.l.b16 %v2879
    %v3222 = vunpack.c.h.b16 %v2879
    %v3223 = vunpack.c.l.b16 %v2880
    %v3224 = vunpack.c.h.b16 %v2880
    %v3225 = vunpack.c.l.b16 %v2881
    %v3226 = vunpack.c.h.b16 %v2881
    %v3227 = vunpack.c.l.b16 %v2882
    %v3228 = vunpack.c.h.b16 %v2882
    %v3229 = vunpack.c.l.b16 %v2883
    %v3230 = vunpack.c.h.b16 %v2883
    %v3231 = vunpack.c.l.b16 %v2884
    %v3232 = vunpack.c.h.b16 %v2884
    %v3233 = vunpack.c.l.b16 %v2885
    %v3234 = vunpack.c.h.b16 %v2885
    %v3235 = vunpack.c.l.b16 %v2886
    %v3236 = vunpack.c.h.b16 %v2886
    %v3237 = vunpack.c.l.b16 %v2887
    %v3238 = vunpack.c.h.b16 %v2887
    %v3239 = vunpack.c.l.b16 %v2888
    %v3240 = vunpack.c.h.b16 %v2888
    %v3241 = vunpack.c.l.b16 %v2889
    %v3242 = vunpack.c.h.b16 %v2889
    %v3243 = vunpack.c.l.b16 %v2890
    %v3244 = vunpack.c.h.b16 %v2890
    %v3245 = vunpack.c.l.b16 %v2891
    %v3246 = vunpack.c.h.b16 %v2891
    %v3247 = vunpack.c.l.b16 %v2892
    %v3248 = vunpack.c.h.b16 %v2892
    %v3249 = vunpack.c.l.b16 %v2893
    %v3250 = vunpack.c.h.b16 %v2893
    %v3251 = vunpack.c.l.b16 %v2894
    %v3252 = vunpack.c.h.b16 %v2894
    %v3253 = vunpack.c.l.b16 %v2895
    %v3254 = vunpack.c.h.b16 %v2895
    %v3255 = vunpack.c.l.b16 %v2896
    %v3256 = vunpack.c.h.b16 %v2896
    %v3257 = vunpack.c.l.b16 %v2897
    %v3258 = vunpack.c.h.b16 %v2897
    %v3259 = vunpack.c.l.b16 %v2898
    %v3260 = vunpack.c.h.b16 %v2898
    %v3261 = vunpack.c.l.b16 %v2899
    %v3262 = vunpack.c.h.b16 %v2899
    %v3263 = vunpack.c.l.b16 %v2900
    %v3264 = vunpack.c.h.b16 %v2900
    %v3265 = vunpack.c.l.b16 %v2901
    %v3266 = vunpack.c.h.b16 %v2901
    %v3267 = vunpack.c.l.b16 %v2902
    %v3268 = vunpack.c.h.b16 %v2902
    %v3269 = vunpack.c.l.b16 %v2903
    %v3270 = vunpack.c.h.b16 %v2903
    %v3271 = vunpack.c.l.b16 %v2904
    %v3272 = vunpack.c.h.b16 %v2904
    %v3273 = vunpack.c.l.b16 %v2905
    %v3274 = vunpack.c.h.b16 %v2905
    %v3275 = vunpack.c.l.b16 %v2906
    %v3276 = vunpack.c.h.b16 %v2906
    %v3277 = vunpack.c.l.b16 %v2907
    %v3278 = vunpack.c.h.b16 %v2907
    %v3279 = vunpack.c.l.b16 %v2908
    %v3280 = vunpack.c.h.b16 %v2908
    %v3281 = vunpack.c.l.b16 %v2909
    %v3282 = vunpack.c.h.b16 %v2909
    %v3283 = vunpack.c.l.b16 %v2910
    %v3284 = vunpack.c.h.b16 %v2910
    %v3285 = vunpack.c.l.b16 %v2911
    %v3286 = vunpack.c.h.b16 %v2911
    %v3287 = vunpack.c.l.b16 %v2912
    %v3288 = vunpack.c.h.b16 %v2912
    %v3289 = vunpack.c.l.b16 %v2913
    %v3290 = vunpack.c.h.b16 %v2913
    %v3291 = vunpack.c.l.b16 %v2914
    %v3292 = vunpack.c.h.b16 %v2914
    %v3293 = vunpack.c.l.b16 %v2915
    %v3294 = vunpack.c.h.b16 %v2915
    %v3295 = vunpack.c.l.b16 %v2916
    %v3296 = vunpack.c.h.b16 %v2916
    %v3297 = vunpack.c.l.b16 %v2917
    %v3298 = vunpack.c.h.b16 %v2917
    %v3299 = vunpack.c.l.b16 %v2918
    %v3300 = vunpack.c.h.b16 %v2918
    %v3301 = vunpack.c.l.b16 %v2919
    %v3302 = vunpack.c.h.b16 %v2919
    %v3303 = vunpack.c.l.b16 %v2920
    %v3304 = vunpack.c.h.b16 %v2920
    %v3305 = vunpack.c.l.b16 %v2921
    %v3306 = vunpack.c.h.b16 %v2921
    %v3307 = vunpack.c.l.b16 %v2922
    %v3308 = vunpack.c.h.b16 %v2922
    %v3309 = vunpack.c.l.b16 %v2923
    %v3310 = vunpack.c.h.b16 %v2923
    %v3311 = vunpack.c.l.b16 %v2924
    %v3312 = vunpack.c.h.b16 %v2924
    %v3313 = vunpack.c.l.b16 %v2925
    %v3314 = vunpack.c.h.b16 %v2925
    %v3315 = vunpack.c.l.b16 %v2926
    %v3316 = vunpack.c.h.b16 %v2926
    %v3317 = vunpack.c.l.b16 %v2927
    %v3318 = vunpack.c.h.b16 %v2927
    %v3319 = vunpack.c.l.b16 %v2928
    %v3320 = vunpack.c.h.b16 %v2928
    %v3321 = vunpack.c.l.b16 %v2929
    %v3322 = vunpack.c.h.b16 %v2929
    %v3323 = vunpack.c.l.b16 %v2930
    %v3324 = vunpack.c.h.b16 %v2930
    %v3325 = vunpack.c.l.b16 %v2931
    %v3326 = vunpack.c.h.b16 %v2931
    %v3327 = vunpack.c.l.b16 %v2932
    %v3328 = vunpack.c.h.b16 %v2932
    %v3329 = vunpack.c.l.b16 %v2933
    %v3330 = vunpack.c.h.b16 %v2933
    %v3331 = vunpack.c.l.b16 %v2934
    %v3332 = vunpack.c.h.b16 %v2934
    %v3333 = vunpack.c.l.b16 %v2935
    %v3334 = vunpack.c.h.b16 %v2935
    %v3335 = vunpack.c.l.b16 %v2936
    %v3336 = vunpack.c.h.b16 %v2936
    %v3337 = vunpack.c.l.b16 %v2937
    %v3338 = vunpack.c.h.b16 %v2937
    %v3339 = vunpack.c.l.b16 %v2938
    %v3340 = vunpack.c.h.b16 %v2938
    %v3341 = vunpack.c.l.b16 %v2939
    %v3342 = vunpack.c.h.b16 %v2939
    %v3343 = vunpack.c.l.b16 %v2940
    %v3344 = vunpack.c.h.b16 %v2940
    %v3345 = vunpack.c.l.b16 %v2941
    %v3346 = vunpack.c.h.b16 %v2941
    %v3347 = vunpack.c.l.b16 %v2942
    %v3348 = vunpack.c.h.b16 %v2942
    %v3349 = vunpack.c.l.b16 %v2943
    %v3350 = vunpack.c.h.b16 %v2943
    %v3351 = vunpack.c.l.b16 %v2944
    %v3352 = vunpack.c.h.b16 %v2944
    %v3353 = vunpack.c.l.b16 %v2945
    %v3354 = vunpack.c.h.b16 %v2945
    %v3355 = vunpack.c.l.b16 %v2946
    %v3356 = vunpack.c.h.b16 %v2946
    %v3357 = vunpack.c.l.b16 %v2947
    %v3358 = vunpack.c.h.b16 %v2947
    %v3359 = vunpack.c.l.b16 %v2948
    %v3360 = vunpack.c.h.b16 %v2948
    %v3361 = vunpack.c.l.b16 %v2949
    %v3362 = vunpack.c.h.b16 %v2949
    %v3363 = vunpack.c.l.b16 %v2950
    %v3364 = vunpack.c.h.b16 %v2950
    %v3365 = vunpack.c.l.b16 %v2951
    %v3366 = vunpack.c.h.b16 %v2951
    %v3367 = vunpack.c.l.b16 %v2952
    %v3368 = vunpack.c.h.b16 %v2952
    %v3369 = vunpack.c.l.b16 %v2953
    %v3370 = vunpack.c.h.b16 %v2953
    %v3371 = vunpack.c.l.b16 %v2954
    %v3372 = vunpack.c.h.b16 %v2954
    %v3373 = vunpack.c.l.b16 %v2955
    %v3374 = vunpack.c.h.b16 %v2955
    %v3375 = vunpack.c.l.b16 %v2956
    %v3376 = vunpack.c.h.b16 %v2956
    %v3377 = vunpack.c.l.b16 %v2957
    %v3378 = vunpack.c.h.b16 %v2957
    %v3379 = vunpack.c.l.b16 %v2958
    %v3380 = vunpack.c.h.b16 %v2958
    %v3381 = vunpack.c.l.b16 %v2959
    %v3382 = vunpack.c.h.b16 %v2959
    %v3383 = vunpack.c.l.b16 %v2960
    %v3384 = vunpack.c.h.b16 %v2960
    %v3385 = vunpack.c.l.b16 %v2961
    %v3386 = vunpack.c.h.b16 %v2961
    %v3387 = vunpack.c.l.b16 %v2962
    %v3388 = vunpack.c.h.b16 %v2962
    %v3389 = vunpack.c.l.b16 %v2963
    %v3390 = vunpack.c.h.b16 %v2963
    %v3391 = vunpack.c.l.b16 %v2964
    %v3392 = vunpack.c.h.b16 %v2964
    %v3393 = vunpack.c.l.b16 %v2965
    %v3394 = vunpack.c.h.b16 %v2965
    %v3395 = vunpack.c.l.b16 %v2966
    %v3396 = vunpack.c.h.b16 %v2966
    %v3397 = vunpack.c.l.b16 %v2967
    %v3398 = vunpack.c.h.b16 %v2967
    %v3399 = vunpack.c.l.b16 %v2968
    %v3400 = vunpack.c.h.b16 %v2968
    %v3401 = vpack.c.b16 %v3119, %v3113
    %v3402 = vpack.c.b16 %v3120, %v3114
    %v3403 = vpack.c.b16 %v3121, %v3115
    %v3404 = vpack.c.b16 %v3122, %v3116
    %v3405 = vpack.c.b16 %v3123, %v3117
    %v3406 = vpack.c.b16 %v3124, %v3118
    %v3407 = vpack.c.b16 %v3131, %v3125
    %v3408 = vpack.c.b16 %v3132, %v3126
    %v3409 = vpack.c.b16 %v3133, %v3127
    %v3410 = vpack.c.b16 %v3134, %v3128
    %v3411 = vpack.c.b16 %v3135, %v3129
    %v3412 = vpack.c.b16 %v3136, %v3130
    %v3413 = vpack.c.b16 %v3143, %v3137
    %v3414 = vpack.c.b16 %v3144, %v3138
    %v3415 = vpack.c.b16 %v3145, %v3139
    %v3416 = vpack.c.b16 %v3146, %v3140
    %v3417 = vpack.c.b16 %v3147, %v3141
    %v3418 = vpack.c.b16 %v3148, %v3142
    %v3419 = vpack.c.b16 %v3155, %v3149
    %v3420 = vpack.c.b16 %v3156, %v3150
    %v3421 = vpack.c.b16 %v3157, %v3151
    %v3422 = vpack.c.b16 %v3158, %v3152
    %v3423 = vpack.c.b16 %v3159, %v3153
    %v3424 = vpack.c.b16 %v3160, %v3154
    %v3425 = vpack.c.b16 %v3167, %v3161
    %v3426 = vpack.c.b16 %v3168, %v3162
    %v3427 = vpack.c.b16 %v3169, %v3163
    %v3428 = vpack.c.b16 %v3170, %v3164
    %v3429 = vpack.c.b16 %v3171, %v3165
    %v3430 = vpack.c.b16 %v3172, %v3166
    %v3431 = vpack.c.b16 %v3179, %v3173
    %v3432 = vpack.c.b16 %v3180, %v3174
    %v3433 = vpack.c.b16 %v3181, %v3175
    %v3434 = vpack.c.b16 %v3182, %v3176
    %v3435 = vpack.c.b16 %v3183, %v3177
    %v3436 = vpack.c.b16 %v3184, %v3178
    %v3437 = vpack.c.b16 %v3191, %v3185
    %v3438 = vpack.c.b16 %v3192, %v3186
    %v3439 = vpack.c.b16 %v3193, %v3187
    %v3440 = vpack.c.b16 %v3194, %v3188
    %v3441 = vpack.c.b16 %v3195, %v3189
    %v3442 = vpack.c.b16 %v3196, %v3190
    %v3443 = vpack.c.b16 %v3203, %v3197
    %v3444 = vpack.c.b16 %v3204, %v3198
    %v3445 = vpack.c.b16 %v3205, %v3199
    %v3446 = vpack.c.b16 %v3206, %v3200
    %v3447 = vpack.c.b16 %v3207, %v3201
    %v3448 = vpack.c.b16 %v3208, %v3202
    %v3449 = vpack.c.b16 %v3215, %v3209
    %v3450 = vpack.c.b16 %v3216, %v3210
    %v3451 = vpack.c.b16 %v3217, %v3211
    %v3452 = vpack.c.b16 %v3218, %v3212
    %v3453 = vpack.c.b16 %v3219, %v3213
    %v3454 = vpack.c.b16 %v3220, %v3214
    %v3455 = vpack.c.b16 %v3227, %v3221
    %v3456 = vpack.c.b16 %v3228, %v3222
    %v3457 = vpack.c.b16 %v3229, %v3223
    %v3458 = vpack.c.b16 %v3230, %v3224
    %v3459 = vpack.c.b16 %v3231, %v3225
    %v3460 = vpack.c.b16 %v3232, %v3226
    %v3461 = vpack.c.b16 %v3239, %v3233
    %v3462 = vpack.c.b16 %v3240, %v3234
    %v3463 = vpack.c.b16 %v3241, %v3235
    %v3464 = vpack.c.b16 %v3242, %v3236
    %v3465 = vpack.c.b16 %v3243, %v3237
    %v3466 = vpack.c.b16 %v3244, %v3238
    %v3467 = vpack.c.b16 %v3251, %v3245
    %v3468 = vpack.c.b16 %v3252, %v3246
    %v3469 = vpack.c.b16 %v3253, %v3247
    %v3470 = vpack.c.b16 %v3254, %v3248
    %v3471 = vpack.c.b16 %v3255, %v3249
    %v3472 = vpack.c.b16 %v3256, %v3250
    %v3473 = vpack.c.b16 %v3263, %v3257
    %v3474 = vpack.c.b16 %v3264, %v3258
    %v3475 = vpack.c.b16 %v3265, %v3259
    %v3476 = vpack.c.b16 %v3266, %v3260
    %v3477 = vpack.c.b16 %v3267, %v3261
    %v3478 = vpack.c.b16 %v3268, %v3262
    %v3479 = vpack.c.b16 %v3275, %v3269
    %v3480 = vpack.c.b16 %v3276, %v3270
    %v3481 = vpack.c.b16 %v3277, %v3271
    %v3482 = vpack.c.b16 %v3278, %v3272
    %v3483 = vpack.c.b16 %v3279, %v3273
    %v3484 = vpack.c.b16 %v3280, %v3274
    %v3485 = vpack.c.b16 %v3287, %v3281
    %v3486 = vpack.c.b16 %v3288, %v3282
    %v3487 = vpack.c.b16 %v3289, %v3283
    %v3488 = vpack.c.b16 %v3290, %v3284
    %v3489 = vpack.c.b16 %v3291, %v3285
    %v3490 = vpack.c.b16 %v3292, %v3286
    %v3491 = vpack.c.b16 %v3299, %v3293
    %v3492 = vpack.c.b16 %v3300, %v3294
    %v3493 = vpack.c.b16 %v3301, %v3295
    %v3494 = vpack.c.b16 %v3302, %v3296
    %v3495 = vpack.c.b16 %v3303, %v3297
    %v3496 = vpack.c.b16 %v3304, %v3298
    %v3497 = vpack.c.b16 %v3311, %v3305
    %v3498 = vpack.c.b16 %v3312, %v3306
    %v3499 = vpack.c.b16 %v3313, %v3307
    %v3500 = vpack.c.b16 %v3314, %v3308
    %v3501 = vpack.c.b16 %v3315, %v3309
    %v3502 = vpack.c.b16 %v3316, %v3310
    %v3503 = vpack.c.b16 %v3323, %v3317
    %v3504 = vpack.c.b16 %v3324, %v3318
    %v3505 = vpack.c.b16 %v3325, %v3319
    %v3506 = vpack.c.b16 %v3326, %v3320
    %v3507 = vpack.c.b16 %v3327, %v3321
    %v3508 = vpack.c.b16 %v3328, %v3322
    %v3509 = vpack.c.b16 %v3335, %v3329
    %v3510 = vpack.c.b16 %v3336, %v3330
    %v3511 = vpack.c.b16 %v3337, %v3331
    %v3512 = vpack.c.b16 %v3338, %v3332
    %v3513 = vpack.c.b16 %v3339, %v3333
    %v3514 = vpack.c.b16 %v3340, %v3334
    %v3515 = vpack.c.b16 %v3347, %v3341
    %v3516 = vpack.c.b16 %v3348, %v3342
    %v3517 = vpack.c.b16 %v3349, %v3343
    %v3518 = vpack.c.b16 %v3350, %v3344
    %v3519 = vpack.c.b16 %v3351, %v3345
    %v3520 = vpack.c.b16 %v3352, %v3346
    %v3521 = vpack.c.b16 %v3359, %v3353
    %v3522 = vpack.c.b16 %v3360, %v3354
    %v3523 = vpack.c.b16 %v3361, %v3355
    %v3524 = vpack.c.b16 %v3362, %v3356
    %v3525 = vpack.c.b16 %v3363, %v3357
    %v3526 = vpack.c.b16 %v3364, %v3358
    %v3527 = vpack.c.b16 %v3371, %v3365
    %v3528 = vpack.c.b16 %v3372, %v3366
    %v3529 = vpack.c.b16 %v3373, %v3367
    %v3530 = vpack.c.b16 %v3374, %v3368
    %v3531 = vpack.c.b16 %v3375, %v3369
    %v3532 = vpack.c.b16 %v3376, %v3370
    %v3533 = vpack.c.b16 %v3383, %v3377
    %v3534 = vpack.c.b16 %v3384, %v3378
    %v3535 = vpack.c.b16 %v3385, %v3379
    %v3536 = vpack.c.b16 %v3386, %v3380
    %v3537 = vpack.c.b16 %v3387, %v3381
    %v3538 = vpack.c.b16 %v3388, %v3382
    %v3539 = vpack.c.b16 %v3395, %v3389
    %v3540 = vpack.c.b16 %v3396, %v3390
    %v3541 = vpack.c.b16 %v3397, %v3391
    %v3542 = vpack.c.b16 %v3398, %v3392
    %v3543 = vpack.c.b16 %v3399, %v3393
    %v3544 = vpack.c.b16 %v3400, %v3394
    %3689 = vmatprep.subr.bf16.mxu0 %v3402
    %3690 = vmatpush1.bf16.msra.mxu0 %v3401
    %3691 = vmatprep.subr.bf16.mxu0 %v3408
    %3692 = vmatpush1.bf16.msra.mxu0 %v3407
    %3693 = vmatprep.subr.bf16.mxu0 %v3414
    %3694 = vmatpush1.bf16.msra.mxu0 %v3413
    %3695 = vmatprep.subr.bf16.mxu0 %v3420
    %3696 = vmatpush1.bf16.msra.mxu0 %v3419
    %3697 = vmatprep.subr.bf16.mxu0 %v3426
    %3698 = vmatpush1.bf16.msra.mxu0 %v3425
    %3699 = vmatprep.subr.bf16.mxu0 %v3432
    %3700 = vmatpush1.bf16.msra.mxu0 %v3431
    %3701 = vmatprep.subr.bf16.mxu0 %v3438
    %3702 = vmatpush1.bf16.msra.mxu0 %v3437
    %3703 = vmatprep.subr.bf16.mxu0 %v3444
    %3704 = vmatpush1.bf16.msra.mxu0 %v3443
    %3705 = vmatprep.subr.bf16.mxu0 %v3450
    %3706 = vmatpush1.bf16.msra.mxu0 %v3449
    %3707 = vmatprep.subr.bf16.mxu0 %v3456
    %3708 = vmatpush1.bf16.msra.mxu0 %v3455
    %3709 = vmatprep.subr.bf16.mxu0 %v3462
    %3710 = vmatpush1.bf16.msra.mxu0 %v3461
    %3711 = vmatprep.subr.bf16.mxu0 %v3468
    %3712 = vmatpush1.bf16.msra.mxu0 %v3467
    %3713 = vmatprep.subr.bf16.mxu0 %v3474
    %3714 = vmatpush1.bf16.msra.mxu0 %v3473
    %3715 = vmatprep.subr.bf16.mxu0 %v3480
    %3716 = vmatpush1.bf16.msra.mxu0 %v3479
    %3717 = vmatprep.subr.bf16.mxu0 %v3486
    %3718 = vmatpush1.bf16.msra.mxu0 %v3485
    %3719 = vmatprep.subr.bf16.mxu0 %v3492
    %3720 = vmatpush1.bf16.msra.mxu0 %v3491
    %3721 = vmatprep.mubr.bf16.mxu0 %v2811
    %3722 = vmatmul.mubr.bf16.gmra.mrb[0].mxu0 %v2810
    %v3723 = vpop.f32.mrb[0].mxu0
    %v3724 = vadd.f32 0.0, %v3723
    %v3725 = vpop.f32.mrb[0].mxu0
    %v3726 = vadd.f32 0.0, %v3725
    %v3727 = vpop.f32.mrb[0].mxu0
    %v3728 = vadd.f32 0.0, %v3727
    %v3729 = vpop.f32.mrb[0].mxu0
    %v3730 = vadd.f32 0.0, %v3729
    %3731 = vmatprep.mubr.bf16.mxu0 %v2814
    %3732 = vmatmul.mubr.bf16.gmra.mrb[0].mxu0 %v2813
    %v3733 = vpop.f32.mrb[0].mxu0
    %v3734 = vadd.f32 0.0, %v3733
    %v3735 = vpop.f32.mrb[0].mxu0
    %v3736 = vadd.f32 0.0, %v3735
    %v3737 = vpop.f32.mrb[0].mxu0
    %v3738 = vadd.f32 0.0, %v3737
    %v3739 = vpop.f32.mrb[0].mxu0
    %v3740 = vadd.f32 0.0, %v3739
    %3741 = vmatprep.mubr.bf16.mxu0 %v2817
    %3742 = vmatmul.mubr.bf16.gmra.mrb[0].mxu0 %v2816
    %v3743 = vpop.f32.mrb[0].mxu0
    %v3744 = vadd.f32 0.0, %v3743
    %v3745 = vpop.f32.mrb[0].mxu0
    %v3746 = vadd.f32 0.0, %v3745
    %v3747 = vpop.f32.mrb[0].mxu0
    %v3748 = vadd.f32 0.0, %v3747
    %v3749 = vpop.f32.mrb[0].mxu0
    %v3750 = vadd.f32 0.0, %v3749
    %3751 = vmatprep.mubr.bf16.mxu0 %v2820
    %3752 = vmatmul.mubr.bf16.gmra.mrb[0].mxu0 %v2819
    %v3753 = vpop.f32.mrb[0].mxu0
    %v3754 = vadd.f32 0.0, %v3753
    %v3755 = vpop.f32.mrb[0].mxu0
    %v3756 = vadd.f32 0.0, %v3755
    %v3757 = vpop.f32.mrb[0].mxu0
    %v3758 = vadd.f32 0.0, %v3757
    %v3759 = vpop.f32.mrb[0].mxu0
    %v3760 = vadd.f32 0.0, %v3759
    %3761 = vmatprep.mubr.bf16.mxu0 %v2823
    %3762 = vmatmul.mubr.bf16.gmra.mrb[0].mxu0 %v2822
    %v3763 = vpop.f32.mrb[0].mxu0
    %v3764 = vadd.f32 0.0, %v3763
    %v3765 = vpop.f32.mrb[0].mxu0
    %v3766 = vadd.f32 0.0, %v3765
    %v3767 = vpop.f32.mrb[0].mxu0
    %v3768 = vpop.f32.mrb[0].mxu0
    %3769 = vdwg.mxu0
    %3770 = vmatprep.subr.bf16.mxu0 %v3498
    %3771 = vmatpush1.bf16.msra.mxu0 %v3497
    %3772 = vmatprep.subr.bf16.mxu0 %v3504
    %3773 = vmatpush1.bf16.msra.mxu0 %v3503
    %3774 = vmatprep.subr.bf16.mxu0 %v3510
    %3775 = vmatpush1.bf16.msra.mxu0 %v3509
    %3776 = vmatprep.subr.bf16.mxu0 %v3516
    %3777 = vmatpush1.bf16.msra.mxu0 %v3515
    %3778 = vmatprep.subr.bf16.mxu0 %v3522
    %3779 = vmatpush1.bf16.msra.mxu0 %v3521
    %3780 = vmatprep.subr.bf16.mxu0 %v3528
    %3781 = vmatpush1.bf16.msra.mxu0 %v3527
    %3782 = vmatprep.subr.bf16.mxu0 %v3534
    %3783 = vmatpush1.bf16.msra.mxu0 %v3533
    %3784 = vmatprep.subr.bf16.mxu0 %v3540
    %3785 = vmatpush1.bf16.msra.mxu0 %v3539
    %3786 = vmatprep.subr.bf16.mxu0 0
    %3787 = vmatpush1.bf16.msra.mxu0 0
    %3788 = vmatprep.subr.bf16.mxu0 0
    %3789 = vmatpush1.bf16.msra.mxu0 0
    %3790 = vmatprep.subr.bf16.mxu0 0
    %3791 = vmatpush1.bf16.msra.mxu0 0
    %3792 = vmatprep.subr.bf16.mxu0 0
    %3793 = vmatpush1.bf16.msra.mxu0 0
    %3794 = vmatprep.subr.bf16.mxu0 0
    %3795 = vmatpush1.bf16.msra.mxu0 0
    %3796 = vmatprep.subr.bf16.mxu0 0
    %3797 = vmatpush1.bf16.msra.mxu0 0
    %3798 = vmatprep.subr.bf16.mxu0 0
    %3799 = vmatpush1.bf16.msra.mxu0 0
    %3800 = vmatprep.subr.bf16.mxu0 0
    %3801 = vmatpush1.bf16.msra.mxu0 0
    %3802 = vmatprep.mubr.bf16.mxu0 0
    %3803 = vmatmul.mubr.bf16.gmra.mrb[0].mxu0 %v2812
    %v3804 = vpop.f32.mrb[0].mxu0
    %v3805 = vadd.f32 %v3724, %v3804
    %v3806 = vpop.f32.mrb[0].mxu0
    %v3807 = vadd.f32 %v3726, %v3806
    %v3808 = vpop.f32.mrb[0].mxu0
    %v3809 = vadd.f32 %v3728, %v3808
    %v3810 = vpop.f32.mrb[0].mxu0
    %v3811 = vadd.f32 %v3730, %v3810
    %3812 = vmatprep.mubr.bf16.mxu0 0
    %3813 = vmatmul.mubr.bf16.gmra.mrb[0].mxu0 %v2815
    %v3814 = vpop.f32.mrb[0].mxu0
    %v3815 = vadd.f32 %v3734, %v3814
    %v3816 = vpop.f32.mrb[0].mxu0
    %v3817 = vadd.f32 %v3736, %v3816
    %v3818 = vpop.f32.mrb[0].mxu0
    %v3819 = vadd.f32 %v3738, %v3818
    %v3820 = vpop.f32.mrb[0].mxu0
    %v3821 = vadd.f32 %v3740, %v3820
    %3822 = vmatprep.mubr.bf16.mxu0 0
    %3823 = vmatmul.mubr.bf16.gmra.mrb[0].mxu0 %v2818
    %v3824 = vpop.f32.mrb[0].mxu0
    %v3825 = vadd.f32 %v3744, %v3824
    %v3826 = vpop.f32.mrb[0].mxu0
    %v3827 = vadd.f32 %v3746, %v3826
    %v3828 = vpop.f32.mrb[0].mxu0
    %v3829 = vadd.f32 %v3748, %v3828
    %v3830 = vpop.f32.mrb[0].mxu0
    %v3831 = vadd.f32 %v3750, %v3830
    %3832 = vmatprep.mubr.bf16.mxu0 0
    %3833 = vmatmul.mubr.bf16.gmra.mrb[0].mxu0 %v2821
    %v3834 = vpop.f32.mrb[0].mxu0
    %v3835 = vadd.f32 %v3754, %v3834
    %v3836 = vpop.f32.mrb[0].mxu0
    %v3837 = vadd.f32 %v3756, %v3836
    %v3838 = vpop.f32.mrb[0].mxu0
    %v3839 = vadd.f32 %v3758, %v3838
    %v3840 = vpop.f32.mrb[0].mxu0
    %v3841 = vadd.f32 %v3760, %v3840
    %3842 = vmatprep.mubr.bf16.mxu0 0
    %3843 = vmatmul.mubr.bf16.gmra.mrb[0].mxu0 %v2824
    %v3844 = vpop.f32.mrb[0].mxu0
    %v3845 = vadd.f32 %v3764, %v3844
    %v3846 = vpop.f32.mrb[0].mxu0
    %v3847 = vadd.f32 %v3766, %v3846
    %v3848 = vpop.f32.mrb[0].mxu0
    %v3849 = vpop.f32.mrb[0].mxu0
    %3850 = vdwg.mxu0
    %3851 = vmatprep.subr.bf16.mxu0 %v3404
    %3852 = vmatpush1.bf16.msra.mxu0 %v3403
    %3853 = vmatprep.subr.bf16.mxu0 %v3410
    %3854 = vmatpush1.bf16.msra.mxu0 %v3409
    %3855 = vmatprep.subr.bf16.mxu0 %v3416
    %3856 = vmatpush1.bf16.msra.mxu0 %v3415
    %3857 = vmatprep.subr.bf16.mxu0 %v3422
    %3858 = vmatpush1.bf16.msra.mxu0 %v3421
    %3859 = vmatprep.subr.bf16.mxu0 %v3428
    %3860 = vmatpush1.bf16.msra.mxu0 %v3427
    %3861 = vmatprep.subr.bf16.mxu0 %v3434
    %3862 = vmatpush1.bf16.msra.mxu0 %v3433
    %3863 = vmatprep.subr.bf16.mxu0 %v3440
    %3864 = vmatpush1.bf16.msra.mxu0 %v3439
    %3865 = vmatprep.subr.bf16.mxu0 %v3446
    %3866 = vmatpush1.bf16.msra.mxu0 %v3445
    %3867 = vmatprep.subr.bf16.mxu0 %v3452
    %3868 = vmatpush1.bf16.msra.mxu0 %v3451
    %3869 = vmatprep.subr.bf16.mxu0 %v3458
    %3870 = vmatpush1.bf16.msra.mxu0 %v3457
    %3871 = vmatprep.subr.bf16.mxu0 %v3464
    %3872 = vmatpush1.bf16.msra.mxu0 %v3463
    %3873 = vmatprep.subr.bf16.mxu0 %v3470
    %3874 = vmatpush1.bf16.msra.mxu0 %v3469
    %3875 = vmatprep.subr.bf16.mxu0 %v3476
    %3876 = vmatpush1.bf16.msra.mxu0 %v3475
    %3877 = vmatprep.subr.bf16.mxu0 %v3482
    %3878 = vmatpush1.bf16.msra.mxu0 %v3481
    %3879 = vmatprep.subr.bf16.mxu0 %v3488
    %3880 = vmatpush1.bf16.msra.mxu0 %v3487
    %3881 = vmatprep.subr.bf16.mxu0 %v3494
    %3882 = vmatpush1.bf16.msra.mxu0 %v3493
    %3883 = vmatprep.mubr.bf16.mxu0 %v2811
    %3884 = vmatmul.mubr.bf16.gmra.mrb[0].mxu0 %v2810
    %v3885 = vpop.f32.mrb[0].mxu0
    %v3886 = vadd.f32 0.0, %v3885
    %v3887 = vpop.f32.mrb[0].mxu0
    %v3888 = vadd.f32 0.0, %v3887
    %v3889 = vpop.f32.mrb[0].mxu0
    %v3890 = vadd.f32 0.0, %v3889
    %v3891 = vpop.f32.mrb[0].mxu0
    %v3892 = vadd.f32 0.0, %v3891
    %3893 = vmatprep.mubr.bf16.mxu0 %v2814
    %3894 = vmatmul.mubr.bf16.gmra.mrb[0].mxu0 %v2813
    %v3895 = vpop.f32.mrb[0].mxu0
    %v3896 = vadd.f32 0.0, %v3895
    %v3897 = vpop.f32.mrb[0].mxu0
    %v3898 = vadd.f32 0.0, %v3897
    %v3899 = vpop.f32.mrb[0].mxu0
    %v3900 = vadd.f32 0.0, %v3899
    %v3901 = vpop.f32.mrb[0].mxu0
    %v3902 = vadd.f32 0.0, %v3901
    %3903 = vmatprep.mubr.bf16.mxu0 %v2817
    %3904 = vmatmul.mubr.bf16.gmra.mrb[0].mxu0 %v2816
    %v3905 = vpop.f32.mrb[0].mxu0
    %v3906 = vadd.f32 0.0, %v3905
    %v3907 = vpop.f32.mrb[0].mxu0
    %v3908 = vadd.f32 0.0, %v3907
    %v3909 = vpop.f32.mrb[0].mxu0
    %v3910 = vadd.f32 0.0, %v3909
    %v3911 = vpop.f32.mrb[0].mxu0
    %v3912 = vadd.f32 0.0, %v3911
    %3913 = vmatprep.mubr.bf16.mxu0 %v2820
    %3914 = vmatmul.mubr.bf16.gmra.mrb[0].mxu0 %v2819
    %v3915 = vpop.f32.mrb[0].mxu0
    %v3916 = vadd.f32 0.0, %v3915
    %v3917 = vpop.f32.mrb[0].mxu0
    %v3918 = vadd.f32 0.0, %v3917
    %v3919 = vpop.f32.mrb[0].mxu0
    %v3920 = vadd.f32 0.0, %v3919
    %v3921 = vpop.f32.mrb[0].mxu0
    %v3922 = vadd.f32 0.0, %v3921
    %3923 = vmatprep.mubr.bf16.mxu0 %v2823
    %3924 = vmatmul.mubr.bf16.gmra.mrb[0].mxu0 %v2822
    %v3925 = vpop.f32.mrb[0].mxu0
    %v3926 = vadd.f32 0.0, %v3925
    %v3927 = vpop.f32.mrb[0].mxu0
    %v3928 = vadd.f32 0.0, %v3927
    %v3929 = vpop.f32.mrb[0].mxu0
    %v3930 = vpop.f32.mrb[0].mxu0
    %3931 = vdwg.mxu0
    %3932 = vmatprep.subr.bf16.mxu0 %v3500
    %3933 = vmatpush1.bf16.msra.mxu0 %v3499
    %3934 = vmatprep.subr.bf16.mxu0 %v3506
    %3935 = vmatpush1.bf16.msra.mxu0 %v3505
    %3936 = vmatprep.subr.bf16.mxu0 %v3512
    %3937 = vmatpush1.bf16.msra.mxu0 %v3511
    %3938 = vmatprep.subr.bf16.mxu0 %v3518
    %3939 = vmatpush1.bf16.msra.mxu0 %v3517
    %3940 = vmatprep.subr.bf16.mxu0 %v3524
    %3941 = vmatpush1.bf16.msra.mxu0 %v3523
    %3942 = vmatprep.subr.bf16.mxu0 %v3530
    %3943 = vmatpush1.bf16.msra.mxu0 %v3529
    %3944 = vmatprep.subr.bf16.mxu0 %v3536
    %3945 = vmatpush1.bf16.msra.mxu0 %v3535
    %3946 = vmatprep.subr.bf16.mxu0 %v3542
    %3947 = vmatpush1.bf16.msra.mxu0 %v3541
    %3948 = vmatprep.subr.bf16.mxu0 0
    %3949 = vmatpush1.bf16.msra.mxu0 0
    %3950 = vmatprep.subr.bf16.mxu0 0
    %3951 = vmatpush1.bf16.msra.mxu0 0
    %3952 = vmatprep.subr.bf16.mxu0 0
    %3953 = vmatpush1.bf16.msra.mxu0 0
    %3954 = vmatprep.subr.bf16.mxu0 0
    %3955 = vmatpush1.bf16.msra.mxu0 0
    %3956 = vmatprep.subr.bf16.mxu0 0
    %3957 = vmatpush1.bf16.msra.mxu0 0
    %3958 = vmatprep.subr.bf16.mxu0 0
    %3959 = vmatpush1.bf16.msra.mxu0 0
    %3960 = vmatprep.subr.bf16.mxu0 0
    %3961 = vmatpush1.bf16.msra.mxu0 0
    %3962 = vmatprep.subr.bf16.mxu0 0
    %3963 = vmatpush1.bf16.msra.mxu0 0
    %3964 = vmatprep.mubr.bf16.mxu0 0
    %3965 = vmatmul.mubr.bf16.gmra.mrb[0].mxu0 %v2812
    %v3966 = vpop.f32.mrb[0].mxu0
    %v3967 = vadd.f32 %v3886, %v3966
    %v3968 = vpop.f32.mrb[0].mxu0
    %v3969 = vadd.f32 %v3888, %v3968
    %v3970 = vpop.f32.mrb[0].mxu0
    %v3971 = vadd.f32 %v3890, %v3970
    %v3972 = vpop.f32.mrb[0].mxu0
    %v3973 = vadd.f32 %v3892, %v3972
    %3974 = vmatprep.mubr.bf16.mxu0 0
    %3975 = vmatmul.mubr.bf16.gmra.mrb[0].mxu0 %v2815
    %v3976 = vpop.f32.mrb[0].mxu0
    %v3977 = vadd.f32 %v3896, %v3976
    %v3978 = vpop.f32.mrb[0].mxu0
    %v3979 = vadd.f32 %v3898, %v3978
    %v3980 = vpop.f32.mrb[0].mxu0
    %v3981 = vadd.f32 %v3900, %v3980
    %v3982 = vpop.f32.mrb[0].mxu0
    %v3983 = vadd.f32 %v3902, %v3982
    %3984 = vmatprep.mubr.bf16.mxu0 0
    %3985 = vmatmul.mubr.bf16.gmra.mrb[0].mxu0 %v2818
    %v3986 = vpop.f32.mrb[0].mxu0
    %v3987 = vadd.f32 %v3906, %v3986
    %v3988 = vpop.f32.mrb[0].mxu0
    %v3989 = vadd.f32 %v3908, %v3988
    %v3990 = vpop.f32.mrb[0].mxu0
    %v3991 = vadd.f32 %v3910, %v3990
    %v3992 = vpop.f32.mrb[0].mxu0
    %v3993 = vadd.f32 %v3912, %v3992
    %3994 = vmatprep.mubr.bf16.mxu0 0
    %3995 = vmatmul.mubr.bf16.gmra.mrb[0].mxu0 %v2821
    %v3996 = vpop.f32.mrb[0].mxu0
    %v3997 = vadd.f32 %v3916, %v3996
    %v3998 = vpop.f32.mrb[0].mxu0
    %v3999 = vadd.f32 %v3918, %v3998
    %v4000 = vpop.f32.mrb[0].mxu0
    %v4001 = vadd.f32 %v3920, %v4000
    %v4002 = vpop.f32.mrb[0].mxu0
    %v4003 = vadd.f32 %v3922, %v4002
    %4004 = vmatprep.mubr.bf16.mxu0 0
    %4005 = vmatmul.mubr.bf16.gmra.mrb[0].mxu0 %v2824
    %v4006 = vpop.f32.mrb[0].mxu0
    %v4007 = vadd.f32 %v3926, %v4006
    %v4008 = vpop.f32.mrb[0].mxu0
    %v4009 = vadd.f32 %v3928, %v4008
    %v4010 = vpop.f32.mrb[0].mxu0
    %v4011 = vpop.f32.mrb[0].mxu0
    %4012 = vdwg.mxu0
    %4013 = vmatprep.subr.bf16.mxu0 %v3406
    %4014 = vmatpush1.bf16.msra.mxu0 %v3405
    %4015 = vmatprep.subr.bf16.mxu0 %v3412
    %4016 = vmatpush1.bf16.msra.mxu0 %v3411
    %4017 = vmatprep.subr.bf16.mxu0 %v3418
    %4018 = vmatpush1.bf16.msra.mxu0 %v3417
    %4019 = vmatprep.subr.bf16.mxu0 %v3424
    %4020 = vmatpush1.bf16.msra.mxu0 %v3423
    %4021 = vmatprep.subr.bf16.mxu0 %v3430
    %4022 = vmatpush1.bf16.msra.mxu0 %v3429
    %4023 = vmatprep.subr.bf16.mxu0 %v3436
    %4024 = vmatpush1.bf16.msra.mxu0 %v3435
    %4025 = vmatprep.subr.bf16.mxu0 %v3442
    %4026 = vmatpush1.bf16.msra.mxu0 %v3441
    %4027 = vmatprep.subr.bf16.mxu0 %v3448
    %4028 = vmatpush1.bf16.msra.mxu0 %v3447
    %4029 = vmatprep.subr.bf16.mxu0 %v3454
    %4030 = vmatpush1.bf16.msra.mxu0 %v3453
    %4031 = vmatprep.subr.bf16.mxu0 %v3460
    %4032 = vmatpush1.bf16.msra.mxu0 %v3459
    %4033 = vmatprep.subr.bf16.mxu0 %v3466
    %4034 = vmatpush1.bf16.msra.mxu0 %v3465
    %4035 = vmatprep.subr.bf16.mxu0 %v3472
    %4036 = vmatpush1.bf16.msra.mxu0 %v3471
    %4037 = vmatprep.subr.bf16.mxu0 %v3478
    %4038 = vmatpush1.bf16.msra.mxu0 %v3477
    %4039 = vmatprep.subr.bf16.mxu0 %v3484
    %4040 = vmatpush1.bf16.msra.mxu0 %v3483
    %4041 = vmatprep.subr.bf16.mxu0 %v3490
    %4042 = vmatpush1.bf16.msra.mxu0 %v3489
    %4043 = vmatprep.subr.bf16.mxu0 %v3496
    %4044 = vmatpush1.bf16.msra.mxu0 %v3495
    %4045 = vmatprep.mubr.bf16.mxu0 %v2811
    %4046 = vmatmul.mubr.bf16.gmra.mrb[0].mxu0 %v2810
    %v4047 = vpop.f32.mrb[0].mxu0
    %v4048 = vadd.f32 0.0, %v4047
    %v4049 = vpop.f32.mrb[0].mxu0
    %v4050 = vadd.f32 0.0, %v4049
    %v4051 = vpop.f32.mrb[0].mxu0
    %v4052 = vadd.f32 0.0, %v4051
    %v4053 = vpop.f32.mrb[0].mxu0
    %v4054 = vadd.f32 0.0, %v4053
    %4055 = vmatprep.mubr.bf16.mxu0 %v2814
    %4056 = vmatmul.mubr.bf16.gmra.mrb[0].mxu0 %v2813
    %v4057 = vpop.f32.mrb[0].mxu0
    %v4058 = vadd.f32 0.0, %v4057
    %v4059 = vpop.f32.mrb[0].mxu0
    %v4060 = vadd.f32 0.0, %v4059
    %v4061 = vpop.f32.mrb[0].mxu0
    %v4062 = vadd.f32 0.0, %v4061
    %v4063 = vpop.f32.mrb[0].mxu0
    %v4064 = vadd.f32 0.0, %v4063
    %4065 = vmatprep.mubr.bf16.mxu0 %v2817
    %4066 = vmatmul.mubr.bf16.gmra.mrb[0].mxu0 %v2816
    %v4067 = vpop.f32.mrb[0].mxu0
    %v4068 = vadd.f32 0.0, %v4067
    %v4069 = vpop.f32.mrb[0].mxu0
    %v4070 = vadd.f32 0.0, %v4069
    %v4071 = vpop.f32.mrb[0].mxu0
    %v4072 = vadd.f32 0.0, %v4071
    %v4073 = vpop.f32.mrb[0].mxu0
    %v4074 = vadd.f32 0.0, %v4073
    %4075 = vmatprep.mubr.bf16.mxu0 %v2820
    %4076 = vmatmul.mubr.bf16.gmra.mrb[0].mxu0 %v2819
    %v4077 = vpop.f32.mrb[0].mxu0
    %v4078 = vadd.f32 0.0, %v4077
    %v4079 = vpop.f32.mrb[0].mxu0
    %v4080 = vadd.f32 0.0, %v4079
    %v4081 = vpop.f32.mrb[0].mxu0
    %v4082 = vadd.f32 0.0, %v4081
    %v4083 = vpop.f32.mrb[0].mxu0
    %v4084 = vadd.f32 0.0, %v4083
    %4085 = vmatprep.mubr.bf16.mxu0 %v2823
    %4086 = vmatmul.mubr.bf16.gmra.mrb[0].mxu0 %v2822
    %v4087 = vpop.f32.mrb[0].mxu0
    %v4088 = vadd.f32 0.0, %v4087
    %v4089 = vpop.f32.mrb[0].mxu0
    %v4090 = vadd.f32 0.0, %v4089
    %v4091 = vpop.f32.mrb[0].mxu0
    %v4092 = vpop.f32.mrb[0].mxu0
    %4093 = vdwg.mxu0
    %4094 = vmatprep.subr.bf16.mxu0 %v3502
    %4095 = vmatpush1.bf16.msra.mxu0 %v3501
    %4096 = vmatprep.subr.bf16.mxu0 %v3508
    %4097 = vmatpush1.bf16.msra.mxu0 %v3507
    %4098 = vmatprep.subr.bf16.mxu0 %v3514
    %4099 = vmatpush1.bf16.msra.mxu0 %v3513
    %4100 = vmatprep.subr.bf16.mxu0 %v3520
    %4101 = vmatpush1.bf16.msra.mxu0 %v3519
    %4102 = vmatprep.subr.bf16.mxu0 %v3526
    %4103 = vmatpush1.bf16.msra.mxu0 %v3525
    %4104 = vmatprep.subr.bf16.mxu0 %v3532
    %4105 = vmatpush1.bf16.msra.mxu0 %v3531
    %4106 = vmatprep.subr.bf16.mxu0 %v3538
    %4107 = vmatpush1.bf16.msra.mxu0 %v3537
    %4108 = vmatprep.subr.bf16.mxu0 %v3544
    %4109 = vmatpush1.bf16.msra.mxu0 %v3543
    %4110 = vmatprep.subr.bf16.mxu0 0
    %4111 = vmatpush1.bf16.msra.mxu0 0
    %4112 = vmatprep.subr.bf16.mxu0 0
    %4113 = vmatpush1.bf16.msra.mxu0 0
    %4114 = vmatprep.subr.bf16.mxu0 0
    %4115 = vmatpush1.bf16.msra.mxu0 0
    %4116 = vmatprep.subr.bf16.mxu0 0
    %4117 = vmatpush1.bf16.msra.mxu0 0
    %4118 = vmatprep.subr.bf16.mxu0 0
    %4119 = vmatpush1.bf16.msra.mxu0 0
    %4120 = vmatprep.subr.bf16.mxu0 0
    %4121 = vmatpush1.bf16.msra.mxu0 0
    %4122 = vmatprep.subr.bf16.mxu0 0
    %4123 = vmatpush1.bf16.msra.mxu0 0
    %4124 = vmatprep.subr.bf16.mxu0 0
    %4125 = vmatpush1.bf16.msra.mxu0 0
    %4126 = vmatprep.mubr.bf16.mxu0 0
    %4127 = vmatmul.mubr.bf16.gmra.mrb[0].mxu0 %v2812
    %v4128 = vpop.f32.mrb[0].mxu0
    %v4129 = vadd.f32 %v4048, %v4128
    %v4130 = vpop.f32.mrb[0].mxu0
    %v4131 = vadd.f32 %v4050, %v4130
    %v4132 = vpop.f32.mrb[0].mxu0
    %v4133 = vadd.f32 %v4052, %v4132
    %v4134 = vpop.f32.mrb[0].mxu0
    %v4135 = vadd.f32 %v4054, %v4134
    %4136 = vmatprep.mubr.bf16.mxu0 0
    %4137 = vmatmul.mubr.bf16.gmra.mrb[0].mxu0 %v2815
    %v4138 = vpop.f32.mrb[0].mxu0
    %v4139 = vadd.f32 %v4058, %v4138
    %v4140 = vpop.f32.mrb[0].mxu0
    %v4141 = vadd.f32 %v4060, %v4140
    %v4142 = vpop.f32.mrb[0].mxu0
    %v4143 = vadd.f32 %v4062, %v4142
    %v4144 = vpop.f32.mrb[0].mxu0
    %v4145 = vadd.f32 %v4064, %v4144
    %4146 = vmatprep.mubr.bf16.mxu0 0
    %4147 = vmatmul.mubr.bf16.gmra.mrb[0].mxu0 %v2818
    %v4148 = vpop.f32.mrb[0].mxu0
    %v4149 = vadd.f32 %v4068, %v4148
    %v4150 = vpop.f32.mrb[0].mxu0
    %v4151 = vadd.f32 %v4070, %v4150
    %v4152 = vpop.f32.mrb[0].mxu0
    %v4153 = vadd.f32 %v4072, %v4152
    %v4154 = vpop.f32.mrb[0].mxu0
    %v4155 = vadd.f32 %v4074, %v4154
    %4156 = vmatprep.mubr.bf16.mxu0 0
    %4157 = vmatmul.mubr.bf16.gmra.mrb[0].mxu0 %v2821
    %v4158 = vpop.f32.mrb[0].mxu0
    %v4159 = vadd.f32 %v4078, %v4158
    %v4160 = vpop.f32.mrb[0].mxu0
    %v4161 = vadd.f32 %v4080, %v4160
    %v4162 = vpop.f32.mrb[0].mxu0
    %v4163 = vadd.f32 %v4082, %v4162
    %v4164 = vpop.f32.mrb[0].mxu0
    %v4165 = vadd.f32 %v4084, %v4164
    %4166 = vmatprep.mubr.bf16.mxu0 0
    %4167 = vmatmul.mubr.bf16.gmra.mrb[0].mxu0 %v2824
    %v4168 = vpop.f32.mrb[0].mxu0
    %v4169 = vadd.f32 %v4088, %v4168
    %v4170 = vpop.f32.mrb[0].mxu0
    %v4171 = vadd.f32 %v4090, %v4170
    %v4172 = vpop.f32.mrb[0].mxu0
    %v4173 = vpop.f32.mrb[0].mxu0
    %4174 = vdwg.mxu0
    %v4190 = vrot.slane %v3969, 6
    %v4191 = vrot.slane %v4129, 6
    %v4192 = vrot.slane %v4131, 6
    %v4193 = vrot.slane %v3973, 6
    %v4194 = vsel %vm1268, %v4190, %v4193
    %v4195 = vrot.slane %v4133, 6
    %v4196 = vsel %vm1268, %v4191, %v4195
    %v4197 = vrot.slane %v4135, 6
    %v4198 = vsel %vm1268, %v4192, %v4197
    %v4199 = vrot.slane %v3979, 6
    %v4200 = vsel %vm1268, %v4193, %v4199
    %v4201 = vrot.slane %v4139, 6
    %v4202 = vsel %vm1268, %v4195, %v4201
    %v4203 = vrot.slane %v4141, 6
    %v4204 = vsel %vm1268, %v4197, %v4203
    %v4205 = vrot.slane %v3983, 6
    %v4206 = vsel %vm1268, %v4199, %v4205
    %v4207 = vrot.slane %v4143, 6
    %v4208 = vsel %vm1268, %v4201, %v4207
    %v4209 = vrot.slane %v4145, 6
    %v4210 = vsel %vm1268, %v4203, %v4209
    %v4211 = vrot.slane %v3989, 6
    %v4212 = vsel %vm1268, %v4205, %v4211
    %v4213 = vrot.slane %v4149, 6
    %v4214 = vsel %vm1268, %v4207, %v4213
    %v4215 = vrot.slane %v4151, 6
    %v4216 = vsel %vm1268, %v4209, %v4215
    %v4232 = vsel %vm1268, %v3825, %v4190
    %v4233 = vsel %vm1268, %v3827, %v4191
    %v4234 = vsel %vm1268, %v3987, %v4192
    %v4235 = vld [vmem:[%s6] sm:$0xf]
    %v4236 = vld [vmem:[%s6 + $0x4] sm:$0xf]
    %v4237 = vld [vmem:[%s6 + $0x8] sm:$0xf]
    %v4238 = vld [vmem:[%s6 + $0xc] sm:$0xf]
    %v4239 = vld [vmem:[%s6 + $0x10] sm:$0x3]
    %v4240 = vpack.c.bf16 %v3809, %v3805
    %v4241 = vpack.c.bf16 %v3811, %v3807
    %v4242 = vpack.c.bf16 %v3971, %v3967
    %v4243 = vpack.c.bf16 %v3819, %v3815
    %v4244 = vpack.c.bf16 %v3821, %v3817
    %v4245 = vpack.c.bf16 %v3981, %v3977
    %v4246 = vpack.c.bf16 %v4194, %v4232
    %v4247 = vpack.c.bf16 %v4196, %v4233
    %v4248 = vpack.c.bf16 %v4198, %v4234
    %v4249 = vpack.c.bf16 %v4206, %v4200
    %v4250 = vpack.c.bf16 %v4208, %v4202
    %v4251 = vpack.c.bf16 %v4210, %v4204
    %v4252 = vpack.c.bf16 %v4212, %v4212
    %v4253 = vpack.c.bf16 %v4214, %v4214
    %v4254 = vpack.c.bf16 %v4216, %v4216
    %v4255 = vld [vmem:[%s7] sm:$0x7]
    %v4257 = vlaneseq
    %v4258 = vshrl.u32 %v4257, 7
    %v4259 = vsub.s32 0, %v4258
    %v4260 = vrot.slane %v4255, %v4259
    %v4261 = vlaneseq
    %v4262 = vshrl.u32 %v4261, 7
    %v4263 = vsub.s32 1, %v4262
    %v4264 = vrot.slane %v4255, %v4263
    %v4265 = vlaneseq
    %v4266 = vshrl.u32 %v4265, 7
    %v4267 = vsub.s32 2, %v4266
    %v4268 = vrot.slane %v4255, %v4267
    %v4277 = vunpack.c.l.b16 %v4235
    %v4278 = vunpack.c.l.b16 %v4236
    %v4279 = vunpack.c.l.b16 %v4237
    %v4280 = vunpack.c.l.b16 %v4238
    %v4281 = vunpack.c.l.b16 %v4239
    %v4282 = vpack.c.b16 %v4278, %v4277
    %v4283 = vpack.c.b16 %v4280, %v4279
    %v4284 = vpack.c.b16 %v4281, %v4281
    %vm4285 = vcmask 556032
    %v4287 = vsel %vm4285, %v4282, 0
    %v4290 = vsel %vm4285, %v4283, 0
    %v4293 = vsel %vm4285, %v4284, 0
    %v4296 = vsel %vm1268, %v4252, 0
    %v4299 = vsel %vm1268, %v4253, 0
    %v4302 = vsel %vm1268, %v4254, 0
    %4304 = vmatprep.subr.bf16.mxu0 %v4241
    %4305 = vmatpush1.bf16.msra.mxu0 %v4240
    %4306 = vmatprep.subr.bf16.mxu0 %v4244
    %4307 = vmatpush1.bf16.msra.mxu0 %v4243
    %4308 = vmatprep.subr.bf16.mxu0 %v4247
    %4309 = vmatpush1.bf16.msra.mxu0 %v4246
    %4310 = vmatprep.subr.bf16.mxu0 %v4250
    %4311 = vmatpush1.bf16.msra.mxu0 %v4249
    %4312 = vmatprep.subr.bf16.mxu0 %v4299
    %4313 = vmatpush1.bf16.msra.mxu0 %v4296
    %4314 = vmatprep.subr.bf16.mxu0 0
    %4315 = vmatpush1.bf16.msra.mxu0 0
    %4316 = vmatprep.subr.bf16.mxu0 0
    %4317 = vmatpush1.bf16.msra.mxu0 0
    %4318 = vmatprep.subr.bf16.mxu0 0
    %4319 = vmatpush1.bf16.msra.mxu0 0
    %4320 = vmatprep.subr.bf16.mxu0 0
    %4321 = vmatpush1.bf16.msra.mxu0 0
    %4322 = vmatprep.subr.bf16.mxu0 0
    %4323 = vmatpush1.bf16.msra.mxu0 0
    %4324 = vmatprep.subr.bf16.mxu0 0
    %4325 = vmatpush1.bf16.msra.mxu0 0
    %4326 = vmatprep.subr.bf16.mxu0 0
    %4327 = vmatpush1.bf16.msra.mxu0 0
    %4328 = vmatprep.subr.bf16.mxu0 0
    %4329 = vmatpush1.bf16.msra.mxu0 0
    %4330 = vmatprep.subr.bf16.mxu0 0
    %4331 = vmatpush1.bf16.msra.mxu0 0
    %4332 = vmatprep.subr.bf16.mxu0 0
    %4333 = vmatpush1.bf16.msra.mxu0 0
    %4334 = vmatprep.subr.bf16.mxu0 0
    %4335 = vmatpush1.bf16.msra.mxu0 0
    %4336 = vmatprep.mubr.bf16.mxu0 0
    %4337 = vmatmul.mubr.bf16.gmra.mrb[0].mxu0 %v4287
    %v4338 = vpop.f32.mrb[0].mxu0
    %v4339 = vadd.f32 %v4260, %v4338
    %v4340 = vpop.f32.mrb[0].mxu0
    %v4341 = vadd.f32 %v4264, %v4340
    %v4342 = vpop.f32.mrb[0].mxu0
    %v4343 = vadd.f32 %v4260, %v4342
    %v4344 = vpop.f32.mrb[0].mxu0
    %v4345 = vadd.f32 %v4264, %v4344
    %4346 = vmatprep.mubr.bf16.mxu0 0
    %4347 = vmatmul.mubr.bf16.gmra.mrb[0].mxu0 %v4290
    %v4348 = vpop.f32.mrb[0].mxu0
    %v4349 = vadd.f32 %v4260, %v4348
    %v4350 = vpop.f32.mrb[0].mxu0
    %v4351 = vadd.f32 %v4264, %v4350
    %v4352 = vpop.f32.mrb[0].mxu0
    %v4353 = vadd.f32 %v4260, %v4352
    %v4354 = vpop.f32.mrb[0].mxu0
    %v4355 = vadd.f32 %v4264, %v4354
    %4356 = vmatprep.mubr.bf16.mxu0 0
    %4357 = vmatmul.mubr.bf16.gmra.mrb[0].mxu0 %v4293
    %v4358 = vpop.f32.mrb[0].mxu0
    %v4359 = vadd.f32 %v4260, %v4358
    %v4360 = vpop.f32.mrb[0].mxu0
    %v4361 = vadd.f32 %v4264, %v4360
    %v4362 = vpop.f32.mrb[0].mxu0
    %v4363 = vpop.f32.mrb[0].mxu0
    %4364 = vdwg.mxu0
    %4365 = vmatprep.subr.bf16.mxu0 0
    %4366 = vmatpush1.bf16.msra.mxu0 %v4242
    %4367 = vmatprep.subr.bf16.mxu0 0
    %4368 = vmatpush1.bf16.msra.mxu0 %v4245
    %4369 = vmatprep.subr.bf16.mxu0 0
    %4370 = vmatpush1.bf16.msra.mxu0 %v4248
    %4371 = vmatprep.subr.bf16.mxu0 0
    %4372 = vmatpush1.bf16.msra.mxu0 %v4251
    %4373 = vmatprep.subr.bf16.mxu0 0
    %4374 = vmatpush1.bf16.msra.mxu0 %v4302
    %4375 = vmatprep.subr.bf16.mxu0 0
    %4376 = vmatpush1.bf16.msra.mxu0 0
    %4377 = vmatprep.subr.bf16.mxu0 0
    %4378 = vmatpush1.bf16.msra.mxu0 0
    %4379 = vmatprep.subr.bf16.mxu0 0
    %4380 = vmatpush1.bf16.msra.mxu0 0
    %4381 = vmatprep.subr.bf16.mxu0 0
    %4382 = vmatpush1.bf16.msra.mxu0 0
    %4383 = vmatprep.subr.bf16.mxu0 0
    %4384 = vmatpush1.bf16.msra.mxu0 0
    %4385 = vmatprep.subr.bf16.mxu0 0
    %4386 = vmatpush1.bf16.msra.mxu0 0
    %4387 = vmatprep.subr.bf16.mxu0 0
    %4388 = vmatpush1.bf16.msra.mxu0 0
    %4389 = vmatprep.subr.bf16.mxu0 0
    %4390 = vmatpush1.bf16.msra.mxu0 0
    %4391 = vmatprep.subr.bf16.mxu0 0
    %4392 = vmatpush1.bf16.msra.mxu0 0
    %4393 = vmatprep.subr.bf16.mxu0 0
    %4394 = vmatpush1.bf16.msra.mxu0 0
    %4395 = vmatprep.subr.bf16.mxu0 0
    %4396 = vmatpush1.bf16.msra.mxu0 0
    %4397 = vmatprep.mubr.bf16.mxu0 0
    %4398 = vmatmul.mubr.bf16.gmra.mrb[0].mxu0 %v4287
    %v4399 = vpop.f32.mrb[0].mxu0
    %v4400 = vadd.f32 %v4268, %v4399
    %v4401 = vpop.f32.mrb[0].mxu0
    %v4402 = vpop.f32.mrb[0].mxu0
    %v4403 = vadd.f32 %v4268, %v4402
    %v4404 = vpop.f32.mrb[0].mxu0
    %4405 = vmatprep.mubr.bf16.mxu0 0
    %4406 = vmatmul.mubr.bf16.gmra.mrb[0].mxu0 %v4290
    %v4407 = vpop.f32.mrb[0].mxu0
    %v4408 = vadd.f32 %v4268, %v4407
    %v4409 = vpop.f32.mrb[0].mxu0
    %v4410 = vpop.f32.mrb[0].mxu0
    %v4411 = vadd.f32 %v4268, %v4410
    %v4412 = vpop.f32.mrb[0].mxu0
    %4413 = vmatprep.mubr.bf16.mxu0 0
    %4414 = vmatmul.mubr.bf16.gmra.mrb[0].mxu0 %v4293
    %v4415 = vpop.f32.mrb[0].mxu0
    %v4416 = vadd.f32 %v4268, %v4415
    %v4417 = vpop.f32.mrb[0].mxu0
    %v4418 = vpop.f32.mrb[0].mxu0
    %v4419 = vpop.f32.mrb[0].mxu0
    %4420 = vdwg.mxu0
    %4421 = vst [vmem:[%s8] sm:$0xff] %v4339
    %4422 = vst [vmem:[%s8 + $0x8] sm:$0xff] %v4341
    %4423 = vst [vmem:[%s8 + $0x10] sm:$0xff] %v4400
    %4424 = vst [vmem:[%s8 + $0x18] sm:$0xff] %v4343
    %4425 = vst [vmem:[%s8 + $0x20] sm:$0xff] %v4345
    %4426 = vst [vmem:[%s8 + $0x28] sm:$0xff] %v4403
    %4427 = vst [vmem:[%s8 + $0x30] sm:$0xff] %v4349
    %4428 = vst [vmem:[%s8 + $0x38] sm:$0xff] %v4351
    %4429 = vst [vmem:[%s8 + $0x40] sm:$0xff] %v4408
    %4430 = vst [vmem:[%s8 + $0x48] sm:$0xff] %v4353
    %4431 = vst [vmem:[%s8 + $0x50] sm:$0xff] %v4355
    %4432 = vst [vmem:[%s8 + $0x58] sm:$0xff] %v4411
    %4433 = vst [vmem:[%s8 + $0x60] sm:$0x7] %v4359
    %4434 = vst [vmem:[%s8 + $0x68] sm:$0x7] %v4361
    %4435 = vst [vmem:[%s8 + $0x70] sm:$0x7] %v4416
    %vm4451 = vcmask 1045504
    %v4452 = vrot.slane %v3825, 2
    %v4453 = vrot.slane %v3829, 2
    %v4454 = vsel %vm4451, %v4452, %v4453
    %v4455 = vrot.slane %v3827, 2
    %v4456 = vrot.slane %v3831, 2
    %v4457 = vsel %vm4451, %v4455, %v4456
    %v4458 = vrot.slane %v3987, 2
    %v4459 = vrot.slane %v3991, 2
    %v4460 = vsel %vm4451, %v4458, %v4459
    %v4461 = vrot.slane %v3835, 2
    %v4462 = vsel %vm4451, %v4453, %v4461
    %v4463 = vrot.slane %v3837, 2
    %v4464 = vsel %vm4451, %v4456, %v4463
    %v4465 = vrot.slane %v3997, 2
    %v4466 = vsel %vm4451, %v4459, %v4465
    %v4467 = vrot.slane %v3839, 2
    %v4468 = vsel %vm4451, %v4461, %v4467
    %v4469 = vrot.slane %v3841, 2
    %v4470 = vsel %vm4451, %v4463, %v4469
    %v4471 = vrot.slane %v4001, 2
    %v4472 = vsel %vm4451, %v4465, %v4471
    %v4473 = vrot.slane %v3845, 2
    %v4474 = vsel %vm4451, %v4467, %v4473
    %v4475 = vrot.slane %v3847, 2
    %v4476 = vsel %vm4451, %v4469, %v4475
    %v4477 = vrot.slane %v4007, 2
    %v4478 = vsel %vm4451, %v4471, %v4477
    %v4494 = vsel %vm1268, %v4473, %v3989
    %v4495 = vsel %vm1268, %v4475, %v4149
    %v4496 = vsel %vm1268, %v4477, %v4151
    %v4497 = vld [vmem:[%s6] sm:$0xf]
    %v4498 = vld [vmem:[%s6 + $0x4] sm:$0xf]
    %v4499 = vld [vmem:[%s6 + $0x8] sm:$0xf]
    %v4500 = vld [vmem:[%s6 + $0xc] sm:$0xf]
    %v4501 = vld [vmem:[%s6 + $0x10] sm:$0x3]
    %v4502 = vpack.c.bf16 %v4462, %v4454
    %v4503 = vpack.c.bf16 %v4464, %v4457
    %v4504 = vpack.c.bf16 %v4466, %v4460
    %v4505 = vpack.c.bf16 %v4474, %v4468
    %v4506 = vpack.c.bf16 %v4476, %v4470
    %v4507 = vpack.c.bf16 %v4478, %v4472
    %v4508 = vpack.c.bf16 %v3993, %v4494
    %v4509 = vpack.c.bf16 %v4153, %v4495
    %v4510 = vpack.c.bf16 %v4155, %v4496
    %v4511 = vpack.c.bf16 %v4003, %v3999
    %v4512 = vpack.c.bf16 %v4163, %v4159
    %v4513 = vpack.c.bf16 %v4165, %v4161
    %v4514 = vpack.c.bf16 %v4009, %v4009
    %v4515 = vpack.c.bf16 %v4169, %v4169
    %v4516 = vpack.c.bf16 %v4171, %v4171
    %v4517 = vld [vmem:[%s7] sm:$0x7]
    %v4519 = vlaneseq
    %v4520 = vshrl.u32 %v4519, 7
    %v4521 = vsub.s32 0, %v4520
    %v4522 = vrot.slane %v4517, %v4521
    %v4523 = vlaneseq
    %v4524 = vshrl.u32 %v4523, 7
    %v4525 = vsub.s32 1, %v4524
    %v4526 = vrot.slane %v4517, %v4525
    %v4527 = vlaneseq
    %v4528 = vshrl.u32 %v4527, 7
    %v4529 = vsub.s32 2, %v4528
    %v4530 = vrot.slane %v4517, %v4529
    %v4539 = vunpack.c.l.b16 %v4497
    %v4540 = vunpack.c.l.b16 %v4498
    %v4541 = vunpack.c.l.b16 %v4499
    %v4542 = vunpack.c.l.b16 %v4500
    %v4543 = vunpack.c.l.b16 %v4501
    %v4544 = vpack.c.b16 %v4540, %v4539
    %v4545 = vpack.c.b16 %v4542, %v4541
    %v4546 = vpack.c.b16 %v4543, %v4543
    %v4548 = vsel %vm4285, %v4544, 0
    %v4551 = vsel %vm4285, %v4545, 0
    %v4554 = vsel %vm4285, %v4546, 0
    %v4557 = vsel %vm1268, %v4514, 0
    %v4560 = vsel %vm1268, %v4515, 0
    %v4563 = vsel %vm1268, %v4516, 0
    %4565 = vmatprep.subr.bf16.mxu0 %v4503
    %4566 = vmatpush1.bf16.msra.mxu0 %v4502
    %4567 = vmatprep.subr.bf16.mxu0 %v4506
    %4568 = vmatpush1.bf16.msra.mxu0 %v4505
    %4569 = vmatprep.subr.bf16.mxu0 %v4509
    %4570 = vmatpush1.bf16.msra.mxu0 %v4508
    %4571 = vmatprep.subr.bf16.mxu0 %v4512
    %4572 = vmatpush1.bf16.msra.mxu0 %v4511
    %4573 = vmatprep.subr.bf16.mxu0 %v4560
    %4574 = vmatpush1.bf16.msra.mxu0 %v4557
    %4575 = vmatprep.subr.bf16.mxu0 0
    %4576 = vmatpush1.bf16.msra.mxu0 0
    %4577 = vmatprep.subr.bf16.mxu0 0
    %4578 = vmatpush1.bf16.msra.mxu0 0
    %4579 = vmatprep.subr.bf16.mxu0 0
    %4580 = vmatpush1.bf16.msra.mxu0 0
    %4581 = vmatprep.subr.bf16.mxu0 0
    %4582 = vmatpush1.bf16.msra.mxu0 0
    %4583 = vmatprep.subr.bf16.mxu0 0
    %4584 = vmatpush1.bf16.msra.mxu0 0
    %4585 = vmatprep.subr.bf16.mxu0 0
    %4586 = vmatpush1.bf16.msra.mxu0 0
    %4587 = vmatprep.subr.bf16.mxu0 0
    %4588 = vmatpush1.bf16.msra.mxu0 0
    %4589 = vmatprep.subr.bf16.mxu0 0
    %4590 = vmatpush1.bf16.msra.mxu0 0
    %4591 = vmatprep.subr.bf16.mxu0 0
    %4592 = vmatpush1.bf16.msra.mxu0 0
    %4593 = vmatprep.subr.bf16.mxu0 0
    %4594 = vmatpush1.bf16.msra.mxu0 0
    %4595 = vmatprep.subr.bf16.mxu0 0
    %4596 = vmatpush1.bf16.msra.mxu0 0
    %4597 = vmatprep.mubr.bf16.mxu0 0
    %4598 = vmatmul.mubr.bf16.gmra.mrb[0].mxu0 %v4548
    %v4599 = vpop.f32.mrb[0].mxu0
    %v4600 = vadd.f32 %v4522, %v4599
    %v4601 = vpop.f32.mrb[0].mxu0
    %v4602 = vadd.f32 %v4526, %v4601
    %v4603 = vpop.f32.mrb[0].mxu0
    %v4604 = vadd.f32 %v4522, %v4603
    %v4605 = vpop.f32.mrb[0].mxu0
    %v4606 = vadd.f32 %v4526, %v4605
    %4607 = vmatprep.mubr.bf16.mxu0 0
    %4608 = vmatmul.mubr.bf16.gmra.mrb[0].mxu0 %v4551
    %v4609 = vpop.f32.mrb[0].mxu0
    %v4610 = vadd.f32 %v4522, %v4609
    %v4611 = vpop.f32.mrb[0].mxu0
    %v4612 = vadd.f32 %v4526, %v4611
    %v4613 = vpop.f32.mrb[0].mxu0
    %v4614 = vadd.f32 %v4522, %v4613
    %v4615 = vpop.f32.mrb[0].mxu0
    %v4616 = vadd.f32 %v4526, %v4615
    %4617 = vmatprep.mubr.bf16.mxu0 0
    %4618 = vmatmul.mubr.bf16.gmra.mrb[0].mxu0 %v4554
    %v4619 = vpop.f32.mrb[0].mxu0
    %v4620 = vadd.f32 %v4522, %v4619
    %v4621 = vpop.f32.mrb[0].mxu0
    %v4622 = vadd.f32 %v4526, %v4621
    %v4623 = vpop.f32.mrb[0].mxu0
    %v4624 = vpop.f32.mrb[0].mxu0
    %4625 = vdwg.mxu0
    %4626 = vmatprep.subr.bf16.mxu0 0
    %4627 = vmatpush1.bf16.msra.mxu0 %v4504
    %4628 = vmatprep.subr.bf16.mxu0 0
    %4629 = vmatpush1.bf16.msra.mxu0 %v4507
    %4630 = vmatprep.subr.bf16.mxu0 0
    %4631 = vmatpush1.bf16.msra.mxu0 %v4510
    %4632 = vmatprep.subr.bf16.mxu0 0
    %4633 = vmatpush1.bf16.msra.mxu0 %v4513
    %4634 = vmatprep.subr.bf16.mxu0 0
    %4635 = vmatpush1.bf16.msra.mxu0 %v4563
    %4636 = vmatprep.subr.bf16.mxu0 0
    %4637 = vmatpush1.bf16.msra.mxu0 0
    %4638 = vmatprep.subr.bf16.mxu0 0
    %4639 = vmatpush1.bf16.msra.mxu0 0
    %4640 = vmatprep.subr.bf16.mxu0 0
    %4641 = vmatpush1.bf16.msra.mxu0 0
    %4642 = vmatprep.subr.bf16.mxu0 0
    %4643 = vmatpush1.bf16.msra.mxu0 0
    %4644 = vmatprep.subr.bf16.mxu0 0
    %4645 = vmatpush1.bf16.msra.mxu0 0
    %4646 = vmatprep.subr.bf16.mxu0 0
    %4647 = vmatpush1.bf16.msra.mxu0 0
    %4648 = vmatprep.subr.bf16.mxu0 0
    %4649 = vmatpush1.bf16.msra.mxu0 0
    %4650 = vmatprep.subr.bf16.mxu0 0
    %4651 = vmatpush1.bf16.msra.mxu0 0
    %4652 = vmatprep.subr.bf16.mxu0 0
    %4653 = vmatpush1.bf16.msra.mxu0 0
    %4654 = vmatprep.subr.bf16.mxu0 0
    %4655 = vmatpush1.bf16.msra.mxu0 0
    %4656 = vmatprep.subr.bf16.mxu0 0
    %4657 = vmatpush1.bf16.msra.mxu0 0
    %4658 = vmatprep.mubr.bf16.mxu0 0
    %4659 = vmatmul.mubr.bf16.gmra.mrb[0].mxu0 %v4548
    %v4660 = vpop.f32.mrb[0].mxu0
    %v4661 = vadd.f32 %v4530, %v4660
    %v4662 = vpop.f32.mrb[0].mxu0
    %v4663 = vpop.f32.mrb[0].mxu0
    %v4664 = vadd.f32 %v4530, %v4663
    %v4665 = vpop.f32.mrb[0].mxu0
    %4666 = vmatprep.mubr.bf16.mxu0 0
    %4667 = vmatmul.mubr.bf16.gmra.mrb[0].mxu0 %v4551
    %v4668 = vpop.f32.mrb[0].mxu0
    %v4669 = vadd.f32 %v4530, %v4668
    %v4670 = vpop.f32.mrb[0].mxu0
    %v4671 = vpop.f32.mrb[0].mxu0
    %v4672 = vadd.f32 %v4530, %v4671
    %v4673 = vpop.f32.mrb[0].mxu0
    %4674 = vmatprep.mubr.bf16.mxu0 0
    %4675 = vmatmul.mubr.bf16.gmra.mrb[0].mxu0 %v4554
    %v4676 = vpop.f32.mrb[0].mxu0
    %v4677 = vadd.f32 %v4530, %v4676
    %v4678 = vpop.f32.mrb[0].mxu0
    %v4679 = vpop.f32.mrb[0].mxu0
    %v4680 = vpop.f32.mrb[0].mxu0
    %4681 = vdwg.mxu0
    %s4682 = scalar_lea.vmem %s8, 120
    %4683 = vst [vmem:[%s4682] sm:$0xff] %v4600
    %4684 = vst [vmem:[%s4682 + $0x8] sm:$0xff] %v4602
    %4685 = vst [vmem:[%s4682 + $0x10] sm:$0xff] %v4661
    %4686 = vst [vmem:[%s4682 + $0x18] sm:$0xff] %v4604
    %4687 = vst [vmem:[%s4682 + $0x20] sm:$0xff] %v4606
    %4688 = vst [vmem:[%s4682 + $0x28] sm:$0xff] %v4664
    %4689 = vst [vmem:[%s4682 + $0x30] sm:$0xff] %v4610
    %4690 = vst [vmem:[%s4682 + $0x38] sm:$0xff] %v4612
    %4691 = vst [vmem:[%s4682 + $0x40] sm:$0xff] %v4669
    %4692 = vst [vmem:[%s4682 + $0x48] sm:$0xff] %v4614
    %4693 = vst [vmem:[%s4682 + $0x50] sm:$0xff] %v4616
    %4694 = vst [vmem:[%s4682 + $0x58] sm:$0xff] %v4672
    %4695 = vst [vmem:[%s4682 + $0x60] sm:$0x7] %v4620
    %4696 = vst [vmem:[%s4682 + $0x68] sm:$0x7] %v4622
    %4697 = vst [vmem:[%s4682 + $0x70] sm:$0x7] %v4677
    // Predicated region
    $region46: #{model_forward_pallas.1} parent=1 // pred_check
      _
    $region47: #{model_forward_pallas.1} parent=1 // pred_check_branch
      %4699 = sbr.rel (0) target = $region49
    $region48: #{model_forward_pallas.1} parent=1 // pred_region
      _
    $region49: #{model_forward_pallas.1} parent=1 // pred_fallthru
      _
    // Predicated region
    $region50: #{model_forward_pallas.1} parent=1 // pred_check
      _
    $region51: #{model_forward_pallas.1} parent=1 // pred_check_branch
      %4701 = sbr.rel (0) target = $region53
    $region52: #{model_forward_pallas.1} parent=1 // pred_region
      _
    $region53: #{model_forward_pallas.1} parent=1 // pred_fallthru
      _
    %4702 = vsyncpa [#allocation3], 1
    %4703 = vsyncpa [#allocation5], 1

</llo_original>
